<compile_context>
chip_gen: v7x
topology: tpu7x:2x2x1
jax: 0.10.0
libtpu: 0.0.40
codegen_flags: <defaults>
</compile_context>

<pallas_src>
import functools
import math

import jax
import jax.numpy as jnp
from jax.experimental import pallas as pl
from jax.experimental.pallas import tpu as pltpu


def _layer_norm(v, g, b, eps):
    # PyTorch: a_2 * (x - mean) / (x.std(-1, unbiased=True) + eps) + b_2
    mean = jnp.mean(v, axis=-1, keepdims=True)
    var = jnp.sum((v - mean) ** 2, axis=-1, keepdims=True) / (v.shape[-1] - 1)
    std = jnp.sqrt(var)
    return g * (v - mean) / (std + eps) + b


def _encoder_layer_kernel(
    x_ref, mask_ref,
    ln1_g_ref, ln1_b_ref,
    wq_ref, bq_ref, wk_ref, bk_ref, wv_ref, bv_ref, wo_ref, bo_ref,
    ln2_g_ref, ln2_b_ref,
    w1_ref, bf1_ref, w2_ref, bf2_ref,
    out_ref,
    *, n_heads, d_k, eps):
    x = x_ref[0]          # (seq, d_model)  -- current batch element
    mask = mask_ref[0]    # (1, seq)        -- key-position mask, bcast over queries

    # ---- Sublayer 0: x + SelfAttn(LayerNorm1(x)) ----------------------------
    xn = _layer_norm(x, ln1_g_ref[...], ln1_b_ref[...], eps)

    inv_sqrt_dk = 1.0 / math.sqrt(d_k)
    attn_out = jnp.zeros(x.shape, jnp.float32)
    for h in range(n_heads):  # static unrolled loop; leading-axis weight indexing
        q_h = jnp.dot(xn, wq_ref[h], preferred_element_type=jnp.float32) + bq_ref[h]
        k_h = jnp.dot(xn, wk_ref[h], preferred_element_type=jnp.float32) + bk_ref[h]
        v_h = jnp.dot(xn, wv_ref[h], preferred_element_type=jnp.float32) + bv_ref[h]
        # scores = q @ k^T / sqrt(d_k)   (contract last dims; no explicit transpose)
        scores = jax.lax.dot_general(
            q_h, k_h, dimension_numbers=(((1,), (1,)), ((), ())),
            preferred_element_type=jnp.float32) * inv_sqrt_dk        # (seq, seq)
        scores = jnp.where(mask > 0, scores, -1e9)
        m = jnp.max(scores, axis=-1, keepdims=True)
        e = jnp.exp(scores - m)
        p = e / jnp.sum(e, axis=-1, keepdims=True)
        ctx = jnp.dot(p, v_h, preferred_element_type=jnp.float32)    # (seq, d_k)
        # concat(heads) @ Wo  ==  sum_h  ctx_h @ Wo[h]
        attn_out = attn_out + jnp.dot(ctx, wo_ref[h],
                                      preferred_element_type=jnp.float32)
    attn_out = attn_out + bo_ref[...]
    # TODO(synk): Dropout in SublayerConnection / attention / FFN is identity
    #             here (eval / inference mode).
    x1 = x + attn_out

    # ---- Sublayer 1: x1 + FFN(LayerNorm2(x1)) -------------------------------
    x1n = _layer_norm(x1, ln2_g_ref[...], ln2_b_ref[...], eps)
    hid = jnp.maximum(
        jnp.dot(x1n, w1_ref[...], preferred_element_type=jnp.float32) + bf1_ref[...],
        0.0)
    ffn = jnp.dot(hid, w2_ref[...], preferred_element_type=jnp.float32) + bf2_ref[...]

    out_ref[0] = (x1 + ffn).astype(out_ref.dtype)


def encoder_layer_forward(x, mask, params, *, n_heads, eps=1e-6):
    """x: (batch, seq, d_model) f32; mask: (batch, 1, seq) (1=keep, 0=masked)."""
    batch, seq, d_model = x.shape
    d_k = d_model // n_heads

    # Head-major weight layout: the kernel indexes heads along a leading axis
    # (no in-kernel lane slices / concat).
    def to_heads_in(w):    # (d_model, d_model) -> (h, d_model, d_k)
        return w.reshape(d_model, n_heads, d_k).transpose(1, 0, 2)

    def to_heads_bias(b):  # (d_model,) -> (h, 1, d_k)
        return b.reshape(n_heads, 1, d_k)

    wq_h = to_heads_in(params["wq"]); bq_h = to_heads_bias(params["bq"])
    wk_h = to_heads_in(params["wk"]); bk_h = to_heads_bias(params["bk"])
    wv_h = to_heads_in(params["wv"]); bv_h = to_heads_bias(params["bv"])
    wo_h = params["wo"].reshape(n_heads, d_k, d_model)   # per-head row blocks of Wo

    row = lambda p: p.reshape(1, -1)
    ln1_g, ln1_b = row(params["ln1_g"]), row(params["ln1_b"])
    ln2_g, ln2_b = row(params["ln2_g"]), row(params["ln2_b"])
    bo = row(params["bo"])
    bf1, bf2 = row(params["b1"]), row(params["b2"])
    w1, w2 = params["w1"], params["w2"]

    kernel = functools.partial(_encoder_layer_kernel,
                               n_heads=n_heads, d_k=d_k, eps=eps)

    def full_spec(a):  # whole (replicated) array as one block
        return pl.BlockSpec(a.shape, lambda b, _nd=a.ndim: (0,) * _nd)

    grid_spec = pltpu.PrefetchScalarGridSpec(
        num_scalar_prefetch=0,
        grid=(batch,),   # one grid step = one batch element (full seq tile)
        in_specs=[
            pl.BlockSpec((1, seq, d_model), lambda b: (b, 0, 0)),   # x
            pl.BlockSpec((1, 1, seq), lambda b: (b, 0, 0)),         # mask
            full_spec(ln1_g), full_spec(ln1_b),
            full_spec(wq_h), full_spec(bq_h),
            full_spec(wk_h), full_spec(bk_h),
            full_spec(wv_h), full_spec(bv_h),
            full_spec(wo_h), full_spec(bo),
            full_spec(ln2_g), full_spec(ln2_b),
            full_spec(w1), full_spec(bf1),
            full_spec(w2), full_spec(bf2),
        ],
        out_specs=pl.BlockSpec((1, seq, d_model), lambda b: (b, 0, 0)),
    )

    return pl.pallas_call(
        kernel,
        out_shape=jax.ShapeDtypeStruct((batch, seq, d_model), x.dtype),
        grid_spec=grid_spec,
        compiler_params=pltpu.CompilerParams(
            dimension_semantics=("parallel",)),   # batch items independent (v7x megacore)
    )(x, mask, ln1_g, ln1_b, wq_h, bq_h, wk_h, bk_h, wv_h, bv_h, wo_h, bo,
      ln2_g, ln2_b, w1, bf1, w2, bf2)


# ---------------- pure-JAX reference (PyTorch semantics) ---------------------
def ref_encoder_layer(x, mask, p, n_heads, eps=1e-6):
    batch, seq, d_model = x.shape
    d_k = d_model // n_heads

    def ln(v, g, b):
        mean = v.mean(-1, keepdims=True)
        var = ((v - mean) ** 2).sum(-1, keepdims=True) / (v.shape[-1] - 1)
        return g * (v - mean) / (jnp.sqrt(var) + eps) + b

    xn = ln(x, p["ln1_g"], p["ln1_b"])
    q = xn @ p["wq"] + p["bq"]
    k = xn @ p["wk"] + p["bk"]
    v = xn @ p["wv"] + p["bv"]

    def split(t):
        return t.reshape(batch, seq, n_heads, d_k).transpose(0, 2, 1, 3)

    qh, kh, vh = split(q), split(k), split(v)
    scores = jnp.einsum("bhqf,bhkf->bhqk", qh, kh) / math.sqrt(d_k)
    scores = jnp.where(mask[:, None, :, :] > 0, scores, -1e9)
    probs = jax.nn.softmax(scores, axis=-1)
    ctx = jnp.einsum("bhqk,bhkf->bhqf", probs, vh)
    ctx = ctx.transpose(0, 2, 1, 3).reshape(batch, seq, d_model)
    attn = ctx @ p["wo"] + p["bo"]
    x1 = x + attn

    x1n = ln(x1, p["ln2_g"], p["ln2_b"])
    hid = jnp.maximum(x1n @ p["w1"] + p["b1"], 0.0)
    return x1 + hid @ p["w2"] + p["b2"]


if __name__ == "__main__":
    batch, seq, d_model, n_heads, d_ff = 2, 8, 32, 4, 64

    key = jax.random.PRNGKey(0)
    ks = jax.random.split(key, 20)

    def nrm(k, shape, scale=1.0):
        return jax.random.normal(k, shape, jnp.float32) * scale

    w_scale = 1.0 / math.sqrt(d_model)
    params = dict(
        ln1_g=1.0 + 0.1 * nrm(ks[13], (d_model,)),
        ln1_b=0.1 * nrm(ks[14], (d_model,)),
        wq=nrm(ks[0], (d_model, d_model), w_scale), bq=nrm(ks[1], (d_model,), 0.02),
        wk=nrm(ks[2], (d_model, d_model), w_scale), bk=nrm(ks[3], (d_model,), 0.02),
        wv=nrm(ks[4], (d_model, d_model), w_scale), bv=nrm(ks[5], (d_model,), 0.02),
        wo=nrm(ks[6], (d_model, d_model), w_scale), bo=nrm(ks[7], (d_model,), 0.02),
        ln2_g=1.0 + 0.1 * nrm(ks[15], (d_model,)),
        ln2_b=0.1 * nrm(ks[16], (d_model,)),
        w1=nrm(ks[8], (d_model, d_ff), w_scale), b1=nrm(ks[9], (d_ff,), 0.02),
        w2=nrm(ks[10], (d_ff, d_model), 1.0 / math.sqrt(d_ff)),
        b2=nrm(ks[11], (d_model,), 0.02),
    )
    x = nrm(ks[12], (batch, seq, d_model))
    # Padding mask: batch 0 fully valid; batch 1 masks the last 2 key positions.
    mask = jnp.ones((batch, 1, seq), jnp.float32).at[1, 0, 6:].set(0.0)

    out = encoder_layer_forward(x, mask, params, n_heads=n_heads)
    out = jax.block_until_ready(out)

    with jax.default_matmul_precision("highest"):
        ref = ref_encoder_layer(x, mask, params, n_heads)
    ref = jax.block_until_ready(ref)

    assert out.shape == (batch, seq, d_model)
    max_err = float(jnp.max(jnp.abs(out - ref)))
    assert jnp.allclose(out, ref, atol=1e-4, rtol=1e-4), max_err

    print("KERNEL_OK")
</pallas_src>

<mosaic_0001>
module attributes {stable_mosaic.version = 11 : i64} {
  func.func @_encoder_layer_kernel(%arg0: i32, %arg1: memref<1x8x32xf32, #tpu.memory_space<vmem>>, %arg2: memref<1x1x8xf32, #tpu.memory_space<vmem>>, %arg3: memref<1x32xf32, #tpu.memory_space<vmem>>, %arg4: memref<1x32xf32, #tpu.memory_space<vmem>>, %arg5: memref<4x32x8xf32, #tpu.memory_space<vmem>>, %arg6: memref<4x1x8xf32, #tpu.memory_space<vmem>>, %arg7: memref<4x32x8xf32, #tpu.memory_space<vmem>>, %arg8: memref<4x1x8xf32, #tpu.memory_space<vmem>>, %arg9: memref<4x32x8xf32, #tpu.memory_space<vmem>>, %arg10: memref<4x1x8xf32, #tpu.memory_space<vmem>>, %arg11: memref<4x8x32xf32, #tpu.memory_space<vmem>>, %arg12: memref<1x32xf32, #tpu.memory_space<vmem>>, %arg13: memref<1x32xf32, #tpu.memory_space<vmem>>, %arg14: memref<1x32xf32, #tpu.memory_space<vmem>>, %arg15: memref<32x64xf32, #tpu.memory_space<vmem>>, %arg16: memref<1x64xf32, #tpu.memory_space<vmem>>, %arg17: memref<64x32xf32, #tpu.memory_space<vmem>>, %arg18: memref<1x32xf32, #tpu.memory_space<vmem>>, %arg19: memref<1x8x32xf32, #tpu.memory_space<vmem>>) attributes {dimension_semantics = [#tpu.dimension_semantics<parallel>], iteration_bounds = array<i64: 2>, scalar_prefetch = 0 : i64, scratch_operands = 0 : i64, tpu.core_type = #tpu.core_type<tc>, window_params = [{transform_indices = @transform_0, window_bounds = array<i64: 1, 8, 32>}, {transform_indices = @transform_1, window_bounds = array<i64: 1, 1, 8>}, {pipeline_mode = #tpu.pipeline_mode<synchronous>, transform_indices = @transform_2, window_bounds = array<i64: 1, 32>}, {pipeline_mode = #tpu.pipeline_mode<synchronous>, transform_indices = @transform_3, window_bounds = array<i64: 1, 32>}, {pipeline_mode = #tpu.pipeline_mode<synchronous>, transform_indices = @transform_4, window_bounds = array<i64: 4, 32, 8>}, {pipeline_mode = #tpu.pipeline_mode<synchronous>, transform_indices = @transform_5, window_bounds = array<i64: 4, 1, 8>}, {pipeline_mode = #tpu.pipeline_mode<synchronous>, transform_indices = @transform_6, window_bounds = array<i64: 4, 32, 8>}, {pipeline_mode = #tpu.pipeline_mode<synchronous>, transform_indices = @transform_7, window_bounds = array<i64: 4, 1, 8>}, {pipeline_mode = #tpu.pipeline_mode<synchronous>, transform_indices = @transform_8, window_bounds = array<i64: 4, 32, 8>}, {pipeline_mode = #tpu.pipeline_mode<synchronous>, transform_indices = @transform_9, window_bounds = array<i64: 4, 1, 8>}, {pipeline_mode = #tpu.pipeline_mode<synchronous>, transform_indices = @transform_10, window_bounds = array<i64: 4, 8, 32>}, {pipeline_mode = #tpu.pipeline_mode<synchronous>, transform_indices = @transform_11, window_bounds = array<i64: 1, 32>}, {pipeline_mode = #tpu.pipeline_mode<synchronous>, transform_indices = @transform_12, window_bounds = array<i64: 1, 32>}, {pipeline_mode = #tpu.pipeline_mode<synchronous>, transform_indices = @transform_13, window_bounds = array<i64: 1, 32>}, {pipeline_mode = #tpu.pipeline_mode<synchronous>, transform_indices = @transform_14, window_bounds = array<i64: 32, 64>}, {pipeline_mode = #tpu.pipeline_mode<synchronous>, transform_indices = @transform_15, window_bounds = array<i64: 1, 64>}, {pipeline_mode = #tpu.pipeline_mode<synchronous>, transform_indices = @transform_16, window_bounds = array<i64: 64, 32>}, {pipeline_mode = #tpu.pipeline_mode<synchronous>, transform_indices = @transform_17, window_bounds = array<i64: 1, 32>}, {transform_indices = @transform_18, window_bounds = array<i64: 1, 8, 32>}]} {
    %c0 = arith.constant 0 : index
    %c0_0 = arith.constant 0 : index
    %c0_1 = arith.constant 0 : index
    %0 = vector.load %arg1[%c0, %c0_0, %c0_1] : memref<1x8x32xf32, #tpu.memory_space<vmem>>, vector<1x8x32xf32>
    %1 = vector.shape_cast %0 : vector<1x8x32xf32> to vector<8x32xf32>
    %c0_2 = arith.constant 0 : index
    %c0_3 = arith.constant 0 : index
    %c0_4 = arith.constant 0 : index
    %2 = vector.load %arg2[%c0_2, %c0_3, %c0_4] : memref<1x1x8xf32, #tpu.memory_space<vmem>>, vector<1x1x8xf32>
    %3 = vector.shape_cast %2 : vector<1x1x8xf32> to vector<1x8xf32>
    %c0_5 = arith.constant 0 : index
    %c0_6 = arith.constant 0 : index
    %4 = vector.load %arg3[%c0_5, %c0_6] : memref<1x32xf32, #tpu.memory_space<vmem>>, vector<1x32xf32>
    %c0_7 = arith.constant 0 : index
    %c0_8 = arith.constant 0 : index
    %5 = vector.load %arg4[%c0_7, %c0_8] : memref<1x32xf32, #tpu.memory_space<vmem>>, vector<1x32xf32>
    %cst = arith.constant dense<0.000000e+00> : vector<8xf32>
    %6 = vector.multi_reduction <add>, %1, %cst [1] : vector<8x32xf32> to vector<8xf32>
    %7 = vector.shape_cast %6 : vector<8xf32> to vector<8x1xf32>
    %cst_9 = arith.constant 3.200000e+01 : f32
    %8 = vector.broadcast %cst_9 : f32 to vector<8x1xf32>
    %9 = arith.divf %7, %8 : vector<8x1xf32>
    %10 = vector.broadcast %9 : vector<8x1xf32> to vector<8x32xf32>
    %11 = arith.subf %1, %10 : vector<8x32xf32>
    %12 = arith.mulf %11, %11 : vector<8x32xf32>
    %cst_10 = arith.constant dense<0.000000e+00> : vector<8xf32>
    %13 = vector.multi_reduction <add>, %12, %cst_10 [1] : vector<8x32xf32> to vector<8xf32>
    %14 = vector.shape_cast %13 : vector<8xf32> to vector<8x1xf32>
    %cst_11 = arith.constant 3.100000e+01 : f32
    %15 = vector.broadcast %cst_11 : f32 to vector<8x1xf32>
    %16 = arith.divf %14, %15 : vector<8x1xf32>
    %17 = math.sqrt %16 : vector<8x1xf32>
    %18 = vector.broadcast %9 : vector<8x1xf32> to vector<8x32xf32>
    %19 = arith.subf %1, %18 : vector<8x32xf32>
    %20 = vector.broadcast %4 : vector<1x32xf32> to vector<8x32xf32>
    %21 = arith.mulf %20, %19 : vector<8x32xf32>
    %cst_12 = arith.constant 9.99999997E-7 : f32
    %22 = vector.broadcast %cst_12 : f32 to vector<8x1xf32>
    %23 = arith.addf %17, %22 : vector<8x1xf32>
    %24 = vector.broadcast %23 : vector<8x1xf32> to vector<8x32xf32>
    %25 = arith.divf %21, %24 : vector<8x32xf32>
    %26 = vector.broadcast %5 : vector<1x32xf32> to vector<8x32xf32>
    %27 = arith.addf %25, %26 : vector<8x32xf32>
    %cst_13 = arith.constant 0.000000e+00 : f32
    %28 = vector.broadcast %cst_13 : f32 to vector<8x32xf32>
    %c0_14 = arith.constant 0 : index
    %c0_15 = arith.constant 0 : index
    %c0_16 = arith.constant 0 : index
    %29 = vector.load %arg5[%c0_14, %c0_15, %c0_16] : memref<4x32x8xf32, #tpu.memory_space<vmem>>, vector<1x32x8xf32>
    %30 = vector.shape_cast %29 : vector<1x32x8xf32> to vector<32x8xf32>
    %cst_17 = arith.constant dense<0.000000e+00> : vector<8x8xf32>
    %31 = tpu.matmul %27, %30, %cst_17 {dimension_numbers = #tpu.dot_dimension_numbers<[1], [0], [0], [1], [0, 0, 1, 1], [], []>} : vector<8x32xf32>, vector<32x8xf32>, vector<8x8xf32> -> vector<8x8xf32>
    %c0_18 = arith.constant 0 : index
    %c0_19 = arith.constant 0 : index
    %c0_20 = arith.constant 0 : index
    %32 = vector.load %arg6[%c0_18, %c0_19, %c0_20] : memref<4x1x8xf32, #tpu.memory_space<vmem>>, vector<1x1x8xf32>
    %33 = vector.shape_cast %32 : vector<1x1x8xf32> to vector<1x8xf32>
    %34 = vector.broadcast %33 : vector<1x8xf32> to vector<8x8xf32>
    %35 = arith.addf %31, %34 : vector<8x8xf32>
    %c0_21 = arith.constant 0 : index
    %c0_22 = arith.constant 0 : index
    %c0_23 = arith.constant 0 : index
    %36 = vector.load %arg7[%c0_21, %c0_22, %c0_23] : memref<4x32x8xf32, #tpu.memory_space<vmem>>, vector<1x32x8xf32>
    %37 = vector.shape_cast %36 : vector<1x32x8xf32> to vector<32x8xf32>
    %cst_24 = arith.constant dense<0.000000e+00> : vector<8x8xf32>
    %38 = tpu.matmul %27, %37, %cst_24 {dimension_numbers = #tpu.dot_dimension_numbers<[1], [0], [0], [1], [0, 0, 1, 1], [], []>} : vector<8x32xf32>, vector<32x8xf32>, vector<8x8xf32> -> vector<8x8xf32>
    %c0_25 = arith.constant 0 : index
    %c0_26 = arith.constant 0 : index
    %c0_27 = arith.constant 0 : index
    %39 = vector.load %arg8[%c0_25, %c0_26, %c0_27] : memref<4x1x8xf32, #tpu.memory_space<vmem>>, vector<1x1x8xf32>
    %40 = vector.shape_cast %39 : vector<1x1x8xf32> to vector<1x8xf32>
    %41 = vector.broadcast %40 : vector<1x8xf32> to vector<8x8xf32>
    %42 = arith.addf %38, %41 : vector<8x8xf32>
    %c0_28 = arith.constant 0 : index
    %c0_29 = arith.constant 0 : index
    %c0_30 = arith.constant 0 : index
    %43 = vector.load %arg9[%c0_28, %c0_29, %c0_30] : memref<4x32x8xf32, #tpu.memory_space<vmem>>, vector<1x32x8xf32>
    %44 = vector.shape_cast %43 : vector<1x32x8xf32> to vector<32x8xf32>
    %cst_31 = arith.constant dense<0.000000e+00> : vector<8x8xf32>
    %45 = tpu.matmul %27, %44, %cst_31 {dimension_numbers = #tpu.dot_dimension_numbers<[1], [0], [0], [1], [0, 0, 1, 1], [], []>} : vector<8x32xf32>, vector<32x8xf32>, vector<8x8xf32> -> vector<8x8xf32>
    %c0_32 = arith.constant 0 : index
    %c0_33 = arith.constant 0 : index
    %c0_34 = arith.constant 0 : index
    %46 = vector.load %arg10[%c0_32, %c0_33, %c0_34] : memref<4x1x8xf32, #tpu.memory_space<vmem>>, vector<1x1x8xf32>
    %47 = vector.shape_cast %46 : vector<1x1x8xf32> to vector<1x8xf32>
    %48 = vector.broadcast %47 : vector<1x8xf32> to vector<8x8xf32>
    %49 = arith.addf %45, %48 : vector<8x8xf32>
    %cst_35 = arith.constant dense<0.000000e+00> : vector<8x8xf32>
    %50 = tpu.matmul %35, %42, %cst_35 {dimension_numbers = #tpu.dot_dimension_numbers<[1], [1], [0], [0], [0, 0, 1, 0], [], []>} : vector<8x8xf32>, vector<8x8xf32>, vector<8x8xf32> -> vector<8x8xf32>
    %cst_36 = arith.constant 0.353553385 : f32
    %51 = vector.broadcast %cst_36 : f32 to vector<8x8xf32>
    %52 = arith.mulf %50, %51 : vector<8x8xf32>
    %cst_37 = arith.constant 0.000000e+00 : f32
    %53 = vector.broadcast %cst_37 : f32 to vector<1x8xf32>
    %54 = arith.cmpf ogt, %3, %53 : vector<1x8xf32>
    %cst_38 = arith.constant -1.000000e+09 : f32
    %55 = vector.shape_cast %54 : vector<1x8xi1> to vector<1x8xi1>
    %56 = vector.broadcast %55 : vector<1x8xi1> to vector<8x8xi1>
    %57 = vector.broadcast %cst_38 : f32 to vector<8x8xf32>
    %58 = arith.select %56, %52, %57 : vector<8x8xi1>, vector<8x8xf32>
    %cst_39 = arith.constant dense<0xFF800000> : vector<8xf32>
    %59 = vector.multi_reduction <maximumf>, %58, %cst_39 [1] : vector<8x8xf32> to vector<8xf32>
    %60 = vector.shape_cast %59 : vector<8xf32> to vector<8x1xf32>
    %61 = vector.broadcast %60 : vector<8x1xf32> to vector<8x8xf32>
    %62 = arith.subf %58, %61 : vector<8x8xf32>
    %63 = math.exp %62 : vector<8x8xf32>
    %cst_40 = arith.constant dense<0.000000e+00> : vector<8xf32>
    %64 = vector.multi_reduction <add>, %63, %cst_40 [1] : vector<8x8xf32> to vector<8xf32>
    %65 = vector.shape_cast %64 : vector<8xf32> to vector<8x1xf32>
    %66 = vector.broadcast %65 : vector<8x1xf32> to vector<8x8xf32>
    %67 = arith.divf %63, %66 : vector<8x8xf32>
    %cst_41 = arith.constant dense<0.000000e+00> : vector<8x8xf32>
    %68 = tpu.matmul %67, %49, %cst_41 {dimension_numbers = #tpu.dot_dimension_numbers<[1], [0], [0], [1], [0, 0, 1, 1], [], []>} : vector<8x8xf32>, vector<8x8xf32>, vector<8x8xf32> -> vector<8x8xf32>
    %c0_42 = arith.constant 0 : index
    %c0_43 = arith.constant 0 : index
    %c0_44 = arith.constant 0 : index
    %69 = vector.load %arg11[%c0_42, %c0_43, %c0_44] : memref<4x8x32xf32, #tpu.memory_space<vmem>>, vector<1x8x32xf32>
    %70 = vector.shape_cast %69 : vector<1x8x32xf32> to vector<8x32xf32>
    %cst_45 = arith.constant dense<0.000000e+00> : vector<8x32xf32>
    %71 = tpu.matmul %68, %70, %cst_45 {dimension_numbers = #tpu.dot_dimension_numbers<[1], [0], [0], [1], [0, 0, 1, 1], [], []>} : vector<8x8xf32>, vector<8x32xf32>, vector<8x32xf32> -> vector<8x32xf32>
    %72 = arith.addf %28, %71 : vector<8x32xf32>
    %c1 = arith.constant 1 : index
    %c0_46 = arith.constant 0 : index
    %c0_47 = arith.constant 0 : index
    %73 = vector.load %arg5[%c1, %c0_46, %c0_47] : memref<4x32x8xf32, #tpu.memory_space<vmem>>, vector<1x32x8xf32>
    %74 = vector.shape_cast %73 : vector<1x32x8xf32> to vector<32x8xf32>
    %cst_48 = arith.constant dense<0.000000e+00> : vector<8x8xf32>
    %75 = tpu.matmul %27, %74, %cst_48 {dimension_numbers = #tpu.dot_dimension_numbers<[1], [0], [0], [1], [0, 0, 1, 1], [], []>} : vector<8x32xf32>, vector<32x8xf32>, vector<8x8xf32> -> vector<8x8xf32>
    %c1_49 = arith.constant 1 : index
    %c0_50 = arith.constant 0 : index
    %c0_51 = arith.constant 0 : index
    %76 = vector.load %arg6[%c1_49, %c0_50, %c0_51] : memref<4x1x8xf32, #tpu.memory_space<vmem>>, vector<1x1x8xf32>
    %77 = vector.shape_cast %76 : vector<1x1x8xf32> to vector<1x8xf32>
    %78 = vector.broadcast %77 : vector<1x8xf32> to vector<8x8xf32>
    %79 = arith.addf %75, %78 : vector<8x8xf32>
    %c1_52 = arith.constant 1 : index
    %c0_53 = arith.constant 0 : index
    %c0_54 = arith.constant 0 : index
    %80 = vector.load %arg7[%c1_52, %c0_53, %c0_54] : memref<4x32x8xf32, #tpu.memory_space<vmem>>, vector<1x32x8xf32>
    %81 = vector.shape_cast %80 : vector<1x32x8xf32> to vector<32x8xf32>
    %cst_55 = arith.constant dense<0.000000e+00> : vector<8x8xf32>
    %82 = tpu.matmul %27, %81, %cst_55 {dimension_numbers = #tpu.dot_dimension_numbers<[1], [0], [0], [1], [0, 0, 1, 1], [], []>} : vector<8x32xf32>, vector<32x8xf32>, vector<8x8xf32> -> vector<8x8xf32>
    %c1_56 = arith.constant 1 : index
    %c0_57 = arith.constant 0 : index
    %c0_58 = arith.constant 0 : index
    %83 = vector.load %arg8[%c1_56, %c0_57, %c0_58] : memref<4x1x8xf32, #tpu.memory_space<vmem>>, vector<1x1x8xf32>
    %84 = vector.shape_cast %83 : vector<1x1x8xf32> to vector<1x8xf32>
    %85 = vector.broadcast %84 : vector<1x8xf32> to vector<8x8xf32>
    %86 = arith.addf %82, %85 : vector<8x8xf32>
    %c1_59 = arith.constant 1 : index
    %c0_60 = arith.constant 0 : index
    %c0_61 = arith.constant 0 : index
    %87 = vector.load %arg9[%c1_59, %c0_60, %c0_61] : memref<4x32x8xf32, #tpu.memory_space<vmem>>, vector<1x32x8xf32>
    %88 = vector.shape_cast %87 : vector<1x32x8xf32> to vector<32x8xf32>
    %cst_62 = arith.constant dense<0.000000e+00> : vector<8x8xf32>
    %89 = tpu.matmul %27, %88, %cst_62 {dimension_numbers = #tpu.dot_dimension_numbers<[1], [0], [0], [1], [0, 0, 1, 1], [], []>} : vector<8x32xf32>, vector<32x8xf32>, vector<8x8xf32> -> vector<8x8xf32>
    %c1_63 = arith.constant 1 : index
    %c0_64 = arith.constant 0 : index
    %c0_65 = arith.constant 0 : index
    %90 = vector.load %arg10[%c1_63, %c0_64, %c0_65] : memref<4x1x8xf32, #tpu.memory_space<vmem>>, vector<1x1x8xf32>
    %91 = vector.shape_cast %90 : vector<1x1x8xf32> to vector<1x8xf32>
    %92 = vector.broadcast %91 : vector<1x8xf32> to vector<8x8xf32>
    %93 = arith.addf %89, %92 : vector<8x8xf32>
    %cst_66 = arith.constant dense<0.000000e+00> : vector<8x8xf32>
    %94 = tpu.matmul %79, %86, %cst_66 {dimension_numbers = #tpu.dot_dimension_numbers<[1], [1], [0], [0], [0, 0, 1, 0], [], []>} : vector<8x8xf32>, vector<8x8xf32>, vector<8x8xf32> -> vector<8x8xf32>
    %cst_67 = arith.constant 0.353553385 : f32
    %95 = vector.broadcast %cst_67 : f32 to vector<8x8xf32>
    %96 = arith.mulf %94, %95 : vector<8x8xf32>
    %cst_68 = arith.constant 0.000000e+00 : f32
    %97 = vector.broadcast %cst_68 : f32 to vector<1x8xf32>
    %98 = arith.cmpf ogt, %3, %97 : vector<1x8xf32>
    %cst_69 = arith.constant -1.000000e+09 : f32
    %99 = vector.shape_cast %98 : vector<1x8xi1> to vector<1x8xi1>
    %100 = vector.broadcast %99 : vector<1x8xi1> to vector<8x8xi1>
    %101 = vector.broadcast %cst_69 : f32 to vector<8x8xf32>
    %102 = arith.select %100, %96, %101 : vector<8x8xi1>, vector<8x8xf32>
    %cst_70 = arith.constant dense<0xFF800000> : vector<8xf32>
    %103 = vector.multi_reduction <maximumf>, %102, %cst_70 [1] : vector<8x8xf32> to vector<8xf32>
    %104 = vector.shape_cast %103 : vector<8xf32> to vector<8x1xf32>
    %105 = vector.broadcast %104 : vector<8x1xf32> to vector<8x8xf32>
    %106 = arith.subf %102, %105 : vector<8x8xf32>
    %107 = math.exp %106 : vector<8x8xf32>
    %cst_71 = arith.constant dense<0.000000e+00> : vector<8xf32>
    %108 = vector.multi_reduction <add>, %107, %cst_71 [1] : vector<8x8xf32> to vector<8xf32>
    %109 = vector.shape_cast %108 : vector<8xf32> to vector<8x1xf32>
    %110 = vector.broadcast %109 : vector<8x1xf32> to vector<8x8xf32>
    %111 = arith.divf %107, %110 : vector<8x8xf32>
    %cst_72 = arith.constant dense<0.000000e+00> : vector<8x8xf32>
    %112 = tpu.matmul %111, %93, %cst_72 {dimension_numbers = #tpu.dot_dimension_numbers<[1], [0], [0], [1], [0, 0, 1, 1], [], []>} : vector<8x8xf32>, vector<8x8xf32>, vector<8x8xf32> -> vector<8x8xf32>
    %c1_73 = arith.constant 1 : index
    %c0_74 = arith.constant 0 : index
    %c0_75 = arith.constant 0 : index
    %113 = vector.load %arg11[%c1_73, %c0_74, %c0_75] : memref<4x8x32xf32, #tpu.memory_space<vmem>>, vector<1x8x32xf32>
    %114 = vector.shape_cast %113 : vector<1x8x32xf32> to vector<8x32xf32>
    %cst_76 = arith.constant dense<0.000000e+00> : vector<8x32xf32>
    %115 = tpu.matmul %112, %114, %cst_76 {dimension_numbers = #tpu.dot_dimension_numbers<[1], [0], [0], [1], [0, 0, 1, 1], [], []>} : vector<8x8xf32>, vector<8x32xf32>, vector<8x32xf32> -> vector<8x32xf32>
    %116 = arith.addf %72, %115 : vector<8x32xf32>
    %c2 = arith.constant 2 : index
    %c0_77 = arith.constant 0 : index
    %c0_78 = arith.constant 0 : index
    %117 = vector.load %arg5[%c2, %c0_77, %c0_78] : memref<4x32x8xf32, #tpu.memory_space<vmem>>, vector<1x32x8xf32>
    %118 = vector.shape_cast %117 : vector<1x32x8xf32> to vector<32x8xf32>
    %cst_79 = arith.constant dense<0.000000e+00> : vector<8x8xf32>
    %119 = tpu.matmul %27, %118, %cst_79 {dimension_numbers = #tpu.dot_dimension_numbers<[1], [0], [0], [1], [0, 0, 1, 1], [], []>} : vector<8x32xf32>, vector<32x8xf32>, vector<8x8xf32> -> vector<8x8xf32>
    %c2_80 = arith.constant 2 : index
    %c0_81 = arith.constant 0 : index
    %c0_82 = arith.constant 0 : index
    %120 = vector.load %arg6[%c2_80, %c0_81, %c0_82] : memref<4x1x8xf32, #tpu.memory_space<vmem>>, vector<1x1x8xf32>
    %121 = vector.shape_cast %120 : vector<1x1x8xf32> to vector<1x8xf32>
    %122 = vector.broadcast %121 : vector<1x8xf32> to vector<8x8xf32>
    %123 = arith.addf %119, %122 : vector<8x8xf32>
    %c2_83 = arith.constant 2 : index
    %c0_84 = arith.constant 0 : index
    %c0_85 = arith.constant 0 : index
    %124 = vector.load %arg7[%c2_83, %c0_84, %c0_85] : memref<4x32x8xf32, #tpu.memory_space<vmem>>, vector<1x32x8xf32>
    %125 = vector.shape_cast %124 : vector<1x32x8xf32> to vector<32x8xf32>
    %cst_86 = arith.constant dense<0.000000e+00> : vector<8x8xf32>
    %126 = tpu.matmul %27, %125, %cst_86 {dimension_numbers = #tpu.dot_dimension_numbers<[1], [0], [0], [1], [0, 0, 1, 1], [], []>} : vector<8x32xf32>, vector<32x8xf32>, vector<8x8xf32> -> vector<8x8xf32>
    %c2_87 = arith.constant 2 : index
    %c0_88 = arith.constant 0 : index
    %c0_89 = arith.constant 0 : index
    %127 = vector.load %arg8[%c2_87, %c0_88, %c0_89] : memref<4x1x8xf32, #tpu.memory_space<vmem>>, vector<1x1x8xf32>
    %128 = vector.shape_cast %127 : vector<1x1x8xf32> to vector<1x8xf32>
    %129 = vector.broadcast %128 : vector<1x8xf32> to vector<8x8xf32>
    %130 = arith.addf %126, %129 : vector<8x8xf32>
    %c2_90 = arith.constant 2 : index
    %c0_91 = arith.constant 0 : index
    %c0_92 = arith.constant 0 : index
    %131 = vector.load %arg9[%c2_90, %c0_91, %c0_92] : memref<4x32x8xf32, #tpu.memory_space<vmem>>, vector<1x32x8xf32>
    %132 = vector.shape_cast %131 : vector<1x32x8xf32> to vector<32x8xf32>
    %cst_93 = arith.constant dense<0.000000e+00> : vector<8x8xf32>
    %133 = tpu.matmul %27, %132, %cst_93 {dimension_numbers = #tpu.dot_dimension_numbers<[1], [0], [0], [1], [0, 0, 1, 1], [], []>} : vector<8x32xf32>, vector<32x8xf32>, vector<8x8xf32> -> vector<8x8xf32>
    %c2_94 = arith.constant 2 : index
    %c0_95 = arith.constant 0 : index
    %c0_96 = arith.constant 0 : index
    %134 = vector.load %arg10[%c2_94, %c0_95, %c0_96] : memref<4x1x8xf32, #tpu.memory_space<vmem>>, vector<1x1x8xf32>
    %135 = vector.shape_cast %134 : vector<1x1x8xf32> to vector<1x8xf32>
    %136 = vector.broadcast %135 : vector<1x8xf32> to vector<8x8xf32>
    %137 = arith.addf %133, %136 : vector<8x8xf32>
    %cst_97 = arith.constant dense<0.000000e+00> : vector<8x8xf32>
    %138 = tpu.matmul %123, %130, %cst_97 {dimension_numbers = #tpu.dot_dimension_numbers<[1], [1], [0], [0], [0, 0, 1, 0], [], []>} : vector<8x8xf32>, vector<8x8xf32>, vector<8x8xf32> -> vector<8x8xf32>
    %cst_98 = arith.constant 0.353553385 : f32
    %139 = vector.broadcast %cst_98 : f32 to vector<8x8xf32>
    %140 = arith.mulf %138, %139 : vector<8x8xf32>
    %cst_99 = arith.constant 0.000000e+00 : f32
    %141 = vector.broadcast %cst_99 : f32 to vector<1x8xf32>
    %142 = arith.cmpf ogt, %3, %141 : vector<1x8xf32>
    %cst_100 = arith.constant -1.000000e+09 : f32
    %143 = vector.shape_cast %142 : vector<1x8xi1> to vector<1x8xi1>
    %144 = vector.broadcast %143 : vector<1x8xi1> to vector<8x8xi1>
    %145 = vector.broadcast %cst_100 : f32 to vector<8x8xf32>
    %146 = arith.select %144, %140, %145 : vector<8x8xi1>, vector<8x8xf32>
    %cst_101 = arith.constant dense<0xFF800000> : vector<8xf32>
    %147 = vector.multi_reduction <maximumf>, %146, %cst_101 [1] : vector<8x8xf32> to vector<8xf32>
    %148 = vector.shape_cast %147 : vector<8xf32> to vector<8x1xf32>
    %149 = vector.broadcast %148 : vector<8x1xf32> to vector<8x8xf32>
    %150 = arith.subf %146, %149 : vector<8x8xf32>
    %151 = math.exp %150 : vector<8x8xf32>
    %cst_102 = arith.constant dense<0.000000e+00> : vector<8xf32>
    %152 = vector.multi_reduction <add>, %151, %cst_102 [1] : vector<8x8xf32> to vector<8xf32>
    %153 = vector.shape_cast %152 : vector<8xf32> to vector<8x1xf32>
    %154 = vector.broadcast %153 : vector<8x1xf32> to vector<8x8xf32>
    %155 = arith.divf %151, %154 : vector<8x8xf32>
    %cst_103 = arith.constant dense<0.000000e+00> : vector<8x8xf32>
    %156 = tpu.matmul %155, %137, %cst_103 {dimension_numbers = #tpu.dot_dimension_numbers<[1], [0], [0], [1], [0, 0, 1, 1], [], []>} : vector<8x8xf32>, vector<8x8xf32>, vector<8x8xf32> -> vector<8x8xf32>
    %c2_104 = arith.constant 2 : index
    %c0_105 = arith.constant 0 : index
    %c0_106 = arith.constant 0 : index
    %157 = vector.load %arg11[%c2_104, %c0_105, %c0_106] : memref<4x8x32xf32, #tpu.memory_space<vmem>>, vector<1x8x32xf32>
    %158 = vector.shape_cast %157 : vector<1x8x32xf32> to vector<8x32xf32>
    %cst_107 = arith.constant dense<0.000000e+00> : vector<8x32xf32>
    %159 = tpu.matmul %156, %158, %cst_107 {dimension_numbers = #tpu.dot_dimension_numbers<[1], [0], [0], [1], [0, 0, 1, 1], [], []>} : vector<8x8xf32>, vector<8x32xf32>, vector<8x32xf32> -> vector<8x32xf32>
    %160 = arith.addf %116, %159 : vector<8x32xf32>
    %c3 = arith.constant 3 : index
    %c0_108 = arith.constant 0 : index
    %c0_109 = arith.constant 0 : index
    %161 = vector.load %arg5[%c3, %c0_108, %c0_109] : memref<4x32x8xf32, #tpu.memory_space<vmem>>, vector<1x32x8xf32>
    %162 = vector.shape_cast %161 : vector<1x32x8xf32> to vector<32x8xf32>
    %cst_110 = arith.constant dense<0.000000e+00> : vector<8x8xf32>
    %163 = tpu.matmul %27, %162, %cst_110 {dimension_numbers = #tpu.dot_dimension_numbers<[1], [0], [0], [1], [0, 0, 1, 1], [], []>} : vector<8x32xf32>, vector<32x8xf32>, vector<8x8xf32> -> vector<8x8xf32>
    %c3_111 = arith.constant 3 : index
    %c0_112 = arith.constant 0 : index
    %c0_113 = arith.constant 0 : index
    %164 = vector.load %arg6[%c3_111, %c0_112, %c0_113] : memref<4x1x8xf32, #tpu.memory_space<vmem>>, vector<1x1x8xf32>
    %165 = vector.shape_cast %164 : vector<1x1x8xf32> to vector<1x8xf32>
    %166 = vector.broadcast %165 : vector<1x8xf32> to vector<8x8xf32>
    %167 = arith.addf %163, %166 : vector<8x8xf32>
    %c3_114 = arith.constant 3 : index
    %c0_115 = arith.constant 0 : index
    %c0_116 = arith.constant 0 : index
    %168 = vector.load %arg7[%c3_114, %c0_115, %c0_116] : memref<4x32x8xf32, #tpu.memory_space<vmem>>, vector<1x32x8xf32>
    %169 = vector.shape_cast %168 : vector<1x32x8xf32> to vector<32x8xf32>
    %cst_117 = arith.constant dense<0.000000e+00> : vector<8x8xf32>
    %170 = tpu.matmul %27, %169, %cst_117 {dimension_numbers = #tpu.dot_dimension_numbers<[1], [0], [0], [1], [0, 0, 1, 1], [], []>} : vector<8x32xf32>, vector<32x8xf32>, vector<8x8xf32> -> vector<8x8xf32>
    %c3_118 = arith.constant 3 : index
    %c0_119 = arith.constant 0 : index
    %c0_120 = arith.constant 0 : index
    %171 = vector.load %arg8[%c3_118, %c0_119, %c0_120] : memref<4x1x8xf32, #tpu.memory_space<vmem>>, vector<1x1x8xf32>
    %172 = vector.shape_cast %171 : vector<1x1x8xf32> to vector<1x8xf32>
    %173 = vector.broadcast %172 : vector<1x8xf32> to vector<8x8xf32>
    %174 = arith.addf %170, %173 : vector<8x8xf32>
    %c3_121 = arith.constant 3 : index
    %c0_122 = arith.constant 0 : index
    %c0_123 = arith.constant 0 : index
    %175 = vector.load %arg9[%c3_121, %c0_122, %c0_123] : memref<4x32x8xf32, #tpu.memory_space<vmem>>, vector<1x32x8xf32>
    %176 = vector.shape_cast %175 : vector<1x32x8xf32> to vector<32x8xf32>
    %cst_124 = arith.constant dense<0.000000e+00> : vector<8x8xf32>
    %177 = tpu.matmul %27, %176, %cst_124 {dimension_numbers = #tpu.dot_dimension_numbers<[1], [0], [0], [1], [0, 0, 1, 1], [], []>} : vector<8x32xf32>, vector<32x8xf32>, vector<8x8xf32> -> vector<8x8xf32>
    %c3_125 = arith.constant 3 : index
    %c0_126 = arith.constant 0 : index
    %c0_127 = arith.constant 0 : index
    %178 = vector.load %arg10[%c3_125, %c0_126, %c0_127] : memref<4x1x8xf32, #tpu.memory_space<vmem>>, vector<1x1x8xf32>
    %179 = vector.shape_cast %178 : vector<1x1x8xf32> to vector<1x8xf32>
    %180 = vector.broadcast %179 : vector<1x8xf32> to vector<8x8xf32>
    %181 = arith.addf %177, %180 : vector<8x8xf32>
    %cst_128 = arith.constant dense<0.000000e+00> : vector<8x8xf32>
    %182 = tpu.matmul %167, %174, %cst_128 {dimension_numbers = #tpu.dot_dimension_numbers<[1], [1], [0], [0], [0, 0, 1, 0], [], []>} : vector<8x8xf32>, vector<8x8xf32>, vector<8x8xf32> -> vector<8x8xf32>
    %cst_129 = arith.constant 0.353553385 : f32
    %183 = vector.broadcast %cst_129 : f32 to vector<8x8xf32>
    %184 = arith.mulf %182, %183 : vector<8x8xf32>
    %cst_130 = arith.constant 0.000000e+00 : f32
    %185 = vector.broadcast %cst_130 : f32 to vector<1x8xf32>
    %186 = arith.cmpf ogt, %3, %185 : vector<1x8xf32>
    %cst_131 = arith.constant -1.000000e+09 : f32
    %187 = vector.shape_cast %186 : vector<1x8xi1> to vector<1x8xi1>
    %188 = vector.broadcast %187 : vector<1x8xi1> to vector<8x8xi1>
    %189 = vector.broadcast %cst_131 : f32 to vector<8x8xf32>
    %190 = arith.select %188, %184, %189 : vector<8x8xi1>, vector<8x8xf32>
    %cst_132 = arith.constant dense<0xFF800000> : vector<8xf32>
    %191 = vector.multi_reduction <maximumf>, %190, %cst_132 [1] : vector<8x8xf32> to vector<8xf32>
    %192 = vector.shape_cast %191 : vector<8xf32> to vector<8x1xf32>
    %193 = vector.broadcast %192 : vector<8x1xf32> to vector<8x8xf32>
    %194 = arith.subf %190, %193 : vector<8x8xf32>
    %195 = math.exp %194 : vector<8x8xf32>
    %cst_133 = arith.constant dense<0.000000e+00> : vector<8xf32>
    %196 = vector.multi_reduction <add>, %195, %cst_133 [1] : vector<8x8xf32> to vector<8xf32>
    %197 = vector.shape_cast %196 : vector<8xf32> to vector<8x1xf32>
    %198 = vector.broadcast %197 : vector<8x1xf32> to vector<8x8xf32>
    %199 = arith.divf %195, %198 : vector<8x8xf32>
    %cst_134 = arith.constant dense<0.000000e+00> : vector<8x8xf32>
    %200 = tpu.matmul %199, %181, %cst_134 {dimension_numbers = #tpu.dot_dimension_numbers<[1], [0], [0], [1], [0, 0, 1, 1], [], []>} : vector<8x8xf32>, vector<8x8xf32>, vector<8x8xf32> -> vector<8x8xf32>
    %c3_135 = arith.constant 3 : index
    %c0_136 = arith.constant 0 : index
    %c0_137 = arith.constant 0 : index
    %201 = vector.load %arg11[%c3_135, %c0_136, %c0_137] : memref<4x8x32xf32, #tpu.memory_space<vmem>>, vector<1x8x32xf32>
    %202 = vector.shape_cast %201 : vector<1x8x32xf32> to vector<8x32xf32>
    %cst_138 = arith.constant dense<0.000000e+00> : vector<8x32xf32>
    %203 = tpu.matmul %200, %202, %cst_138 {dimension_numbers = #tpu.dot_dimension_numbers<[1], [0], [0], [1], [0, 0, 1, 1], [], []>} : vector<8x8xf32>, vector<8x32xf32>, vector<8x32xf32> -> vector<8x32xf32>
    %204 = arith.addf %160, %203 : vector<8x32xf32>
    %c0_139 = arith.constant 0 : index
    %c0_140 = arith.constant 0 : index
    %205 = vector.load %arg12[%c0_139, %c0_140] : memref<1x32xf32, #tpu.memory_space<vmem>>, vector<1x32xf32>
    %206 = vector.broadcast %205 : vector<1x32xf32> to vector<8x32xf32>
    %207 = arith.addf %204, %206 : vector<8x32xf32>
    %208 = arith.addf %1, %207 : vector<8x32xf32>
    %c0_141 = arith.constant 0 : index
    %c0_142 = arith.constant 0 : index
    %209 = vector.load %arg13[%c0_141, %c0_142] : memref<1x32xf32, #tpu.memory_space<vmem>>, vector<1x32xf32>
    %c0_143 = arith.constant 0 : index
    %c0_144 = arith.constant 0 : index
    %210 = vector.load %arg14[%c0_143, %c0_144] : memref<1x32xf32, #tpu.memory_space<vmem>>, vector<1x32xf32>
    %cst_145 = arith.constant dense<0.000000e+00> : vector<8xf32>
    %211 = vector.multi_reduction <add>, %208, %cst_145 [1] : vector<8x32xf32> to vector<8xf32>
    %212 = vector.shape_cast %211 : vector<8xf32> to vector<8x1xf32>
    %cst_146 = arith.constant 3.200000e+01 : f32
    %213 = vector.broadcast %cst_146 : f32 to vector<8x1xf32>
    %214 = arith.divf %212, %213 : vector<8x1xf32>
    %215 = vector.broadcast %214 : vector<8x1xf32> to vector<8x32xf32>
    %216 = arith.subf %208, %215 : vector<8x32xf32>
    %217 = arith.mulf %216, %216 : vector<8x32xf32>
    %cst_147 = arith.constant dense<0.000000e+00> : vector<8xf32>
    %218 = vector.multi_reduction <add>, %217, %cst_147 [1] : vector<8x32xf32> to vector<8xf32>
    %219 = vector.shape_cast %218 : vector<8xf32> to vector<8x1xf32>
    %cst_148 = arith.constant 3.100000e+01 : f32
    %220 = vector.broadcast %cst_148 : f32 to vector<8x1xf32>
    %221 = arith.divf %219, %220 : vector<8x1xf32>
    %222 = math.sqrt %221 : vector<8x1xf32>
    %223 = vector.broadcast %214 : vector<8x1xf32> to vector<8x32xf32>
    %224 = arith.subf %208, %223 : vector<8x32xf32>
    %225 = vector.broadcast %209 : vector<1x32xf32> to vector<8x32xf32>
    %226 = arith.mulf %225, %224 : vector<8x32xf32>
    %cst_149 = arith.constant 9.99999997E-7 : f32
    %227 = vector.broadcast %cst_149 : f32 to vector<8x1xf32>
    %228 = arith.addf %222, %227 : vector<8x1xf32>
    %229 = vector.broadcast %228 : vector<8x1xf32> to vector<8x32xf32>
    %230 = arith.divf %226, %229 : vector<8x32xf32>
    %231 = vector.broadcast %210 : vector<1x32xf32> to vector<8x32xf32>
    %232 = arith.addf %230, %231 : vector<8x32xf32>
    %c0_150 = arith.constant 0 : index
    %c0_151 = arith.constant 0 : index
    %233 = vector.load %arg15[%c0_150, %c0_151] : memref<32x64xf32, #tpu.memory_space<vmem>>, vector<32x64xf32>
    %cst_152 = arith.constant dense<0.000000e+00> : vector<8x64xf32>
    %234 = tpu.matmul %232, %233, %cst_152 {dimension_numbers = #tpu.dot_dimension_numbers<[1], [0], [0], [1], [0, 0, 1, 1], [], []>} : vector<8x32xf32>, vector<32x64xf32>, vector<8x64xf32> -> vector<8x64xf32>
    %c0_153 = arith.constant 0 : index
    %c0_154 = arith.constant 0 : index
    %235 = vector.load %arg16[%c0_153, %c0_154] : memref<1x64xf32, #tpu.memory_space<vmem>>, vector<1x64xf32>
    %236 = vector.broadcast %235 : vector<1x64xf32> to vector<8x64xf32>
    %237 = arith.addf %234, %236 : vector<8x64xf32>
    %cst_155 = arith.constant 0.000000e+00 : f32
    %238 = vector.broadcast %cst_155 : f32 to vector<8x64xf32>
    %239 = arith.maximumf %237, %238 : vector<8x64xf32>
    %c0_156 = arith.constant 0 : index
    %c0_157 = arith.constant 0 : index
    %240 = vector.load %arg17[%c0_156, %c0_157] : memref<64x32xf32, #tpu.memory_space<vmem>>, vector<64x32xf32>
    %cst_158 = arith.constant dense<0.000000e+00> : vector<8x32xf32>
    %241 = tpu.matmul %239, %240, %cst_158 {dimension_numbers = #tpu.dot_dimension_numbers<[1], [0], [0], [1], [0, 0, 1, 1], [], []>} : vector<8x64xf32>, vector<64x32xf32>, vector<8x32xf32> -> vector<8x32xf32>
    %c0_159 = arith.constant 0 : index
    %c0_160 = arith.constant 0 : index
    %242 = vector.load %arg18[%c0_159, %c0_160] : memref<1x32xf32, #tpu.memory_space<vmem>>, vector<1x32xf32>
    %243 = vector.broadcast %242 : vector<1x32xf32> to vector<8x32xf32>
    %244 = arith.addf %241, %243 : vector<8x32xf32>
    %245 = arith.addf %208, %244 : vector<8x32xf32>
    %c0_161 = arith.constant 0 : index
    %c0_162 = arith.constant 0 : index
    %c0_163 = arith.constant 0 : index
    %246 = vector.load %arg19[%c0_161, %c0_162, %c0_163] : memref<1x8x32xf32, #tpu.memory_space<vmem>>, vector<1x8x32xf32>
    %247 = vector.shape_cast %246 : vector<1x8x32xf32> to vector<8x32xf32>
    %248 = vector.shape_cast %245 : vector<8x32xf32> to vector<1x8x32xf32>
    tpu.vector_store %arg19[%c0_161, %c0_162, %c0_163], %248 {strides = array<i32>} : memref<1x8x32xf32, #tpu.memory_space<vmem>>, vector<1x8x32xf32>,
    return
  }
  func.func @transform_0(%arg0: i32) -> (i32, i32, i32) {
    %c0_i32 = arith.constant 0 : i32
    %c0_i32_0 = arith.constant 0 : i32
    %c0_i32_1 = arith.constant 0 : i32
    return %arg0, %c0_i32, %c0_i32_0 : i32, i32, i32
  }
  func.func @transform_1(%arg0: i32) -> (i32, i32, i32) {
    %c0_i32 = arith.constant 0 : i32
    %c0_i32_0 = arith.constant 0 : i32
    %c0_i32_1 = arith.constant 0 : i32
    return %arg0, %c0_i32, %c0_i32_0 : i32, i32, i32
  }
  func.func @transform_2(%arg0: i32) -> (i32, i32) {
    %c0_i32 = arith.constant 0 : i32
    %c0_i32_0 = arith.constant 0 : i32
    %c0_i32_1 = arith.constant 0 : i32
    return %c0_i32, %c0_i32_0 : i32, i32
  }
  func.func @transform_3(%arg0: i32) -> (i32, i32) {
    %c0_i32 = arith.constant 0 : i32
    %c0_i32_0 = arith.constant 0 : i32
    %c0_i32_1 = arith.constant 0 : i32
    return %c0_i32, %c0_i32_0 : i32, i32
  }
  func.func @transform_4(%arg0: i32) -> (i32, i32, i32) {
    %c0_i32 = arith.constant 0 : i32
    %c0_i32_0 = arith.constant 0 : i32
    %c0_i32_1 = arith.constant 0 : i32
    %c0_i32_2 = arith.constant 0 : i32
    return %c0_i32, %c0_i32_0, %c0_i32_1 : i32, i32, i32
  }
  func.func @transform_5(%arg0: i32) -> (i32, i32, i32) {
    %c0_i32 = arith.constant 0 : i32
    %c0_i32_0 = arith.constant 0 : i32
    %c0_i32_1 = arith.constant 0 : i32
    %c0_i32_2 = arith.constant 0 : i32
    return %c0_i32, %c0_i32_0, %c0_i32_1 : i32, i32, i32
  }
  func.func @transform_6(%arg0: i32) -> (i32, i32, i32) {
    %c0_i32 = arith.constant 0 : i32
    %c0_i32_0 = arith.constant 0 : i32
    %c0_i32_1 = arith.constant 0 : i32
    %c0_i32_2 = arith.constant 0 : i32
    return %c0_i32, %c0_i32_0, %c0_i32_1 : i32, i32, i32
  }
  func.func @transform_7(%arg0: i32) -> (i32, i32, i32) {
    %c0_i32 = arith.constant 0 : i32
    %c0_i32_0 = arith.constant 0 : i32
    %c0_i32_1 = arith.constant 0 : i32
    %c0_i32_2 = arith.constant 0 : i32
    return %c0_i32, %c0_i32_0, %c0_i32_1 : i32, i32, i32
  }
  func.func @transform_8(%arg0: i32) -> (i32, i32, i32) {
    %c0_i32 = arith.constant 0 : i32
    %c0_i32_0 = arith.constant 0 : i32
    %c0_i32_1 = arith.constant 0 : i32
    %c0_i32_2 = arith.constant 0 : i32
    return %c0_i32, %c0_i32_0, %c0_i32_1 : i32, i32, i32
  }
  func.func @transform_9(%arg0: i32) -> (i32, i32, i32) {
    %c0_i32 = arith.constant 0 : i32
    %c0_i32_0 = arith.constant 0 : i32
    %c0_i32_1 = arith.constant 0 : i32
    %c0_i32_2 = arith.constant 0 : i32
    return %c0_i32, %c0_i32_0, %c0_i32_1 : i32, i32, i32
  }
  func.func @transform_10(%arg0: i32) -> (i32, i32, i32) {
    %c0_i32 = arith.constant 0 : i32
    %c0_i32_0 = arith.constant 0 : i32
    %c0_i32_1 = arith.constant 0 : i32
    %c0_i32_2 = arith.constant 0 : i32
    return %c0_i32, %c0_i32_0, %c0_i32_1 : i32, i32, i32
  }
  func.func @transform_11(%arg0: i32) -> (i32, i32) {
    %c0_i32 = arith.constant 0 : i32
    %c0_i32_0 = arith.constant 0 : i32
    %c0_i32_1 = arith.constant 0 : i32
    return %c0_i32, %c0_i32_0 : i32, i32
  }
  func.func @transform_12(%arg0: i32) -> (i32, i32) {
    %c0_i32 = arith.constant 0 : i32
    %c0_i32_0 = arith.constant 0 : i32
    %c0_i32_1 = arith.constant 0 : i32
    return %c0_i32, %c0_i32_0 : i32, i32
  }
  func.func @transform_13(%arg0: i32) -> (i32, i32) {
    %c0_i32 = arith.constant 0 : i32
    %c0_i32_0 = arith.constant 0 : i32
    %c0_i32_1 = arith.constant 0 : i32
    return %c0_i32, %c0_i32_0 : i32, i32
  }
  func.func @transform_14(%arg0: i32) -> (i32, i32) {
    %c0_i32 = arith.constant 0 : i32
    %c0_i32_0 = arith.constant 0 : i32
    %c0_i32_1 = arith.constant 0 : i32
    return %c0_i32, %c0_i32_0 : i32, i32
  }
  func.func @transform_15(%arg0: i32) -> (i32, i32) {
    %c0_i32 = arith.constant 0 : i32
    %c0_i32_0 = arith.constant 0 : i32
    %c0_i32_1 = arith.constant 0 : i32
    return %c0_i32, %c0_i32_0 : i32, i32
  }
  func.func @transform_16(%arg0: i32) -> (i32, i32) {
    %c0_i32 = arith.constant 0 : i32
    %c0_i32_0 = arith.constant 0 : i32
    %c0_i32_1 = arith.constant 0 : i32
    return %c0_i32, %c0_i32_0 : i32, i32
  }
  func.func @transform_17(%arg0: i32) -> (i32, i32) {
    %c0_i32 = arith.constant 0 : i32
    %c0_i32_0 = arith.constant 0 : i32
    %c0_i32_1 = arith.constant 0 : i32
    return %c0_i32, %c0_i32_0 : i32, i32
  }
  func.func @transform_18(%arg0: i32) -> (i32, i32, i32) {
    %c0_i32 = arith.constant 0 : i32
    %c0_i32_0 = arith.constant 0 : i32
    %c0_i32_1 = arith.constant 0 : i32
    return %arg0, %c0_i32, %c0_i32_0 : i32, i32, i32
  }
}

</mosaic_0001>

<llo_original>
// kernel: tpu_custom_call.1
$region0: #{tpu_custom_call.1}
  #allocation0 [shape = 'u32[]', space=smem, size = 0x4, offset = 0x4, fixed_abs, tag = 'smem constant byte address 0x4 - core index']
  #allocation1 [shape = 'u32[144,128]{1,0:T(1,128)}', space=vmem, size = 0x12000, scoped, tag = 'internal scratch']
  %s0 = inlined_call_operand.vmem [shape: f32[2,8,32], index: 0, kind: input, shape index: {}]
  %s1 = inlined_call_operand.vmem [shape: f32[2,1,8], index: 1, kind: input, shape index: {}]
  %s2 = inlined_call_operand.vmem [shape: f32[1,32], index: 2, kind: input, shape index: {}]
  %s3 = inlined_call_operand.vmem [shape: f32[1,32], index: 3, kind: input, shape index: {}]
  %s4 = inlined_call_operand.vmem [shape: f32[4,32,8], index: 4, kind: input, shape index: {}]
  %s5 = inlined_call_operand.vmem [shape: f32[4,1,8], index: 5, kind: input, shape index: {}]
  %s6 = inlined_call_operand.vmem [shape: f32[4,32,8], index: 6, kind: input, shape index: {}]
  %s7 = inlined_call_operand.vmem [shape: f32[4,1,8], index: 7, kind: input, shape index: {}]
  %s8 = inlined_call_operand.vmem [shape: f32[4,32,8], index: 8, kind: input, shape index: {}]
  %s9 = inlined_call_operand.vmem [shape: f32[4,1,8], index: 9, kind: input, shape index: {}]
  %s10 = inlined_call_operand.vmem [shape: f32[4,8,32], index: 10, kind: input, shape index: {}]
  %s11 = inlined_call_operand.vmem [shape: f32[1,32], index: 11, kind: input, shape index: {}]
  %s12 = inlined_call_operand.vmem [shape: f32[1,32], index: 12, kind: input, shape index: {}]
  %s13 = inlined_call_operand.vmem [shape: f32[1,32], index: 13, kind: input, shape index: {}]
  %s14 = inlined_call_operand.vmem [shape: f32[32,64], index: 14, kind: input, shape index: {}]
  %s15 = inlined_call_operand.vmem [shape: f32[1,64], index: 15, kind: input, shape index: {}]
  %s16 = inlined_call_operand.vmem [shape: f32[64,32], index: 16, kind: input, shape index: {}]
  %s17 = inlined_call_operand.vmem [shape: f32[1,32], index: 17, kind: input, shape index: {}]
  %s18 = inlined_call_operand.hbm [shape: f32[2,8,32], index: 18, kind: output, shape index: {}]
  %s19 = sld [smem:[#allocation0]]
  $region105: #{tpu_custom_call.1} parent=0
    _
  %s21 = ssub.s32 1, %s19
  %s22 = scalar_select 0, %s21, %s19
  $region1: #{tpu_custom_call.1} parent=0
    #allocation2 [shape = 'u8[8192]{0}', space=vmem, size = 0x2000, scoped, tag = 'output window, operand 0']
    #allocation3 [shape = 's32[2]{0}', space=sflag, size = 0x8, scoped, tag = 'scoped memory for tpu_custom_call.1']
    %23 = vsyncpa [#allocation3], 0
    %s24 = scalar_lea.sflag [#allocation3], 1
    %25 = vsyncpa %s24, 0
    loop: start=0, step=1, limit=4
    $region2: #{tpu_custom_call.1} parent=1 // loop_pre_header
      _
    $region3: #{tpu_custom_call.1} parent=1 // loop_header
      %s27 = sphi 0, %s31
      %p28 = scmp.ge.s32.totalorder %s27, 4
      %s37 = sphi 0, %s39
      %s40 = sphi 0, %s37
      %s41 = sphi 0, %s40
      %s57 = sphi 0, %s41
      %s63 = sphi 0, %s65
      %s66 = sphi 0, %s63
      %s67 = sphi 0, %s66
      %s83 = sphi 0, %s67
      %s87 = sphi 0, %s87
      %s89 = sphi 0, %s87
      %s90 = sphi 0, %s89
      %s104 = sphi 0, %s90
      %s108 = sphi 0, %s108
      %s110 = sphi 0, %s108
      %s111 = sphi 0, %s110
      %s125 = sphi 0, %s111
      %s129 = sphi 0, %s129
      %s131 = sphi 0, %s129
      %s132 = sphi 0, %s131
      %s146 = sphi 0, %s132
      %s150 = sphi 0, %s150
      %s152 = sphi 0, %s150
      %s153 = sphi 0, %s152
      %s167 = sphi 0, %s153
      %s171 = sphi 0, %s171
      %s173 = sphi 0, %s171
      %s174 = sphi 0, %s173
      %s188 = sphi 0, %s174
      %s192 = sphi 0, %s192
      %s194 = sphi 0, %s192
      %s195 = sphi 0, %s194
      %s209 = sphi 0, %s195
      %s213 = sphi 0, %s213
      %s215 = sphi 0, %s213
      %s216 = sphi 0, %s215
      %s230 = sphi 0, %s216
      %s234 = sphi 0, %s234
      %s236 = sphi 0, %s234
      %s237 = sphi 0, %s236
      %s251 = sphi 0, %s237
      %s255 = sphi 0, %s255
      %s257 = sphi 0, %s255
      %s258 = sphi 0, %s257
      %s272 = sphi 0, %s258
      %s276 = sphi 0, %s276
      %s278 = sphi 0, %s276
      %s279 = sphi 0, %s278
      %s293 = sphi 0, %s279
      %s297 = sphi 0, %s297
      %s299 = sphi 0, %s297
      %s300 = sphi 0, %s299
      %s314 = sphi 0, %s300
      %s318 = sphi 0, %s318
      %s320 = sphi 0, %s318
      %s321 = sphi 0, %s320
      %s335 = sphi 0, %s321
      %s339 = sphi 0, %s339
      %s341 = sphi 0, %s339
      %s342 = sphi 0, %s341
      %s356 = sphi 0, %s342
      %s360 = sphi 0, %s360
      %s362 = sphi 0, %s360
      %s363 = sphi 0, %s362
      %s377 = sphi 0, %s363
      %s381 = sphi 0, %s381
      %s383 = sphi 0, %s381
      %s384 = sphi 0, %s383
      %s398 = sphi 0, %s384
      %s402 = sphi 0, %s402
      %s404 = sphi 0, %s402
      %s405 = sphi 0, %s404
      %s419 = sphi 0, %s405
      %s425 = sphi 0, %s427
      %s428 = sphi 0, %s425
      %s429 = sphi 0, %s428
      %s445 = sphi 0, %s429
    $region4: #{tpu_custom_call.1} parent=1 // loop_header_branch
      %30 = sbr.rel (%p28) target = $region8
    $region5: #{tpu_custom_call.1} parent=1 // loop_body
      %s32 = ssub.s32 %s27, 1
      %s33 = ssub.s32 %s27, 2
      %s34 = sadd.s32 %s27, 1
      %s35 = ssub.s32 %s27, %s34
      %p36 = scmp.eq.s32.totalorder %s35, 0
      %s38 = sadd.s32 %s37, 1
      %s39 = scalar_select %p36, %s37, %s38
      %p42 = pneg %p36
      %p43 = scmp.eq.s32.totalorder %s27, 1
      %p44 = por %p42, %p43
      %p45 = scmp.ne.s32.totalorder %s37, %s40
      %p46 = scmp.eq.s32.totalorder %s27, 0
      %p47 = por %p45, %p46
      %p48 = scmp.ne.s32.totalorder %s37, %s40
      %p49 = scmp.eq.s32.totalorder %s32, 1
      %p50 = por %p48, %p49
      %p51 = scmp.ne.s32.totalorder %s40, %s41
      %p52 = scmp.eq.s32.totalorder %s32, 0
      %p53 = por %p51, %p52
      %p54 = scmp.ne.s32.totalorder %s40, %s41
      %p55 = scmp.eq.s32.totalorder %s33, 1
      %p56 = por %p54, %p55
      %p58 = scmp.ne.s32.totalorder %s41, %s57
      %p59 = scmp.eq.s32.totalorder %s33, 0
      %p60 = por %p58, %p59
      %s61 = ssub.s32 %s27, %s34
      %p62 = scmp.eq.s32.totalorder %s61, 0
      %s64 = sadd.s32 %s63, 1
      %s65 = scalar_select %p62, %s63, %s64
      %p68 = pneg %p62
      %p69 = scmp.eq.s32.totalorder %s27, 1
      %p70 = por %p68, %p69
      %p71 = scmp.ne.s32.totalorder %s63, %s66
      %p72 = scmp.eq.s32.totalorder %s27, 0
      %p73 = por %p71, %p72
      %p74 = scmp.ne.s32.totalorder %s63, %s66
      %p75 = scmp.eq.s32.totalorder %s32, 1
      %p76 = por %p74, %p75
      %p77 = scmp.ne.s32.totalorder %s66, %s67
      %p78 = scmp.eq.s32.totalorder %s32, 0
      %p79 = por %p77, %p78
      %p80 = scmp.ne.s32.totalorder %s66, %s67
      %p81 = scmp.eq.s32.totalorder %s33, 1
      %p82 = por %p80, %p81
      %p84 = scmp.ne.s32.totalorder %s67, %s83
      %p85 = scmp.eq.s32.totalorder %s33, 0
      %p86 = por %p84, %p85
      %s88 = sadd.s32 %s87, 1
      %p91 = scmp.eq.s32.totalorder %s27, 1
      %p92 = scmp.ne.s32.totalorder %s87, %s89
      %p93 = scmp.eq.s32.totalorder %s27, 0
      %p94 = por %p92, %p93
      %p95 = scmp.ne.s32.totalorder %s87, %s89
      %p96 = scmp.eq.s32.totalorder %s32, 1
      %p97 = por %p95, %p96
      %p98 = scmp.ne.s32.totalorder %s89, %s90
      %p99 = scmp.eq.s32.totalorder %s32, 0
      %p100 = por %p98, %p99
      %p101 = scmp.ne.s32.totalorder %s89, %s90
      %p102 = scmp.eq.s32.totalorder %s33, 1
      %p103 = por %p101, %p102
      %p105 = scmp.ne.s32.totalorder %s90, %s104
      %p106 = scmp.eq.s32.totalorder %s33, 0
      %p107 = por %p105, %p106
      %s109 = sadd.s32 %s108, 1
      %p112 = scmp.eq.s32.totalorder %s27, 1
      %p113 = scmp.ne.s32.totalorder %s108, %s110
      %p114 = scmp.eq.s32.totalorder %s27, 0
      %p115 = por %p113, %p114
      %p116 = scmp.ne.s32.totalorder %s108, %s110
      %p117 = scmp.eq.s32.totalorder %s32, 1
      %p118 = por %p116, %p117
      %p119 = scmp.ne.s32.totalorder %s110, %s111
      %p120 = scmp.eq.s32.totalorder %s32, 0
      %p121 = por %p119, %p120
      %p122 = scmp.ne.s32.totalorder %s110, %s111
      %p123 = scmp.eq.s32.totalorder %s33, 1
      %p124 = por %p122, %p123
      %p126 = scmp.ne.s32.totalorder %s111, %s125
      %p127 = scmp.eq.s32.totalorder %s33, 0
      %p128 = por %p126, %p127
      %s130 = sadd.s32 %s129, 1
      %p133 = scmp.eq.s32.totalorder %s27, 1
      %p134 = scmp.ne.s32.totalorder %s129, %s131
      %p135 = scmp.eq.s32.totalorder %s27, 0
      %p136 = por %p134, %p135
      %p137 = scmp.ne.s32.totalorder %s129, %s131
      %p138 = scmp.eq.s32.totalorder %s32, 1
      %p139 = por %p137, %p138
      %p140 = scmp.ne.s32.totalorder %s131, %s132
      %p141 = scmp.eq.s32.totalorder %s32, 0
      %p142 = por %p140, %p141
      %p143 = scmp.ne.s32.totalorder %s131, %s132
      %p144 = scmp.eq.s32.totalorder %s33, 1
      %p145 = por %p143, %p144
      %p147 = scmp.ne.s32.totalorder %s132, %s146
      %p148 = scmp.eq.s32.totalorder %s33, 0
      %p149 = por %p147, %p148
      %s151 = sadd.s32 %s150, 1
      %p154 = scmp.eq.s32.totalorder %s27, 1
      %p155 = scmp.ne.s32.totalorder %s150, %s152
      %p156 = scmp.eq.s32.totalorder %s27, 0
      %p157 = por %p155, %p156
      %p158 = scmp.ne.s32.totalorder %s150, %s152
      %p159 = scmp.eq.s32.totalorder %s32, 1
      %p160 = por %p158, %p159
      %p161 = scmp.ne.s32.totalorder %s152, %s153
      %p162 = scmp.eq.s32.totalorder %s32, 0
      %p163 = por %p161, %p162
      %p164 = scmp.ne.s32.totalorder %s152, %s153
      %p165 = scmp.eq.s32.totalorder %s33, 1
      %p166 = por %p164, %p165
      %p168 = scmp.ne.s32.totalorder %s153, %s167
      %p169 = scmp.eq.s32.totalorder %s33, 0
      %p170 = por %p168, %p169
      %s172 = sadd.s32 %s171, 1
      %p175 = scmp.eq.s32.totalorder %s27, 1
      %p176 = scmp.ne.s32.totalorder %s171, %s173
      %p177 = scmp.eq.s32.totalorder %s27, 0
      %p178 = por %p176, %p177
      %p179 = scmp.ne.s32.totalorder %s171, %s173
      %p180 = scmp.eq.s32.totalorder %s32, 1
      %p181 = por %p179, %p180
      %p182 = scmp.ne.s32.totalorder %s173, %s174
      %p183 = scmp.eq.s32.totalorder %s32, 0
      %p184 = por %p182, %p183
      %p185 = scmp.ne.s32.totalorder %s173, %s174
      %p186 = scmp.eq.s32.totalorder %s33, 1
      %p187 = por %p185, %p186
      %p189 = scmp.ne.s32.totalorder %s174, %s188
      %p190 = scmp.eq.s32.totalorder %s33, 0
      %p191 = por %p189, %p190
      %s193 = sadd.s32 %s192, 1
      %p196 = scmp.eq.s32.totalorder %s27, 1
      %p197 = scmp.ne.s32.totalorder %s192, %s194
      %p198 = scmp.eq.s32.totalorder %s27, 0
      %p199 = por %p197, %p198
      %p200 = scmp.ne.s32.totalorder %s192, %s194
      %p201 = scmp.eq.s32.totalorder %s32, 1
      %p202 = por %p200, %p201
      %p203 = scmp.ne.s32.totalorder %s194, %s195
      %p204 = scmp.eq.s32.totalorder %s32, 0
      %p205 = por %p203, %p204
      %p206 = scmp.ne.s32.totalorder %s194, %s195
      %p207 = scmp.eq.s32.totalorder %s33, 1
      %p208 = por %p206, %p207
      %p210 = scmp.ne.s32.totalorder %s195, %s209
      %p211 = scmp.eq.s32.totalorder %s33, 0
      %p212 = por %p210, %p211
      %s214 = sadd.s32 %s213, 1
      %p217 = scmp.eq.s32.totalorder %s27, 1
      %p218 = scmp.ne.s32.totalorder %s213, %s215
      %p219 = scmp.eq.s32.totalorder %s27, 0
      %p220 = por %p218, %p219
      %p221 = scmp.ne.s32.totalorder %s213, %s215
      %p222 = scmp.eq.s32.totalorder %s32, 1
      %p223 = por %p221, %p222
      %p224 = scmp.ne.s32.totalorder %s215, %s216
      %p225 = scmp.eq.s32.totalorder %s32, 0
      %p226 = por %p224, %p225
      %p227 = scmp.ne.s32.totalorder %s215, %s216
      %p228 = scmp.eq.s32.totalorder %s33, 1
      %p229 = por %p227, %p228
      %p231 = scmp.ne.s32.totalorder %s216, %s230
      %p232 = scmp.eq.s32.totalorder %s33, 0
      %p233 = por %p231, %p232
      %s235 = sadd.s32 %s234, 1
      %p238 = scmp.eq.s32.totalorder %s27, 1
      %p239 = scmp.ne.s32.totalorder %s234, %s236
      %p240 = scmp.eq.s32.totalorder %s27, 0
      %p241 = por %p239, %p240
      %p242 = scmp.ne.s32.totalorder %s234, %s236
      %p243 = scmp.eq.s32.totalorder %s32, 1
      %p244 = por %p242, %p243
      %p245 = scmp.ne.s32.totalorder %s236, %s237
      %p246 = scmp.eq.s32.totalorder %s32, 0
      %p247 = por %p245, %p246
      %p248 = scmp.ne.s32.totalorder %s236, %s237
      %p249 = scmp.eq.s32.totalorder %s33, 1
      %p250 = por %p248, %p249
      %p252 = scmp.ne.s32.totalorder %s237, %s251
      %p253 = scmp.eq.s32.totalorder %s33, 0
      %p254 = por %p252, %p253
      %s256 = sadd.s32 %s255, 1
      %p259 = scmp.eq.s32.totalorder %s27, 1
      %p260 = scmp.ne.s32.totalorder %s255, %s257
      %p261 = scmp.eq.s32.totalorder %s27, 0
      %p262 = por %p260, %p261
      %p263 = scmp.ne.s32.totalorder %s255, %s257
      %p264 = scmp.eq.s32.totalorder %s32, 1
      %p265 = por %p263, %p264
      %p266 = scmp.ne.s32.totalorder %s257, %s258
      %p267 = scmp.eq.s32.totalorder %s32, 0
      %p268 = por %p266, %p267
      %p269 = scmp.ne.s32.totalorder %s257, %s258
      %p270 = scmp.eq.s32.totalorder %s33, 1
      %p271 = por %p269, %p270
      %p273 = scmp.ne.s32.totalorder %s258, %s272
      %p274 = scmp.eq.s32.totalorder %s33, 0
      %p275 = por %p273, %p274
      %s277 = sadd.s32 %s276, 1
      %p280 = scmp.eq.s32.totalorder %s27, 1
      %p281 = scmp.ne.s32.totalorder %s276, %s278
      %p282 = scmp.eq.s32.totalorder %s27, 0
      %p283 = por %p281, %p282
      %p284 = scmp.ne.s32.totalorder %s276, %s278
      %p285 = scmp.eq.s32.totalorder %s32, 1
      %p286 = por %p284, %p285
      %p287 = scmp.ne.s32.totalorder %s278, %s279
      %p288 = scmp.eq.s32.totalorder %s32, 0
      %p289 = por %p287, %p288
      %p290 = scmp.ne.s32.totalorder %s278, %s279
      %p291 = scmp.eq.s32.totalorder %s33, 1
      %p292 = por %p290, %p291
      %p294 = scmp.ne.s32.totalorder %s279, %s293
      %p295 = scmp.eq.s32.totalorder %s33, 0
      %p296 = por %p294, %p295
      %s298 = sadd.s32 %s297, 1
      %p301 = scmp.eq.s32.totalorder %s27, 1
      %p302 = scmp.ne.s32.totalorder %s297, %s299
      %p303 = scmp.eq.s32.totalorder %s27, 0
      %p304 = por %p302, %p303
      %p305 = scmp.ne.s32.totalorder %s297, %s299
      %p306 = scmp.eq.s32.totalorder %s32, 1
      %p307 = por %p305, %p306
      %p308 = scmp.ne.s32.totalorder %s299, %s300
      %p309 = scmp.eq.s32.totalorder %s32, 0
      %p310 = por %p308, %p309
      %p311 = scmp.ne.s32.totalorder %s299, %s300
      %p312 = scmp.eq.s32.totalorder %s33, 1
      %p313 = por %p311, %p312
      %p315 = scmp.ne.s32.totalorder %s300, %s314
      %p316 = scmp.eq.s32.totalorder %s33, 0
      %p317 = por %p315, %p316
      %s319 = sadd.s32 %s318, 1
      %p322 = scmp.eq.s32.totalorder %s27, 1
      %p323 = scmp.ne.s32.totalorder %s318, %s320
      %p324 = scmp.eq.s32.totalorder %s27, 0
      %p325 = por %p323, %p324
      %p326 = scmp.ne.s32.totalorder %s318, %s320
      %p327 = scmp.eq.s32.totalorder %s32, 1
      %p328 = por %p326, %p327
      %p329 = scmp.ne.s32.totalorder %s320, %s321
      %p330 = scmp.eq.s32.totalorder %s32, 0
      %p331 = por %p329, %p330
      %p332 = scmp.ne.s32.totalorder %s320, %s321
      %p333 = scmp.eq.s32.totalorder %s33, 1
      %p334 = por %p332, %p333
      %p336 = scmp.ne.s32.totalorder %s321, %s335
      %p337 = scmp.eq.s32.totalorder %s33, 0
      %p338 = por %p336, %p337
      %s340 = sadd.s32 %s339, 1
      %p343 = scmp.eq.s32.totalorder %s27, 1
      %p344 = scmp.ne.s32.totalorder %s339, %s341
      %p345 = scmp.eq.s32.totalorder %s27, 0
      %p346 = por %p344, %p345
      %p347 = scmp.ne.s32.totalorder %s339, %s341
      %p348 = scmp.eq.s32.totalorder %s32, 1
      %p349 = por %p347, %p348
      %p350 = scmp.ne.s32.totalorder %s341, %s342
      %p351 = scmp.eq.s32.totalorder %s32, 0
      %p352 = por %p350, %p351
      %p353 = scmp.ne.s32.totalorder %s341, %s342
      %p354 = scmp.eq.s32.totalorder %s33, 1
      %p355 = por %p353, %p354
      %p357 = scmp.ne.s32.totalorder %s342, %s356
      %p358 = scmp.eq.s32.totalorder %s33, 0
      %p359 = por %p357, %p358
      %s361 = sadd.s32 %s360, 1
      %p364 = scmp.eq.s32.totalorder %s27, 1
      %p365 = scmp.ne.s32.totalorder %s360, %s362
      %p366 = scmp.eq.s32.totalorder %s27, 0
      %p367 = por %p365, %p366
      %p368 = scmp.ne.s32.totalorder %s360, %s362
      %p369 = scmp.eq.s32.totalorder %s32, 1
      %p370 = por %p368, %p369
      %p371 = scmp.ne.s32.totalorder %s362, %s363
      %p372 = scmp.eq.s32.totalorder %s32, 0
      %p373 = por %p371, %p372
      %p374 = scmp.ne.s32.totalorder %s362, %s363
      %p375 = scmp.eq.s32.totalorder %s33, 1
      %p376 = por %p374, %p375
      %p378 = scmp.ne.s32.totalorder %s363, %s377
      %p379 = scmp.eq.s32.totalorder %s33, 0
      %p380 = por %p378, %p379
      %s382 = sadd.s32 %s381, 1
      %p385 = scmp.eq.s32.totalorder %s27, 1
      %p386 = scmp.ne.s32.totalorder %s381, %s383
      %p387 = scmp.eq.s32.totalorder %s27, 0
      %p388 = por %p386, %p387
      %p389 = scmp.ne.s32.totalorder %s381, %s383
      %p390 = scmp.eq.s32.totalorder %s32, 1
      %p391 = por %p389, %p390
      %p392 = scmp.ne.s32.totalorder %s383, %s384
      %p393 = scmp.eq.s32.totalorder %s32, 0
      %p394 = por %p392, %p393
      %p395 = scmp.ne.s32.totalorder %s383, %s384
      %p396 = scmp.eq.s32.totalorder %s33, 1
      %p397 = por %p395, %p396
      %p399 = scmp.ne.s32.totalorder %s384, %s398
      %p400 = scmp.eq.s32.totalorder %s33, 0
      %p401 = por %p399, %p400
      %s403 = sadd.s32 %s402, 1
      %p406 = scmp.eq.s32.totalorder %s27, 1
      %p407 = scmp.ne.s32.totalorder %s402, %s404
      %p408 = scmp.eq.s32.totalorder %s27, 0
      %p409 = por %p407, %p408
      %p410 = scmp.ne.s32.totalorder %s402, %s404
      %p411 = scmp.eq.s32.totalorder %s32, 1
      %p412 = por %p410, %p411
      %p413 = scmp.ne.s32.totalorder %s404, %s405
      %p414 = scmp.eq.s32.totalorder %s32, 0
      %p415 = por %p413, %p414
      %p416 = scmp.ne.s32.totalorder %s404, %s405
      %p417 = scmp.eq.s32.totalorder %s33, 1
      %p418 = por %p416, %p417
      %p420 = scmp.ne.s32.totalorder %s405, %s419
      %p421 = scmp.eq.s32.totalorder %s33, 0
      %p422 = por %p420, %p421
      %s423 = ssub.s32 %s27, %s34
      %p424 = scmp.eq.s32.totalorder %s423, 0
      %s426 = sadd.s32 %s425, 1
      %s427 = scalar_select %p424, %s425, %s426
      %p430 = pneg %p424
      %p431 = scmp.eq.s32.totalorder %s27, 1
      %p432 = por %p430, %p431
      %p433 = scmp.ne.s32.totalorder %s425, %s428
      %p434 = scmp.eq.s32.totalorder %s27, 0
      %p435 = por %p433, %p434
      %p436 = scmp.ne.s32.totalorder %s425, %s428
      %p437 = scmp.eq.s32.totalorder %s32, 1
      %p438 = por %p436, %p437
      %p439 = scmp.ne.s32.totalorder %s428, %s429
      %p440 = scmp.eq.s32.totalorder %s32, 0
      %p441 = por %p439, %p440
      %p442 = scmp.ne.s32.totalorder %s428, %s429
      %p443 = scmp.eq.s32.totalorder %s33, 1
      %p444 = por %p442, %p443
      %p446 = scmp.ne.s32.totalorder %s429, %s445
      %p447 = scmp.eq.s32.totalorder %s33, 0
      %p448 = por %p446, %p447
      %p449 = scmp.le.s32.totalorder 1, %s27
      %p450 = scmp.lt.s32.totalorder %s27, 3
      %p451 = pnand %p449, %p450
      %p452 = pneg %p451
      // Predicated region
      $region9: #{tpu_custom_call.1} parent=5 // pred_check
        _
      $region10: #{tpu_custom_call.1} parent=5 // pred_check_branch
        %454 = sbr.rel (%p451) target = $region12
      $region11: #{tpu_custom_call.1} parent=5 // pred_region
        %s455 = ssub.s32 %s27, 1
        // Predicated region
        $region13: #{tpu_custom_call.1} parent=11 // pred_check
          %p456 = pneg %p100
        $region14: #{tpu_custom_call.1} parent=11 // pred_check_branch
          %458 = sbr.rel (%p456) target = $region16
        $region15: #{tpu_custom_call.1} parent=11 // pred_region
          _
        $region16: #{tpu_custom_call.1} parent=11 // pred_fallthru
          _
        // Predicated region
        $region17: #{tpu_custom_call.1} parent=11 // pred_check
          %p459 = pneg %p121
        $region18: #{tpu_custom_call.1} parent=11 // pred_check_branch
          %461 = sbr.rel (%p459) target = $region20
        $region19: #{tpu_custom_call.1} parent=11 // pred_region
          _
        $region20: #{tpu_custom_call.1} parent=11 // pred_fallthru
          _
        // Predicated region
        $region21: #{tpu_custom_call.1} parent=11 // pred_check
          %p462 = pneg %p142
        $region22: #{tpu_custom_call.1} parent=11 // pred_check_branch
          %464 = sbr.rel (%p462) target = $region24
        $region23: #{tpu_custom_call.1} parent=11 // pred_region
          _
        $region24: #{tpu_custom_call.1} parent=11 // pred_fallthru
          _
        // Predicated region
        $region25: #{tpu_custom_call.1} parent=11 // pred_check
          %p465 = pneg %p163
        $region26: #{tpu_custom_call.1} parent=11 // pred_check_branch
          %467 = sbr.rel (%p465) target = $region28
        $region27: #{tpu_custom_call.1} parent=11 // pred_region
          _
        $region28: #{tpu_custom_call.1} parent=11 // pred_fallthru
          _
        // Predicated region
        $region29: #{tpu_custom_call.1} parent=11 // pred_check
          %p468 = pneg %p184
        $region30: #{tpu_custom_call.1} parent=11 // pred_check_branch
          %470 = sbr.rel (%p468) target = $region32
        $region31: #{tpu_custom_call.1} parent=11 // pred_region
          _
        $region32: #{tpu_custom_call.1} parent=11 // pred_fallthru
          _
        // Predicated region
        $region33: #{tpu_custom_call.1} parent=11 // pred_check
          %p471 = pneg %p205
        $region34: #{tpu_custom_call.1} parent=11 // pred_check_branch
          %473 = sbr.rel (%p471) target = $region36
        $region35: #{tpu_custom_call.1} parent=11 // pred_region
          _
        $region36: #{tpu_custom_call.1} parent=11 // pred_fallthru
          _
        // Predicated region
        $region37: #{tpu_custom_call.1} parent=11 // pred_check
          %p474 = pneg %p226
        $region38: #{tpu_custom_call.1} parent=11 // pred_check_branch
          %476 = sbr.rel (%p474) target = $region40
        $region39: #{tpu_custom_call.1} parent=11 // pred_region
          _
        $region40: #{tpu_custom_call.1} parent=11 // pred_fallthru
          _
        // Predicated region
        $region41: #{tpu_custom_call.1} parent=11 // pred_check
          %p477 = pneg %p247
        $region42: #{tpu_custom_call.1} parent=11 // pred_check_branch
          %479 = sbr.rel (%p477) target = $region44
        $region43: #{tpu_custom_call.1} parent=11 // pred_region
          _
        $region44: #{tpu_custom_call.1} parent=11 // pred_fallthru
          _
        // Predicated region
        $region45: #{tpu_custom_call.1} parent=11 // pred_check
          %p480 = pneg %p268
        $region46: #{tpu_custom_call.1} parent=11 // pred_check_branch
          %482 = sbr.rel (%p480) target = $region48
        $region47: #{tpu_custom_call.1} parent=11 // pred_region
          _
        $region48: #{tpu_custom_call.1} parent=11 // pred_fallthru
          _
        // Predicated region
        $region49: #{tpu_custom_call.1} parent=11 // pred_check
          %p483 = pneg %p289
        $region50: #{tpu_custom_call.1} parent=11 // pred_check_branch
          %485 = sbr.rel (%p483) target = $region52
        $region51: #{tpu_custom_call.1} parent=11 // pred_region
          _
        $region52: #{tpu_custom_call.1} parent=11 // pred_fallthru
          _
        // Predicated region
        $region53: #{tpu_custom_call.1} parent=11 // pred_check
          %p486 = pneg %p310
        $region54: #{tpu_custom_call.1} parent=11 // pred_check_branch
          %488 = sbr.rel (%p486) target = $region56
        $region55: #{tpu_custom_call.1} parent=11 // pred_region
          _
        $region56: #{tpu_custom_call.1} parent=11 // pred_fallthru
          _
        // Predicated region
        $region57: #{tpu_custom_call.1} parent=11 // pred_check
          %p489 = pneg %p331
        $region58: #{tpu_custom_call.1} parent=11 // pred_check_branch
          %491 = sbr.rel (%p489) target = $region60
        $region59: #{tpu_custom_call.1} parent=11 // pred_region
          _
        $region60: #{tpu_custom_call.1} parent=11 // pred_fallthru
          _
        // Predicated region
        $region61: #{tpu_custom_call.1} parent=11 // pred_check
          %p492 = pneg %p352
        $region62: #{tpu_custom_call.1} parent=11 // pred_check_branch
          %494 = sbr.rel (%p492) target = $region64
        $region63: #{tpu_custom_call.1} parent=11 // pred_region
          _
        $region64: #{tpu_custom_call.1} parent=11 // pred_fallthru
          _
        // Predicated region
        $region65: #{tpu_custom_call.1} parent=11 // pred_check
          %p495 = pneg %p373
        $region66: #{tpu_custom_call.1} parent=11 // pred_check_branch
          %497 = sbr.rel (%p495) target = $region68
        $region67: #{tpu_custom_call.1} parent=11 // pred_region
          _
        $region68: #{tpu_custom_call.1} parent=11 // pred_fallthru
          _
        // Predicated region
        $region69: #{tpu_custom_call.1} parent=11 // pred_check
          %p498 = pneg %p394
        $region70: #{tpu_custom_call.1} parent=11 // pred_check_branch
          %500 = sbr.rel (%p498) target = $region72
        $region71: #{tpu_custom_call.1} parent=11 // pred_region
          _
        $region72: #{tpu_custom_call.1} parent=11 // pred_fallthru
          _
        // Predicated region
        $region73: #{tpu_custom_call.1} parent=11 // pred_check
          %p501 = pneg %p415
        $region74: #{tpu_custom_call.1} parent=11 // pred_check_branch
          %503 = sbr.rel (%p501) target = $region76
        $region75: #{tpu_custom_call.1} parent=11 // pred_region
          _
        $region76: #{tpu_custom_call.1} parent=11 // pred_fallthru
          _
      $region12: #{tpu_custom_call.1} parent=5 // pred_fallthru
        _
      %p504 = scmp.lt.s32.totalorder %s27, 2
      // Predicated region
      $region77: #{tpu_custom_call.1} parent=5 // pred_check
        %p505 = pneg %p504
      $region78: #{tpu_custom_call.1} parent=5 // pred_check_branch
        %507 = sbr.rel (%p505) target = $region80
      $region79: #{tpu_custom_call.1} parent=5 // pred_region
        // Predicated region
        $region81: #{tpu_custom_call.1} parent=79 // pred_check
          %p508 = pneg %p47
        $region82: #{tpu_custom_call.1} parent=79 // pred_check_branch
          %510 = sbr.rel (%p508) target = $region84
        $region83: #{tpu_custom_call.1} parent=79 // pred_region
          %p511 = scmp.lt.s32.totalorder %s27, 1
          %s512 = scalar_select %p511, %s27, 1
          %s513 = smul.addr %s512, 8
          %s514 = scalar_lea.vmem %s0, %s513
        $region84: #{tpu_custom_call.1} parent=79 // pred_fallthru
          _
        // Predicated region
        $region85: #{tpu_custom_call.1} parent=79 // pred_check
          %p515 = pneg %p73
        $region86: #{tpu_custom_call.1} parent=79 // pred_check_branch
          %517 = sbr.rel (%p515) target = $region88
        $region87: #{tpu_custom_call.1} parent=79 // pred_region
          %p518 = scmp.lt.s32.totalorder %s27, 1
          %s519 = scalar_select %p518, %s27, 1
          %s520 = scalar_lea.vmem %s1, %s519
        $region88: #{tpu_custom_call.1} parent=79 // pred_fallthru
          _
      $region80: #{tpu_custom_call.1} parent=5 // pred_fallthru
        _
      %p521 = scmp.le.s32.totalorder 1, %s27
      %p522 = scmp.lt.s32.totalorder %s27, 3
      %p523 = pnand %p521, %p522
      %p524 = pneg %p523
      // Predicated region
      $region89: #{tpu_custom_call.1} parent=5 // pred_check
        _
      $region90: #{tpu_custom_call.1} parent=5 // pred_check_branch
        %526 = sbr.rel (%p523) target = $region92
      $region91: #{tpu_custom_call.1} parent=5 // pred_region
        %s527 = ssub.s32 %s27, 1
        %p528 = scmp.lt.s32.totalorder %s32, 1
        %s529 = scalar_select %p528, %s32, 1
        %s530 = smul.addr %s529, 8
        %s531 = scalar_lea.vmem %s0, %s530
        %p532 = pneg %p53
        %p533 = pneg %p50
        %p534 = scmp.lt.s32.totalorder %s32, 1
        %s535 = scalar_select %p534, %s32, 1
        %s536 = scalar_lea.vmem %s1, %s535
        %p537 = pneg %p79
        %p538 = pneg %p76
        %p539 = pneg %p100
        %p540 = pneg %p97
        %p541 = pneg %p121
        %p542 = pneg %p118
        %p543 = pneg %p142
        %p544 = pneg %p139
        %p545 = pneg %p163
        %p546 = pneg %p160
        %p547 = pneg %p184
        %p548 = pneg %p181
        %p549 = pneg %p205
        %p550 = pneg %p202
        %p551 = pneg %p226
        %p552 = pneg %p223
        %p553 = pneg %p247
        %p554 = pneg %p244
        %p555 = pneg %p268
        %p556 = pneg %p265
        %p557 = pneg %p289
        %p558 = pneg %p286
        %p559 = pneg %p310
        %p560 = pneg %p307
        %p561 = pneg %p331
        %p562 = pneg %p328
        %p563 = pneg %p352
        %p564 = pneg %p349
        %p565 = pneg %p373
        %p566 = pneg %p370
        %p567 = pneg %p394
        %p568 = pneg %p391
        %p569 = pneg %p415
        %p570 = pneg %p412
        %p571 = pneg %p441
        %p572 = pneg %p438
        %s573 = sand.u32 %s428, 1
        %s574 = scalar_lea.sflag [#allocation3], %s573
        %s575 = sand.u32 %s428, 1
        %s576 = smul.addr %s575, 8
        %s577 = scalar_lea.vmem [#allocation2], %s576
        %p578 = scmp.lt.s32.totalorder %s32, 1
        %s579 = scalar_select %p578, %s32, 1
        %s580 = smul.addr %s579, 8
        %s581 = scalar_lea.vmem %s0, %s580
        %p582 = scmp.lt.s32.totalorder %s32, 1
        %s583 = scalar_select %p582, %s32, 1
        %s584 = scalar_lea.vmem %s1, %s583
        %v585 = vld [vmem:[%s581] sm:$0xff]
        %v586 = vld [vmem:[%s584] sm:$0x1]
        %v587 = vld [vmem:[%s2] sm:$0x1]
        %v588 = vld [vmem:[%s3] sm:$0x1]
        %vm589 = vcmask 261120
        %v590 = vsel %vm589, %v585, 0.0
        %591 = vadd.xlane.f32.xlu0 %v590
        %v592 = vpop.xlane.xlu0 %591
        %v593 = vrcp.pop 32.0
        %v594 = vmul.f32 %v592, %v593
        %v595 = vsub.f32 %v585, %v594
        %v596 = vmul.f32 %v595, %v595
        %v597 = vsel %vm589, %v596, 0.0
        %598 = vadd.xlane.f32.xlu0 %v597
        %v599 = vpop.xlane.xlu0 %598
        %v600 = vrcp.pop 31.0
        %v601 = vmul.f32 %v599, %v600
        %v602 = vrsqrt.pop %v601
        %v603 = vmul.f32 %v601, %v602
        %vm604 = vcmp.eq.f32.partialorder %v601, inf
        %v605 = vsel %vm604, %v601, %v603
        %vm606 = vcmp.eq.f32.partialorder %v601, 0.0
        %v607 = vand.u32 %v601, 2147483648
        %v608 = vsel %vm606, %v607, %v605
        %v610 = vlaneseq
        %v611 = vshrl.u32 %v610, 7
        %v612 = vsub.s32 0, %v611
        %v613 = vrot.slane %v587, %v612
        %v615 = vmul.f32 %v613, %v595
        %v616 = vadd.f32 %v608, 1e-06
        %v617 = vrcp.pop %v616
        %v618 = vmul.f32 %v615, %v617
        %v620 = vlaneseq
        %v621 = vshrl.u32 %v620, 7
        %v622 = vsub.s32 0, %v621
        %v623 = vrot.slane %v588, %v622
        %v625 = vadd.f32 %v618, %v623
        %v626 = vld [vmem:[%s4] sm:$0xff]
        %v627 = vld [vmem:[%s4 + $0x8] sm:$0xff]
        %v628 = vld [vmem:[%s4 + $0x10] sm:$0xff]
        %v629 = vld [vmem:[%s4 + $0x18] sm:$0xff]
        %v630 = vld [vmem:[%s5] sm:$0x1]
        %v632 = vlaneseq
        %v633 = vshrl.u32 %v632, 7
        %v634 = vsub.s32 0, %v633
        %v635 = vrot.slane %v630, %v634
        %v638 = vsel %vm589, %v625, 0
        %640 = vmatprep.subr.mxu0 0.0
        %641 = vmatpush1.msra.mxu0 %v626
        %642 = vmatprep.subr.mxu0 0.0
        %643 = vmatpush1.msra.mxu0 %v627
        %644 = vmatprep.subr.mxu0 0.0
        %645 = vmatpush1.msra.mxu0 %v628
        %646 = vmatprep.subr.mxu0 0.0
        %647 = vmatpush1.msra.mxu0 %v629
        %648 = vmatprep.subr.mxu0 0.0
        %649 = vmatpush1.msra.mxu0 0.0
        %650 = vmatprep.subr.mxu0 0.0
        %651 = vmatpush1.msra.mxu0 0.0
        %652 = vmatprep.subr.mxu0 0.0
        %653 = vmatpush1.msra.mxu0 0.0
        %654 = vmatprep.subr.mxu0 0.0
        %655 = vmatpush1.msra.mxu0 0.0
        %656 = vmatprep.subr.mxu0 0.0
        %657 = vmatpush1.msra.mxu0 0.0
        %658 = vmatprep.subr.mxu0 0.0
        %659 = vmatpush1.msra.mxu0 0.0
        %660 = vmatprep.subr.mxu0 0.0
        %661 = vmatpush1.msra.mxu0 0.0
        %662 = vmatprep.subr.mxu0 0.0
        %663 = vmatpush1.msra.mxu0 0.0
        %664 = vmatprep.subr.mxu0 0.0
        %665 = vmatpush1.msra.mxu0 0.0
        %666 = vmatprep.subr.mxu0 0.0
        %667 = vmatpush1.msra.mxu0 0.0
        %668 = vmatprep.subr.mxu0 0.0
        %669 = vmatpush1.msra.mxu0 0.0
        %670 = vmatprep.subr.mxu0 0.0
        %671 = vmatpush1.msra.mxu0 0.0
        %672 = vmatprep.subr.mxu0 0.0
        %673 = vmatpush1.msra.mxu0 0.0
        %674 = vmatprep.subr.mxu0 0.0
        %675 = vmatpush1.msra.mxu0 0.0
        %676 = vmatprep.subr.mxu0 0.0
        %677 = vmatpush1.msra.mxu0 0.0
        %678 = vmatprep.subr.mxu0 0.0
        %679 = vmatpush1.msra.mxu0 0.0
        %680 = vmatprep.subr.mxu0 0.0
        %681 = vmatpush1.msra.mxu0 0.0
        %682 = vmatprep.subr.mxu0 0.0
        %683 = vmatpush1.msra.mxu0 0.0
        %684 = vmatprep.subr.mxu0 0.0
        %685 = vmatpush1.msra.mxu0 0.0
        %686 = vmatprep.subr.mxu0 0.0
        %687 = vmatpush1.msra.mxu0 0.0
        %688 = vmatprep.subr.mxu0 0.0
        %689 = vmatpush1.msra.mxu0 0.0
        %690 = vmatprep.subr.mxu0 0.0
        %691 = vmatpush1.msra.mxu0 0.0
        %692 = vmatprep.subr.mxu0 0.0
        %693 = vmatpush1.msra.mxu0 0.0
        %694 = vmatprep.subr.mxu0 0.0
        %695 = vmatpush1.msra.mxu0 0.0
        %696 = vmatprep.subr.mxu0 0.0
        %697 = vmatpush1.msra.mxu0 0.0
        %698 = vmatprep.subr.mxu0 0.0
        %699 = vmatpush1.msra.mxu0 0.0
        %700 = vmatprep.subr.mxu0 0.0
        %701 = vmatpush1.msra.mxu0 0.0
        %702 = vmatprep.subr.mxu0 0.0
        %703 = vmatpush1.msra.mxu0 0.0
        %704 = vmatprep.mubr.f32.mxu0 0.0
        %705 = vmatmul.mubr.f32.gmra.mrb[0].mxu0 %v638
        %v706 = vpop.f32.mrb[0].mxu0
        %v707 = vadd.f32 %v635, %v706
        %v708 = vpop.f32.mrb[0].mxu0
        %709 = vdwg.mxu0
        %v710 = vld [vmem:[%s6] sm:$0xff]
        %v711 = vld [vmem:[%s6 + $0x8] sm:$0xff]
        %v712 = vld [vmem:[%s6 + $0x10] sm:$0xff]
        %v713 = vld [vmem:[%s6 + $0x18] sm:$0xff]
        %v714 = vld [vmem:[%s7] sm:$0x1]
        %v716 = vlaneseq
        %v717 = vshrl.u32 %v716, 7
        %v718 = vsub.s32 0, %v717
        %v719 = vrot.slane %v714, %v718
        %721 = vmatprep.subr.mxu0 0.0
        %722 = vmatpush1.msra.mxu0 %v710
        %723 = vmatprep.subr.mxu0 0.0
        %724 = vmatpush1.msra.mxu0 %v711
        %725 = vmatprep.subr.mxu0 0.0
        %726 = vmatpush1.msra.mxu0 %v712
        %727 = vmatprep.subr.mxu0 0.0
        %728 = vmatpush1.msra.mxu0 %v713
        %729 = vmatprep.subr.mxu0 0.0
        %730 = vmatpush1.msra.mxu0 0.0
        %731 = vmatprep.subr.mxu0 0.0
        %732 = vmatpush1.msra.mxu0 0.0
        %733 = vmatprep.subr.mxu0 0.0
        %734 = vmatpush1.msra.mxu0 0.0
        %735 = vmatprep.subr.mxu0 0.0
        %736 = vmatpush1.msra.mxu0 0.0
        %737 = vmatprep.subr.mxu0 0.0
        %738 = vmatpush1.msra.mxu0 0.0
        %739 = vmatprep.subr.mxu0 0.0
        %740 = vmatpush1.msra.mxu0 0.0
        %741 = vmatprep.subr.mxu0 0.0
        %742 = vmatpush1.msra.mxu0 0.0
        %743 = vmatprep.subr.mxu0 0.0
        %744 = vmatpush1.msra.mxu0 0.0
        %745 = vmatprep.subr.mxu0 0.0
        %746 = vmatpush1.msra.mxu0 0.0
        %747 = vmatprep.subr.mxu0 0.0
        %748 = vmatpush1.msra.mxu0 0.0
        %749 = vmatprep.subr.mxu0 0.0
        %750 = vmatpush1.msra.mxu0 0.0
        %751 = vmatprep.subr.mxu0 0.0
        %752 = vmatpush1.msra.mxu0 0.0
        %753 = vmatprep.subr.mxu0 0.0
        %754 = vmatpush1.msra.mxu0 0.0
        %755 = vmatprep.subr.mxu0 0.0
        %756 = vmatpush1.msra.mxu0 0.0
        %757 = vmatprep.subr.mxu0 0.0
        %758 = vmatpush1.msra.mxu0 0.0
        %759 = vmatprep.subr.mxu0 0.0
        %760 = vmatpush1.msra.mxu0 0.0
        %761 = vmatprep.subr.mxu0 0.0
        %762 = vmatpush1.msra.mxu0 0.0
        %763 = vmatprep.subr.mxu0 0.0
        %764 = vmatpush1.msra.mxu0 0.0
        %765 = vmatprep.subr.mxu0 0.0
        %766 = vmatpush1.msra.mxu0 0.0
        %767 = vmatprep.subr.mxu0 0.0
        %768 = vmatpush1.msra.mxu0 0.0
        %769 = vmatprep.subr.mxu0 0.0
        %770 = vmatpush1.msra.mxu0 0.0
        %771 = vmatprep.subr.mxu0 0.0
        %772 = vmatpush1.msra.mxu0 0.0
        %773 = vmatprep.subr.mxu0 0.0
        %774 = vmatpush1.msra.mxu0 0.0
        %775 = vmatprep.subr.mxu0 0.0
        %776 = vmatpush1.msra.mxu0 0.0
        %777 = vmatprep.subr.mxu0 0.0
        %778 = vmatpush1.msra.mxu0 0.0
        %779 = vmatprep.subr.mxu0 0.0
        %780 = vmatpush1.msra.mxu0 0.0
        %781 = vmatprep.subr.mxu0 0.0
        %782 = vmatpush1.msra.mxu0 0.0
        %783 = vmatprep.subr.mxu0 0.0
        %784 = vmatpush1.msra.mxu0 0.0
        %785 = vmatprep.mubr.f32.mxu0 0.0
        %786 = vmatmul.mubr.f32.gmra.mrb[0].mxu0 %v638
        %v787 = vpop.f32.mrb[0].mxu0
        %v788 = vadd.f32 %v719, %v787
        %v789 = vpop.f32.mrb[0].mxu0
        %790 = vdwg.mxu0
        %v791 = vld [vmem:[%s8] sm:$0xff]
        %v792 = vld [vmem:[%s8 + $0x8] sm:$0xff]
        %v793 = vld [vmem:[%s8 + $0x10] sm:$0xff]
        %v794 = vld [vmem:[%s8 + $0x18] sm:$0xff]
        %v795 = vld [vmem:[%s9] sm:$0x1]
        %v797 = vlaneseq
        %v798 = vshrl.u32 %v797, 7
        %v799 = vsub.s32 0, %v798
        %v800 = vrot.slane %v795, %v799
        %802 = vmatprep.subr.mxu0 0.0
        %803 = vmatpush1.msra.mxu0 %v791
        %804 = vmatprep.subr.mxu0 0.0
        %805 = vmatpush1.msra.mxu0 %v792
        %806 = vmatprep.subr.mxu0 0.0
        %807 = vmatpush1.msra.mxu0 %v793
        %808 = vmatprep.subr.mxu0 0.0
        %809 = vmatpush1.msra.mxu0 %v794
        %810 = vmatprep.subr.mxu0 0.0
        %811 = vmatpush1.msra.mxu0 0.0
        %812 = vmatprep.subr.mxu0 0.0
        %813 = vmatpush1.msra.mxu0 0.0
        %814 = vmatprep.subr.mxu0 0.0
        %815 = vmatpush1.msra.mxu0 0.0
        %816 = vmatprep.subr.mxu0 0.0
        %817 = vmatpush1.msra.mxu0 0.0
        %818 = vmatprep.subr.mxu0 0.0
        %819 = vmatpush1.msra.mxu0 0.0
        %820 = vmatprep.subr.mxu0 0.0
        %821 = vmatpush1.msra.mxu0 0.0
        %822 = vmatprep.subr.mxu0 0.0
        %823 = vmatpush1.msra.mxu0 0.0
        %824 = vmatprep.subr.mxu0 0.0
        %825 = vmatpush1.msra.mxu0 0.0
        %826 = vmatprep.subr.mxu0 0.0
        %827 = vmatpush1.msra.mxu0 0.0
        %828 = vmatprep.subr.mxu0 0.0
        %829 = vmatpush1.msra.mxu0 0.0
        %830 = vmatprep.subr.mxu0 0.0
        %831 = vmatpush1.msra.mxu0 0.0
        %832 = vmatprep.subr.mxu0 0.0
        %833 = vmatpush1.msra.mxu0 0.0
        %834 = vmatprep.subr.mxu0 0.0
        %835 = vmatpush1.msra.mxu0 0.0
        %836 = vmatprep.subr.mxu0 0.0
        %837 = vmatpush1.msra.mxu0 0.0
        %838 = vmatprep.subr.mxu0 0.0
        %839 = vmatpush1.msra.mxu0 0.0
        %840 = vmatprep.subr.mxu0 0.0
        %841 = vmatpush1.msra.mxu0 0.0
        %842 = vmatprep.subr.mxu0 0.0
        %843 = vmatpush1.msra.mxu0 0.0
        %844 = vmatprep.subr.mxu0 0.0
        %845 = vmatpush1.msra.mxu0 0.0
        %846 = vmatprep.subr.mxu0 0.0
        %847 = vmatpush1.msra.mxu0 0.0
        %848 = vmatprep.subr.mxu0 0.0
        %849 = vmatpush1.msra.mxu0 0.0
        %850 = vmatprep.subr.mxu0 0.0
        %851 = vmatpush1.msra.mxu0 0.0
        %852 = vmatprep.subr.mxu0 0.0
        %853 = vmatpush1.msra.mxu0 0.0
        %854 = vmatprep.subr.mxu0 0.0
        %855 = vmatpush1.msra.mxu0 0.0
        %856 = vmatprep.subr.mxu0 0.0
        %857 = vmatpush1.msra.mxu0 0.0
        %858 = vmatprep.subr.mxu0 0.0
        %859 = vmatpush1.msra.mxu0 0.0
        %860 = vmatprep.subr.mxu0 0.0
        %861 = vmatpush1.msra.mxu0 0.0
        %862 = vmatprep.subr.mxu0 0.0
        %863 = vmatpush1.msra.mxu0 0.0
        %864 = vmatprep.subr.mxu0 0.0
        %865 = vmatpush1.msra.mxu0 0.0
        %866 = vmatprep.mubr.f32.mxu0 0.0
        %867 = vmatmul.mubr.f32.gmra.mrb[0].mxu0 %v638
        %v868 = vpop.f32.mrb[0].mxu0
        %v869 = vadd.f32 %v800, %v868
        %v870 = vpop.f32.mrb[0].mxu0
        %871 = vdwg.mxu0
        %vm872 = vcmask 64512
        %v874 = vsel %vm872, %v707, 0
        %v877 = vsel %vm872, %v788, 0
        %879 = vmatprep.subr.mxu0 0.0
        %880 = vmatpush1.xpose.msra.mxu0 %v877
        %881 = vmatprep.subr.mxu0 0.0
        %882 = vmatpush1.xpose.msra.mxu0 0.0
        %883 = vmatprep.subr.mxu0 0.0
        %884 = vmatpush1.xpose.msra.mxu0 0.0
        %885 = vmatprep.subr.mxu0 0.0
        %886 = vmatpush1.xpose.msra.mxu0 0.0
        %887 = vmatprep.subr.mxu0 0.0
        %888 = vmatpush1.xpose.msra.mxu0 0.0
        %889 = vmatprep.subr.mxu0 0.0
        %890 = vmatpush1.xpose.msra.mxu0 0.0
        %891 = vmatprep.subr.mxu0 0.0
        %892 = vmatpush1.xpose.msra.mxu0 0.0
        %893 = vmatprep.subr.mxu0 0.0
        %894 = vmatpush1.xpose.msra.mxu0 0.0
        %895 = vmatprep.subr.mxu0 0.0
        %896 = vmatpush1.xpose.msra.mxu0 0.0
        %897 = vmatprep.subr.mxu0 0.0
        %898 = vmatpush1.xpose.msra.mxu0 0.0
        %899 = vmatprep.subr.mxu0 0.0
        %900 = vmatpush1.xpose.msra.mxu0 0.0
        %901 = vmatprep.subr.mxu0 0.0
        %902 = vmatpush1.xpose.msra.mxu0 0.0
        %903 = vmatprep.subr.mxu0 0.0
        %904 = vmatpush1.xpose.msra.mxu0 0.0
        %905 = vmatprep.subr.mxu0 0.0
        %906 = vmatpush1.xpose.msra.mxu0 0.0
        %907 = vmatprep.subr.mxu0 0.0
        %908 = vmatpush1.xpose.msra.mxu0 0.0
        %909 = vmatprep.subr.mxu0 0.0
        %910 = vmatpush1.xpose.msra.mxu0 0.0
        %911 = vmatprep.subr.mxu0 0.0
        %912 = vmatpush1.xpose.msra.mxu0 0.0
        %913 = vmatprep.subr.mxu0 0.0
        %914 = vmatpush1.xpose.msra.mxu0 0.0
        %915 = vmatprep.subr.mxu0 0.0
        %916 = vmatpush1.xpose.msra.mxu0 0.0
        %917 = vmatprep.subr.mxu0 0.0
        %918 = vmatpush1.xpose.msra.mxu0 0.0
        %919 = vmatprep.subr.mxu0 0.0
        %920 = vmatpush1.xpose.msra.mxu0 0.0
        %921 = vmatprep.subr.mxu0 0.0
        %922 = vmatpush1.xpose.msra.mxu0 0.0
        %923 = vmatprep.subr.mxu0 0.0
        %924 = vmatpush1.xpose.msra.mxu0 0.0
        %925 = vmatprep.subr.mxu0 0.0
        %926 = vmatpush1.xpose.msra.mxu0 0.0
        %927 = vmatprep.subr.mxu0 0.0
        %928 = vmatpush1.xpose.msra.mxu0 0.0
        %929 = vmatprep.subr.mxu0 0.0
        %930 = vmatpush1.xpose.msra.mxu0 0.0
        %931 = vmatprep.subr.mxu0 0.0
        %932 = vmatpush1.xpose.msra.mxu0 0.0
        %933 = vmatprep.subr.mxu0 0.0
        %934 = vmatpush1.xpose.msra.mxu0 0.0
        %935 = vmatprep.subr.mxu0 0.0
        %936 = vmatpush1.xpose.msra.mxu0 0.0
        %937 = vmatprep.subr.mxu0 0.0
        %938 = vmatpush1.xpose.msra.mxu0 0.0
        %939 = vmatprep.subr.mxu0 0.0
        %940 = vmatpush1.xpose.msra.mxu0 0.0
        %941 = vmatprep.subr.mxu0 0.0
        %942 = vmatpush1.xpose.msra.mxu0 0.0
        %943 = vmatprep.mubr.f32.mxu0 0.0
        %944 = vmatmul.mubr.f32.gmra.mrb[0].mxu0 %v874
        %v945 = vpop.f32.mrb[0].mxu0
        %v946 = vadd.f32 0.0, %v945
        %v947 = vpop.f32.mrb[0].mxu0
        %948 = vdwg.mxu0
        %v949 = vmul.f32 %v946, 0.35355338
        %vm950 = vcmp.gt.f32.partialorder %v586, 0.0
        %v951 = vsel %vm950, 1, 0
        %v952 = vlaneseq
        %v953 = vshrl.u32 %v952, 7
        %v954 = vsub.s32 0, %v953
        %v955 = vrot.slane %v951, %v954
        %vm956 = vcmp.eq.s32.totalorder %v955, 1
        %v957 = vsel %vm956, %v949, -1e+09
        %v958 = vsel %vm872, %v957, -inf
        %959 = vmax.xlane.f32.xlu0 %v958
        %v960 = vpop.xlane.xlu0 %959
        %v961 = vsub.f32 %v957, %v960
        %v962 = vmul.f32 %v961, 1.442695
        %v963 = vpow.pop %v962
        %v964 = vsel %vm872, %v963, 0.0
        %965 = vadd.xlane.f32.xlu0 %v964
        %v966 = vpop.xlane.xlu0 %965
        %v967 = vrcp.pop %v966
        %v968 = vmul.f32 %v963, %v967
        %v970 = vsel %vm872, %v968, 0
        %972 = vmatprep.subr.mxu0 0.0
        %973 = vmatpush1.msra.mxu0 %v869
        %974 = vmatprep.subr.mxu0 0.0
        %975 = vmatpush1.msra.mxu0 0.0
        %976 = vmatprep.subr.mxu0 0.0
        %977 = vmatpush1.msra.mxu0 0.0
        %978 = vmatprep.subr.mxu0 0.0
        %979 = vmatpush1.msra.mxu0 0.0
        %980 = vmatprep.subr.mxu0 0.0
        %981 = vmatpush1.msra.mxu0 0.0
        %982 = vmatprep.subr.mxu0 0.0
        %983 = vmatpush1.msra.mxu0 0.0
        %984 = vmatprep.subr.mxu0 0.0
        %985 = vmatpush1.msra.mxu0 0.0
        %986 = vmatprep.subr.mxu0 0.0
        %987 = vmatpush1.msra.mxu0 0.0
        %988 = vmatprep.subr.mxu0 0.0
        %989 = vmatpush1.msra.mxu0 0.0
        %990 = vmatprep.subr.mxu0 0.0
        %991 = vmatpush1.msra.mxu0 0.0
        %992 = vmatprep.subr.mxu0 0.0
        %993 = vmatpush1.msra.mxu0 0.0
        %994 = vmatprep.subr.mxu0 0.0
        %995 = vmatpush1.msra.mxu0 0.0
        %996 = vmatprep.subr.mxu0 0.0
        %997 = vmatpush1.msra.mxu0 0.0
        %998 = vmatprep.subr.mxu0 0.0
        %999 = vmatpush1.msra.mxu0 0.0
        %1000 = vmatprep.subr.mxu0 0.0
        %1001 = vmatpush1.msra.mxu0 0.0
        %1002 = vmatprep.subr.mxu0 0.0
        %1003 = vmatpush1.msra.mxu0 0.0
        %1004 = vmatprep.subr.mxu0 0.0
        %1005 = vmatpush1.msra.mxu0 0.0
        %1006 = vmatprep.subr.mxu0 0.0
        %1007 = vmatpush1.msra.mxu0 0.0
        %1008 = vmatprep.subr.mxu0 0.0
        %1009 = vmatpush1.msra.mxu0 0.0
        %1010 = vmatprep.subr.mxu0 0.0
        %1011 = vmatpush1.msra.mxu0 0.0
        %1012 = vmatprep.subr.mxu0 0.0
        %1013 = vmatpush1.msra.mxu0 0.0
        %1014 = vmatprep.subr.mxu0 0.0
        %1015 = vmatpush1.msra.mxu0 0.0
        %1016 = vmatprep.subr.mxu0 0.0
        %1017 = vmatpush1.msra.mxu0 0.0
        %1018 = vmatprep.subr.mxu0 0.0
        %1019 = vmatpush1.msra.mxu0 0.0
        %1020 = vmatprep.subr.mxu0 0.0
        %1021 = vmatpush1.msra.mxu0 0.0
        %1022 = vmatprep.subr.mxu0 0.0
        %1023 = vmatpush1.msra.mxu0 0.0
        %1024 = vmatprep.subr.mxu0 0.0
        %1025 = vmatpush1.msra.mxu0 0.0
        %1026 = vmatprep.subr.mxu0 0.0
        %1027 = vmatpush1.msra.mxu0 0.0
        %1028 = vmatprep.subr.mxu0 0.0
        %1029 = vmatpush1.msra.mxu0 0.0
        %1030 = vmatprep.subr.mxu0 0.0
        %1031 = vmatpush1.msra.mxu0 0.0
        %1032 = vmatprep.subr.mxu0 0.0
        %1033 = vmatpush1.msra.mxu0 0.0
        %1034 = vmatprep.subr.mxu0 0.0
        %1035 = vmatpush1.msra.mxu0 0.0
        %1036 = vmatprep.mubr.f32.mxu0 0.0
        %1037 = vmatmul.mubr.f32.gmra.mrb[0].mxu0 %v970
        %v1038 = vpop.f32.mrb[0].mxu0
        %v1039 = vadd.f32 0.0, %v1038
        %v1040 = vpop.f32.mrb[0].mxu0
        %1041 = vdwg.mxu0
        %v1042 = vld [vmem:[%s10] sm:$0xff]
        %s1043 = scalar_lea.vmem %s4, 32
        %v1044 = vld [vmem:[%s1043] sm:$0xff]
        %v1045 = vld [vmem:[%s1043 + $0x8] sm:$0xff]
        %v1046 = vld [vmem:[%s1043 + $0x10] sm:$0xff]
        %v1047 = vld [vmem:[%s1043 + $0x18] sm:$0xff]
        %s1048 = scalar_lea.vmem %s5, 1
        %v1049 = vld [vmem:[%s1048] sm:$0x1]
        %v1051 = vlaneseq
        %v1052 = vshrl.u32 %v1051, 7
        %v1053 = vsub.s32 0, %v1052
        %v1054 = vrot.slane %v1049, %v1053
        %1056 = vmatprep.subr.mxu0 0.0
        %1057 = vmatpush1.msra.mxu0 %v1044
        %1058 = vmatprep.subr.mxu0 0.0
        %1059 = vmatpush1.msra.mxu0 %v1045
        %1060 = vmatprep.subr.mxu0 0.0
        %1061 = vmatpush1.msra.mxu0 %v1046
        %1062 = vmatprep.subr.mxu0 0.0
        %1063 = vmatpush1.msra.mxu0 %v1047
        %1064 = vmatprep.subr.mxu0 0.0
        %1065 = vmatpush1.msra.mxu0 0.0
        %1066 = vmatprep.subr.mxu0 0.0
        %1067 = vmatpush1.msra.mxu0 0.0
        %1068 = vmatprep.subr.mxu0 0.0
        %1069 = vmatpush1.msra.mxu0 0.0
        %1070 = vmatprep.subr.mxu0 0.0
        %1071 = vmatpush1.msra.mxu0 0.0
        %1072 = vmatprep.subr.mxu0 0.0
        %1073 = vmatpush1.msra.mxu0 0.0
        %1074 = vmatprep.subr.mxu0 0.0
        %1075 = vmatpush1.msra.mxu0 0.0
        %1076 = vmatprep.subr.mxu0 0.0
        %1077 = vmatpush1.msra.mxu0 0.0
        %1078 = vmatprep.subr.mxu0 0.0
        %1079 = vmatpush1.msra.mxu0 0.0
        %1080 = vmatprep.subr.mxu0 0.0
        %1081 = vmatpush1.msra.mxu0 0.0
        %1082 = vmatprep.subr.mxu0 0.0
        %1083 = vmatpush1.msra.mxu0 0.0
        %1084 = vmatprep.subr.mxu0 0.0
        %1085 = vmatpush1.msra.mxu0 0.0
        %1086 = vmatprep.subr.mxu0 0.0
        %1087 = vmatpush1.msra.mxu0 0.0
        %1088 = vmatprep.subr.mxu0 0.0
        %1089 = vmatpush1.msra.mxu0 0.0
        %1090 = vmatprep.subr.mxu0 0.0
        %1091 = vmatpush1.msra.mxu0 0.0
        %1092 = vmatprep.subr.mxu0 0.0
        %1093 = vmatpush1.msra.mxu0 0.0
        %1094 = vmatprep.subr.mxu0 0.0
        %1095 = vmatpush1.msra.mxu0 0.0
        %1096 = vmatprep.subr.mxu0 0.0
        %1097 = vmatpush1.msra.mxu0 0.0
        %1098 = vmatprep.subr.mxu0 0.0
        %1099 = vmatpush1.msra.mxu0 0.0
        %1100 = vmatprep.subr.mxu0 0.0
        %1101 = vmatpush1.msra.mxu0 0.0
        %1102 = vmatprep.subr.mxu0 0.0
        %1103 = vmatpush1.msra.mxu0 0.0
        %1104 = vmatprep.subr.mxu0 0.0
        %1105 = vmatpush1.msra.mxu0 0.0
        %1106 = vmatprep.subr.mxu0 0.0
        %1107 = vmatpush1.msra.mxu0 0.0
        %1108 = vmatprep.subr.mxu0 0.0
        %1109 = vmatpush1.msra.mxu0 0.0
        %1110 = vmatprep.subr.mxu0 0.0
        %1111 = vmatpush1.msra.mxu0 0.0
        %1112 = vmatprep.subr.mxu0 0.0
        %1113 = vmatpush1.msra.mxu0 0.0
        %1114 = vmatprep.subr.mxu0 0.0
        %1115 = vmatpush1.msra.mxu0 0.0
        %1116 = vmatprep.subr.mxu0 0.0
        %1117 = vmatpush1.msra.mxu0 0.0
        %1118 = vmatprep.subr.mxu0 0.0
        %1119 = vmatpush1.msra.mxu0 0.0
        %1120 = vmatprep.mubr.f32.mxu0 0.0
        %1121 = vmatmul.mubr.f32.gmra.mrb[0].mxu0 %v638
        %v1122 = vpop.f32.mrb[0].mxu0
        %v1123 = vadd.f32 %v1054, %v1122
        %v1124 = vpop.f32.mrb[0].mxu0
        %1125 = vdwg.mxu0
        %s1126 = scalar_lea.vmem %s6, 32
        %v1127 = vld [vmem:[%s1126] sm:$0xff]
        %v1128 = vld [vmem:[%s1126 + $0x8] sm:$0xff]
        %v1129 = vld [vmem:[%s1126 + $0x10] sm:$0xff]
        %v1130 = vld [vmem:[%s1126 + $0x18] sm:$0xff]
        %s1131 = scalar_lea.vmem %s7, 1
        %v1132 = vld [vmem:[%s1131] sm:$0x1]
        %v1134 = vlaneseq
        %v1135 = vshrl.u32 %v1134, 7
        %v1136 = vsub.s32 0, %v1135
        %v1137 = vrot.slane %v1132, %v1136
        %1139 = vmatprep.subr.mxu0 0.0
        %1140 = vmatpush1.msra.mxu0 %v1127
        %1141 = vmatprep.subr.mxu0 0.0
        %1142 = vmatpush1.msra.mxu0 %v1128
        %1143 = vmatprep.subr.mxu0 0.0
        %1144 = vmatpush1.msra.mxu0 %v1129
        %1145 = vmatprep.subr.mxu0 0.0
        %1146 = vmatpush1.msra.mxu0 %v1130
        %1147 = vmatprep.subr.mxu0 0.0
        %1148 = vmatpush1.msra.mxu0 0.0
        %1149 = vmatprep.subr.mxu0 0.0
        %1150 = vmatpush1.msra.mxu0 0.0
        %1151 = vmatprep.subr.mxu0 0.0
        %1152 = vmatpush1.msra.mxu0 0.0
        %1153 = vmatprep.subr.mxu0 0.0
        %1154 = vmatpush1.msra.mxu0 0.0
        %1155 = vmatprep.subr.mxu0 0.0
        %1156 = vmatpush1.msra.mxu0 0.0
        %1157 = vmatprep.subr.mxu0 0.0
        %1158 = vmatpush1.msra.mxu0 0.0
        %1159 = vmatprep.subr.mxu0 0.0
        %1160 = vmatpush1.msra.mxu0 0.0
        %1161 = vmatprep.subr.mxu0 0.0
        %1162 = vmatpush1.msra.mxu0 0.0
        %1163 = vmatprep.subr.mxu0 0.0
        %1164 = vmatpush1.msra.mxu0 0.0
        %1165 = vmatprep.subr.mxu0 0.0
        %1166 = vmatpush1.msra.mxu0 0.0
        %1167 = vmatprep.subr.mxu0 0.0
        %1168 = vmatpush1.msra.mxu0 0.0
        %1169 = vmatprep.subr.mxu0 0.0
        %1170 = vmatpush1.msra.mxu0 0.0
        %1171 = vmatprep.subr.mxu0 0.0
        %1172 = vmatpush1.msra.mxu0 0.0
        %1173 = vmatprep.subr.mxu0 0.0
        %1174 = vmatpush1.msra.mxu0 0.0
        %1175 = vmatprep.subr.mxu0 0.0
        %1176 = vmatpush1.msra.mxu0 0.0
        %1177 = vmatprep.subr.mxu0 0.0
        %1178 = vmatpush1.msra.mxu0 0.0
        %1179 = vmatprep.subr.mxu0 0.0
        %1180 = vmatpush1.msra.mxu0 0.0
        %1181 = vmatprep.subr.mxu0 0.0
        %1182 = vmatpush1.msra.mxu0 0.0
        %1183 = vmatprep.subr.mxu0 0.0
        %1184 = vmatpush1.msra.mxu0 0.0
        %1185 = vmatprep.subr.mxu0 0.0
        %1186 = vmatpush1.msra.mxu0 0.0
        %1187 = vmatprep.subr.mxu0 0.0
        %1188 = vmatpush1.msra.mxu0 0.0
        %1189 = vmatprep.subr.mxu0 0.0
        %1190 = vmatpush1.msra.mxu0 0.0
        %1191 = vmatprep.subr.mxu0 0.0
        %1192 = vmatpush1.msra.mxu0 0.0
        %1193 = vmatprep.subr.mxu0 0.0
        %1194 = vmatpush1.msra.mxu0 0.0
        %1195 = vmatprep.subr.mxu0 0.0
        %1196 = vmatpush1.msra.mxu0 0.0
        %1197 = vmatprep.subr.mxu0 0.0
        %1198 = vmatpush1.msra.mxu0 0.0
        %1199 = vmatprep.subr.mxu0 0.0
        %1200 = vmatpush1.msra.mxu0 0.0
        %1201 = vmatprep.subr.mxu0 0.0
        %1202 = vmatpush1.msra.mxu0 0.0
        %1203 = vmatprep.mubr.f32.mxu0 0.0
        %1204 = vmatmul.mubr.f32.gmra.mrb[0].mxu0 %v638
        %v1205 = vpop.f32.mrb[0].mxu0
        %v1206 = vadd.f32 %v1137, %v1205
        %v1207 = vpop.f32.mrb[0].mxu0
        %1208 = vdwg.mxu0
        %s1209 = scalar_lea.vmem %s8, 32
        %v1210 = vld [vmem:[%s1209] sm:$0xff]
        %v1211 = vld [vmem:[%s1209 + $0x8] sm:$0xff]
        %v1212 = vld [vmem:[%s1209 + $0x10] sm:$0xff]
        %v1213 = vld [vmem:[%s1209 + $0x18] sm:$0xff]
        %s1214 = scalar_lea.vmem %s9, 1
        %v1215 = vld [vmem:[%s1214] sm:$0x1]
        %v1217 = vlaneseq
        %v1218 = vshrl.u32 %v1217, 7
        %v1219 = vsub.s32 0, %v1218
        %v1220 = vrot.slane %v1215, %v1219
        %1222 = vmatprep.subr.mxu0 0.0
        %1223 = vmatpush1.msra.mxu0 %v1210
        %1224 = vmatprep.subr.mxu0 0.0
        %1225 = vmatpush1.msra.mxu0 %v1211
        %1226 = vmatprep.subr.mxu0 0.0
        %1227 = vmatpush1.msra.mxu0 %v1212
        %1228 = vmatprep.subr.mxu0 0.0
        %1229 = vmatpush1.msra.mxu0 %v1213
        %1230 = vmatprep.subr.mxu0 0.0
        %1231 = vmatpush1.msra.mxu0 0.0
        %1232 = vmatprep.subr.mxu0 0.0
        %1233 = vmatpush1.msra.mxu0 0.0
        %1234 = vmatprep.subr.mxu0 0.0
        %1235 = vmatpush1.msra.mxu0 0.0
        %1236 = vmatprep.subr.mxu0 0.0
        %1237 = vmatpush1.msra.mxu0 0.0
        %1238 = vmatprep.subr.mxu0 0.0
        %1239 = vmatpush1.msra.mxu0 0.0
        %1240 = vmatprep.subr.mxu0 0.0
        %1241 = vmatpush1.msra.mxu0 0.0
        %1242 = vmatprep.subr.mxu0 0.0
        %1243 = vmatpush1.msra.mxu0 0.0
        %1244 = vmatprep.subr.mxu0 0.0
        %1245 = vmatpush1.msra.mxu0 0.0
        %1246 = vmatprep.subr.mxu0 0.0
        %1247 = vmatpush1.msra.mxu0 0.0
        %1248 = vmatprep.subr.mxu0 0.0
        %1249 = vmatpush1.msra.mxu0 0.0
        %1250 = vmatprep.subr.mxu0 0.0
        %1251 = vmatpush1.msra.mxu0 0.0
        %1252 = vmatprep.subr.mxu0 0.0
        %1253 = vmatpush1.msra.mxu0 0.0
        %1254 = vmatprep.subr.mxu0 0.0
        %1255 = vmatpush1.msra.mxu0 0.0
        %1256 = vmatprep.subr.mxu0 0.0
        %1257 = vmatpush1.msra.mxu0 0.0
        %1258 = vmatprep.subr.mxu0 0.0
        %1259 = vmatpush1.msra.mxu0 0.0
        %1260 = vmatprep.subr.mxu0 0.0
        %1261 = vmatpush1.msra.mxu0 0.0
        %1262 = vmatprep.subr.mxu0 0.0
        %1263 = vmatpush1.msra.mxu0 0.0
        %1264 = vmatprep.subr.mxu0 0.0
        %1265 = vmatpush1.msra.mxu0 0.0
        %1266 = vmatprep.subr.mxu0 0.0
        %1267 = vmatpush1.msra.mxu0 0.0
        %1268 = vmatprep.subr.mxu0 0.0
        %1269 = vmatpush1.msra.mxu0 0.0
        %1270 = vmatprep.subr.mxu0 0.0
        %1271 = vmatpush1.msra.mxu0 0.0
        %1272 = vmatprep.subr.mxu0 0.0
        %1273 = vmatpush1.msra.mxu0 0.0
        %1274 = vmatprep.subr.mxu0 0.0
        %1275 = vmatpush1.msra.mxu0 0.0
        %1276 = vmatprep.subr.mxu0 0.0
        %1277 = vmatpush1.msra.mxu0 0.0
        %1278 = vmatprep.subr.mxu0 0.0
        %1279 = vmatpush1.msra.mxu0 0.0
        %1280 = vmatprep.subr.mxu0 0.0
        %1281 = vmatpush1.msra.mxu0 0.0
        %1282 = vmatprep.subr.mxu0 0.0
        %1283 = vmatpush1.msra.mxu0 0.0
        %1284 = vmatprep.subr.mxu0 0.0
        %1285 = vmatpush1.msra.mxu0 0.0
        %1286 = vmatprep.mubr.f32.mxu0 0.0
        %1287 = vmatmul.mubr.f32.gmra.mrb[0].mxu0 %v638
        %v1288 = vpop.f32.mrb[0].mxu0
        %v1289 = vadd.f32 %v1220, %v1288
        %v1290 = vpop.f32.mrb[0].mxu0
        %1291 = vdwg.mxu0
        %v1293 = vsel %vm872, %v1123, 0
        %v1296 = vsel %vm872, %v1206, 0
        %1298 = vmatprep.subr.mxu0 0.0
        %1299 = vmatpush1.xpose.msra.mxu0 %v1296
        %1300 = vmatprep.subr.mxu0 0.0
        %1301 = vmatpush1.xpose.msra.mxu0 0.0
        %1302 = vmatprep.subr.mxu0 0.0
        %1303 = vmatpush1.xpose.msra.mxu0 0.0
        %1304 = vmatprep.subr.mxu0 0.0
        %1305 = vmatpush1.xpose.msra.mxu0 0.0
        %1306 = vmatprep.subr.mxu0 0.0
        %1307 = vmatpush1.xpose.msra.mxu0 0.0
        %1308 = vmatprep.subr.mxu0 0.0
        %1309 = vmatpush1.xpose.msra.mxu0 0.0
        %1310 = vmatprep.subr.mxu0 0.0
        %1311 = vmatpush1.xpose.msra.mxu0 0.0
        %1312 = vmatprep.subr.mxu0 0.0
        %1313 = vmatpush1.xpose.msra.mxu0 0.0
        %1314 = vmatprep.subr.mxu0 0.0
        %1315 = vmatpush1.xpose.msra.mxu0 0.0
        %1316 = vmatprep.subr.mxu0 0.0
        %1317 = vmatpush1.xpose.msra.mxu0 0.0
        %1318 = vmatprep.subr.mxu0 0.0
        %1319 = vmatpush1.xpose.msra.mxu0 0.0
        %1320 = vmatprep.subr.mxu0 0.0
        %1321 = vmatpush1.xpose.msra.mxu0 0.0
        %1322 = vmatprep.subr.mxu0 0.0
        %1323 = vmatpush1.xpose.msra.mxu0 0.0
        %1324 = vmatprep.subr.mxu0 0.0
        %1325 = vmatpush1.xpose.msra.mxu0 0.0
        %1326 = vmatprep.subr.mxu0 0.0
        %1327 = vmatpush1.xpose.msra.mxu0 0.0
        %1328 = vmatprep.subr.mxu0 0.0
        %1329 = vmatpush1.xpose.msra.mxu0 0.0
        %1330 = vmatprep.subr.mxu0 0.0
        %1331 = vmatpush1.xpose.msra.mxu0 0.0
        %1332 = vmatprep.subr.mxu0 0.0
        %1333 = vmatpush1.xpose.msra.mxu0 0.0
        %1334 = vmatprep.subr.mxu0 0.0
        %1335 = vmatpush1.xpose.msra.mxu0 0.0
        %1336 = vmatprep.subr.mxu0 0.0
        %1337 = vmatpush1.xpose.msra.mxu0 0.0
        %1338 = vmatprep.subr.mxu0 0.0
        %1339 = vmatpush1.xpose.msra.mxu0 0.0
        %1340 = vmatprep.subr.mxu0 0.0
        %1341 = vmatpush1.xpose.msra.mxu0 0.0
        %1342 = vmatprep.subr.mxu0 0.0
        %1343 = vmatpush1.xpose.msra.mxu0 0.0
        %1344 = vmatprep.subr.mxu0 0.0
        %1345 = vmatpush1.xpose.msra.mxu0 0.0
        %1346 = vmatprep.subr.mxu0 0.0
        %1347 = vmatpush1.xpose.msra.mxu0 0.0
        %1348 = vmatprep.subr.mxu0 0.0
        %1349 = vmatpush1.xpose.msra.mxu0 0.0
        %1350 = vmatprep.subr.mxu0 0.0
        %1351 = vmatpush1.xpose.msra.mxu0 0.0
        %1352 = vmatprep.subr.mxu0 0.0
        %1353 = vmatpush1.xpose.msra.mxu0 0.0
        %1354 = vmatprep.subr.mxu0 0.0
        %1355 = vmatpush1.xpose.msra.mxu0 0.0
        %1356 = vmatprep.subr.mxu0 0.0
        %1357 = vmatpush1.xpose.msra.mxu0 0.0
        %1358 = vmatprep.subr.mxu0 0.0
        %1359 = vmatpush1.xpose.msra.mxu0 0.0
        %1360 = vmatprep.subr.mxu0 0.0
        %1361 = vmatpush1.xpose.msra.mxu0 0.0
        %1362 = vmatprep.mubr.f32.mxu0 0.0
        %1363 = vmatmul.mubr.f32.gmra.mrb[0].mxu0 %v1293
        %v1364 = vpop.f32.mrb[0].mxu0
        %v1365 = vadd.f32 0.0, %v1364
        %v1366 = vpop.f32.mrb[0].mxu0
        %1367 = vdwg.mxu0
        %v1368 = vmul.f32 %v1365, 0.35355338
        %v1369 = vsel %vm956, %v1368, -1e+09
        %v1370 = vsel %vm872, %v1369, -inf
        %1371 = vmax.xlane.f32.xlu0 %v1370
        %v1372 = vpop.xlane.xlu0 %1371
        %v1373 = vsub.f32 %v1369, %v1372
        %v1374 = vmul.f32 %v1373, 1.442695
        %v1375 = vpow.pop %v1374
        %v1376 = vsel %vm872, %v1375, 0.0
        %1377 = vadd.xlane.f32.xlu0 %v1376
        %v1378 = vpop.xlane.xlu0 %1377
        %v1379 = vrcp.pop %v1378
        %v1380 = vmul.f32 %v1375, %v1379
        %v1382 = vsel %vm872, %v1380, 0
        %1384 = vmatprep.subr.mxu0 0.0
        %1385 = vmatpush1.msra.mxu0 %v1289
        %1386 = vmatprep.subr.mxu0 0.0
        %1387 = vmatpush1.msra.mxu0 0.0
        %1388 = vmatprep.subr.mxu0 0.0
        %1389 = vmatpush1.msra.mxu0 0.0
        %1390 = vmatprep.subr.mxu0 0.0
        %1391 = vmatpush1.msra.mxu0 0.0
        %1392 = vmatprep.subr.mxu0 0.0
        %1393 = vmatpush1.msra.mxu0 0.0
        %1394 = vmatprep.subr.mxu0 0.0
        %1395 = vmatpush1.msra.mxu0 0.0
        %1396 = vmatprep.subr.mxu0 0.0
        %1397 = vmatpush1.msra.mxu0 0.0
        %1398 = vmatprep.subr.mxu0 0.0
        %1399 = vmatpush1.msra.mxu0 0.0
        %1400 = vmatprep.subr.mxu0 0.0
        %1401 = vmatpush1.msra.mxu0 0.0
        %1402 = vmatprep.subr.mxu0 0.0
        %1403 = vmatpush1.msra.mxu0 0.0
        %1404 = vmatprep.subr.mxu0 0.0
        %1405 = vmatpush1.msra.mxu0 0.0
        %1406 = vmatprep.subr.mxu0 0.0
        %1407 = vmatpush1.msra.mxu0 0.0
        %1408 = vmatprep.subr.mxu0 0.0
        %1409 = vmatpush1.msra.mxu0 0.0
        %1410 = vmatprep.subr.mxu0 0.0
        %1411 = vmatpush1.msra.mxu0 0.0
        %1412 = vmatprep.subr.mxu0 0.0
        %1413 = vmatpush1.msra.mxu0 0.0
        %1414 = vmatprep.subr.mxu0 0.0
        %1415 = vmatpush1.msra.mxu0 0.0
        %1416 = vmatprep.subr.mxu0 0.0
        %1417 = vmatpush1.msra.mxu0 0.0
        %1418 = vmatprep.subr.mxu0 0.0
        %1419 = vmatpush1.msra.mxu0 0.0
        %1420 = vmatprep.subr.mxu0 0.0
        %1421 = vmatpush1.msra.mxu0 0.0
        %1422 = vmatprep.subr.mxu0 0.0
        %1423 = vmatpush1.msra.mxu0 0.0
        %1424 = vmatprep.subr.mxu0 0.0
        %1425 = vmatpush1.msra.mxu0 0.0
        %1426 = vmatprep.subr.mxu0 0.0
        %1427 = vmatpush1.msra.mxu0 0.0
        %1428 = vmatprep.subr.mxu0 0.0
        %1429 = vmatpush1.msra.mxu0 0.0
        %1430 = vmatprep.subr.mxu0 0.0
        %1431 = vmatpush1.msra.mxu0 0.0
        %1432 = vmatprep.subr.mxu0 0.0
        %1433 = vmatpush1.msra.mxu0 0.0
        %1434 = vmatprep.subr.mxu0 0.0
        %1435 = vmatpush1.msra.mxu0 0.0
        %1436 = vmatprep.subr.mxu0 0.0
        %1437 = vmatpush1.msra.mxu0 0.0
        %1438 = vmatprep.subr.mxu0 0.0
        %1439 = vmatpush1.msra.mxu0 0.0
        %1440 = vmatprep.subr.mxu0 0.0
        %1441 = vmatpush1.msra.mxu0 0.0
        %1442 = vmatprep.subr.mxu0 0.0
        %1443 = vmatpush1.msra.mxu0 0.0
        %1444 = vmatprep.subr.mxu0 0.0
        %1445 = vmatpush1.msra.mxu0 0.0
        %1446 = vmatprep.subr.mxu0 0.0
        %1447 = vmatpush1.msra.mxu0 0.0
        %1448 = vmatprep.mubr.f32.mxu0 0.0
        %1449 = vmatmul.mubr.f32.gmra.mrb[0].mxu0 %v1382
        %v1450 = vpop.f32.mrb[0].mxu0
        %v1451 = vadd.f32 0.0, %v1450
        %v1452 = vpop.f32.mrb[0].mxu0
        %1453 = vdwg.mxu0
        %s1454 = scalar_lea.vmem %s10, 8
        %v1455 = vld [vmem:[%s1454] sm:$0xff]
        %v1457 = vsel %vm872, %v1451, 0
        %1459 = vmatprep.subr.mxu0 0.0
        %1460 = vmatpush1.msra.mxu0 %v1455
        %1461 = vmatprep.subr.mxu0 0.0
        %1462 = vmatpush1.msra.mxu0 0.0
        %1463 = vmatprep.subr.mxu0 0.0
        %1464 = vmatpush1.msra.mxu0 0.0
        %1465 = vmatprep.subr.mxu0 0.0
        %1466 = vmatpush1.msra.mxu0 0.0
        %1467 = vmatprep.subr.mxu0 0.0
        %1468 = vmatpush1.msra.mxu0 0.0
        %1469 = vmatprep.subr.mxu0 0.0
        %1470 = vmatpush1.msra.mxu0 0.0
        %1471 = vmatprep.subr.mxu0 0.0
        %1472 = vmatpush1.msra.mxu0 0.0
        %1473 = vmatprep.subr.mxu0 0.0
        %1474 = vmatpush1.msra.mxu0 0.0
        %1475 = vmatprep.subr.mxu0 0.0
        %1476 = vmatpush1.msra.mxu0 0.0
        %1477 = vmatprep.subr.mxu0 0.0
        %1478 = vmatpush1.msra.mxu0 0.0
        %1479 = vmatprep.subr.mxu0 0.0
        %1480 = vmatpush1.msra.mxu0 0.0
        %1481 = vmatprep.subr.mxu0 0.0
        %1482 = vmatpush1.msra.mxu0 0.0
        %1483 = vmatprep.subr.mxu0 0.0
        %1484 = vmatpush1.msra.mxu0 0.0
        %1485 = vmatprep.subr.mxu0 0.0
        %1486 = vmatpush1.msra.mxu0 0.0
        %1487 = vmatprep.subr.mxu0 0.0
        %1488 = vmatpush1.msra.mxu0 0.0
        %1489 = vmatprep.subr.mxu0 0.0
        %1490 = vmatpush1.msra.mxu0 0.0
        %1491 = vmatprep.subr.mxu0 0.0
        %1492 = vmatpush1.msra.mxu0 0.0
        %1493 = vmatprep.subr.mxu0 0.0
        %1494 = vmatpush1.msra.mxu0 0.0
        %1495 = vmatprep.subr.mxu0 0.0
        %1496 = vmatpush1.msra.mxu0 0.0
        %1497 = vmatprep.subr.mxu0 0.0
        %1498 = vmatpush1.msra.mxu0 0.0
        %1499 = vmatprep.subr.mxu0 0.0
        %1500 = vmatpush1.msra.mxu0 0.0
        %1501 = vmatprep.subr.mxu0 0.0
        %1502 = vmatpush1.msra.mxu0 0.0
        %1503 = vmatprep.subr.mxu0 0.0
        %1504 = vmatpush1.msra.mxu0 0.0
        %1505 = vmatprep.subr.mxu0 0.0
        %1506 = vmatpush1.msra.mxu0 0.0
        %1507 = vmatprep.subr.mxu0 0.0
        %1508 = vmatpush1.msra.mxu0 0.0
        %1509 = vmatprep.subr.mxu0 0.0
        %1510 = vmatpush1.msra.mxu0 0.0
        %1511 = vmatprep.subr.mxu0 0.0
        %1512 = vmatpush1.msra.mxu0 0.0
        %1513 = vmatprep.subr.mxu0 0.0
        %1514 = vmatpush1.msra.mxu0 0.0
        %1515 = vmatprep.subr.mxu0 0.0
        %1516 = vmatpush1.msra.mxu0 0.0
        %1517 = vmatprep.subr.mxu0 0.0
        %1518 = vmatpush1.msra.mxu0 0.0
        %1519 = vmatprep.subr.mxu0 0.0
        %1520 = vmatpush1.msra.mxu0 0.0
        %1521 = vmatprep.subr.mxu0 0.0
        %1522 = vmatpush1.msra.mxu0 0.0
        %1523 = vmatprep.mubr.f32.mxu0 0.0
        %1524 = vmatmul.mubr.f32.gmra.mrb[0].mxu0 %v1457
        %v1525 = vpop.f32.mrb[0].mxu0
        %v1526 = vadd.f32 0.0, %v1525
        %v1527 = vpop.f32.mrb[0].mxu0
        %1528 = vdwg.mxu0
        %v1530 = vsel %vm872, %v1039, 0
        %1532 = vmatprep.subr.mxu0 0.0
        %1533 = vmatpush1.msra.mxu0 %v1042
        %1534 = vmatprep.subr.mxu0 0.0
        %1535 = vmatpush1.msra.mxu0 0.0
        %1536 = vmatprep.subr.mxu0 0.0
        %1537 = vmatpush1.msra.mxu0 0.0
        %1538 = vmatprep.subr.mxu0 0.0
        %1539 = vmatpush1.msra.mxu0 0.0
        %1540 = vmatprep.subr.mxu0 0.0
        %1541 = vmatpush1.msra.mxu0 0.0
        %1542 = vmatprep.subr.mxu0 0.0
        %1543 = vmatpush1.msra.mxu0 0.0
        %1544 = vmatprep.subr.mxu0 0.0
        %1545 = vmatpush1.msra.mxu0 0.0
        %1546 = vmatprep.subr.mxu0 0.0
        %1547 = vmatpush1.msra.mxu0 0.0
        %1548 = vmatprep.subr.mxu0 0.0
        %1549 = vmatpush1.msra.mxu0 0.0
        %1550 = vmatprep.subr.mxu0 0.0
        %1551 = vmatpush1.msra.mxu0 0.0
        %1552 = vmatprep.subr.mxu0 0.0
        %1553 = vmatpush1.msra.mxu0 0.0
        %1554 = vmatprep.subr.mxu0 0.0
        %1555 = vmatpush1.msra.mxu0 0.0
        %1556 = vmatprep.subr.mxu0 0.0
        %1557 = vmatpush1.msra.mxu0 0.0
        %1558 = vmatprep.subr.mxu0 0.0
        %1559 = vmatpush1.msra.mxu0 0.0
        %1560 = vmatprep.subr.mxu0 0.0
        %1561 = vmatpush1.msra.mxu0 0.0
        %1562 = vmatprep.subr.mxu0 0.0
        %1563 = vmatpush1.msra.mxu0 0.0
        %1564 = vmatprep.subr.mxu0 0.0
        %1565 = vmatpush1.msra.mxu0 0.0
        %1566 = vmatprep.subr.mxu0 0.0
        %1567 = vmatpush1.msra.mxu0 0.0
        %1568 = vmatprep.subr.mxu0 0.0
        %1569 = vmatpush1.msra.mxu0 0.0
        %1570 = vmatprep.subr.mxu0 0.0
        %1571 = vmatpush1.msra.mxu0 0.0
        %1572 = vmatprep.subr.mxu0 0.0
        %1573 = vmatpush1.msra.mxu0 0.0
        %1574 = vmatprep.subr.mxu0 0.0
        %1575 = vmatpush1.msra.mxu0 0.0
        %1576 = vmatprep.subr.mxu0 0.0
        %1577 = vmatpush1.msra.mxu0 0.0
        %1578 = vmatprep.subr.mxu0 0.0
        %1579 = vmatpush1.msra.mxu0 0.0
        %1580 = vmatprep.subr.mxu0 0.0
        %1581 = vmatpush1.msra.mxu0 0.0
        %1582 = vmatprep.subr.mxu0 0.0
        %1583 = vmatpush1.msra.mxu0 0.0
        %1584 = vmatprep.subr.mxu0 0.0
        %1585 = vmatpush1.msra.mxu0 0.0
        %1586 = vmatprep.subr.mxu0 0.0
        %1587 = vmatpush1.msra.mxu0 0.0
        %1588 = vmatprep.subr.mxu0 0.0
        %1589 = vmatpush1.msra.mxu0 0.0
        %1590 = vmatprep.subr.mxu0 0.0
        %1591 = vmatpush1.msra.mxu0 0.0
        %1592 = vmatprep.subr.mxu0 0.0
        %1593 = vmatpush1.msra.mxu0 0.0
        %1594 = vmatprep.subr.mxu0 0.0
        %1595 = vmatpush1.msra.mxu0 0.0
        %1596 = vmatprep.mubr.f32.mxu0 0.0
        %1597 = vmatmul.mubr.f32.gmra.mrb[0].mxu0 %v1530
        %v1598 = vpop.f32.mrb[0].mxu0
        %v1599 = vadd.f32 %v1526, %v1598
        %v1600 = vpop.f32.mrb[0].mxu0
        %1601 = vdwg.mxu0
        %s1602 = scalar_lea.vmem %s4, 64
        %v1603 = vld [vmem:[%s1602] sm:$0xff]
        %v1604 = vld [vmem:[%s1602 + $0x8] sm:$0xff]
        %v1605 = vld [vmem:[%s1602 + $0x10] sm:$0xff]
        %v1606 = vld [vmem:[%s1602 + $0x18] sm:$0xff]
        %s1607 = scalar_lea.vmem %s5, 2
        %v1608 = vld [vmem:[%s1607] sm:$0x1]
        %v1610 = vlaneseq
        %v1611 = vshrl.u32 %v1610, 7
        %v1612 = vsub.s32 0, %v1611
        %v1613 = vrot.slane %v1608, %v1612
        %1615 = vmatprep.subr.mxu0 0.0
        %1616 = vmatpush1.msra.mxu0 %v1603
        %1617 = vmatprep.subr.mxu0 0.0
        %1618 = vmatpush1.msra.mxu0 %v1604
        %1619 = vmatprep.subr.mxu0 0.0
        %1620 = vmatpush1.msra.mxu0 %v1605
        %1621 = vmatprep.subr.mxu0 0.0
        %1622 = vmatpush1.msra.mxu0 %v1606
        %1623 = vmatprep.subr.mxu0 0.0
        %1624 = vmatpush1.msra.mxu0 0.0
        %1625 = vmatprep.subr.mxu0 0.0
        %1626 = vmatpush1.msra.mxu0 0.0
        %1627 = vmatprep.subr.mxu0 0.0
        %1628 = vmatpush1.msra.mxu0 0.0
        %1629 = vmatprep.subr.mxu0 0.0
        %1630 = vmatpush1.msra.mxu0 0.0
        %1631 = vmatprep.subr.mxu0 0.0
        %1632 = vmatpush1.msra.mxu0 0.0
        %1633 = vmatprep.subr.mxu0 0.0
        %1634 = vmatpush1.msra.mxu0 0.0
        %1635 = vmatprep.subr.mxu0 0.0
        %1636 = vmatpush1.msra.mxu0 0.0
        %1637 = vmatprep.subr.mxu0 0.0
        %1638 = vmatpush1.msra.mxu0 0.0
        %1639 = vmatprep.subr.mxu0 0.0
        %1640 = vmatpush1.msra.mxu0 0.0
        %1641 = vmatprep.subr.mxu0 0.0
        %1642 = vmatpush1.msra.mxu0 0.0
        %1643 = vmatprep.subr.mxu0 0.0
        %1644 = vmatpush1.msra.mxu0 0.0
        %1645 = vmatprep.subr.mxu0 0.0
        %1646 = vmatpush1.msra.mxu0 0.0
        %1647 = vmatprep.subr.mxu0 0.0
        %1648 = vmatpush1.msra.mxu0 0.0
        %1649 = vmatprep.subr.mxu0 0.0
        %1650 = vmatpush1.msra.mxu0 0.0
        %1651 = vmatprep.subr.mxu0 0.0
        %1652 = vmatpush1.msra.mxu0 0.0
        %1653 = vmatprep.subr.mxu0 0.0
        %1654 = vmatpush1.msra.mxu0 0.0
        %1655 = vmatprep.subr.mxu0 0.0
        %1656 = vmatpush1.msra.mxu0 0.0
        %1657 = vmatprep.subr.mxu0 0.0
        %1658 = vmatpush1.msra.mxu0 0.0
        %1659 = vmatprep.subr.mxu0 0.0
        %1660 = vmatpush1.msra.mxu0 0.0
        %1661 = vmatprep.subr.mxu0 0.0
        %1662 = vmatpush1.msra.mxu0 0.0
        %1663 = vmatprep.subr.mxu0 0.0
        %1664 = vmatpush1.msra.mxu0 0.0
        %1665 = vmatprep.subr.mxu0 0.0
        %1666 = vmatpush1.msra.mxu0 0.0
        %1667 = vmatprep.subr.mxu0 0.0
        %1668 = vmatpush1.msra.mxu0 0.0
        %1669 = vmatprep.subr.mxu0 0.0
        %1670 = vmatpush1.msra.mxu0 0.0
        %1671 = vmatprep.subr.mxu0 0.0
        %1672 = vmatpush1.msra.mxu0 0.0
        %1673 = vmatprep.subr.mxu0 0.0
        %1674 = vmatpush1.msra.mxu0 0.0
        %1675 = vmatprep.subr.mxu0 0.0
        %1676 = vmatpush1.msra.mxu0 0.0
        %1677 = vmatprep.subr.mxu0 0.0
        %1678 = vmatpush1.msra.mxu0 0.0
        %1679 = vmatprep.mubr.f32.mxu0 0.0
        %1680 = vmatmul.mubr.f32.gmra.mrb[0].mxu0 %v638
        %v1681 = vpop.f32.mrb[0].mxu0
        %v1682 = vadd.f32 %v1613, %v1681
        %v1683 = vpop.f32.mrb[0].mxu0
        %1684 = vdwg.mxu0
        %s1685 = scalar_lea.vmem %s6, 64
        %v1686 = vld [vmem:[%s1685] sm:$0xff]
        %v1687 = vld [vmem:[%s1685 + $0x8] sm:$0xff]
        %v1688 = vld [vmem:[%s1685 + $0x10] sm:$0xff]
        %v1689 = vld [vmem:[%s1685 + $0x18] sm:$0xff]
        %s1690 = scalar_lea.vmem %s7, 2
        %v1691 = vld [vmem:[%s1690] sm:$0x1]
        %v1693 = vlaneseq
        %v1694 = vshrl.u32 %v1693, 7
        %v1695 = vsub.s32 0, %v1694
        %v1696 = vrot.slane %v1691, %v1695
        %1698 = vmatprep.subr.mxu0 0.0
        %1699 = vmatpush1.msra.mxu0 %v1686
        %1700 = vmatprep.subr.mxu0 0.0
        %1701 = vmatpush1.msra.mxu0 %v1687
        %1702 = vmatprep.subr.mxu0 0.0
        %1703 = vmatpush1.msra.mxu0 %v1688
        %1704 = vmatprep.subr.mxu0 0.0
        %1705 = vmatpush1.msra.mxu0 %v1689
        %1706 = vmatprep.subr.mxu0 0.0
        %1707 = vmatpush1.msra.mxu0 0.0
        %1708 = vmatprep.subr.mxu0 0.0
        %1709 = vmatpush1.msra.mxu0 0.0
        %1710 = vmatprep.subr.mxu0 0.0
        %1711 = vmatpush1.msra.mxu0 0.0
        %1712 = vmatprep.subr.mxu0 0.0
        %1713 = vmatpush1.msra.mxu0 0.0
        %1714 = vmatprep.subr.mxu0 0.0
        %1715 = vmatpush1.msra.mxu0 0.0
        %1716 = vmatprep.subr.mxu0 0.0
        %1717 = vmatpush1.msra.mxu0 0.0
        %1718 = vmatprep.subr.mxu0 0.0
        %1719 = vmatpush1.msra.mxu0 0.0
        %1720 = vmatprep.subr.mxu0 0.0
        %1721 = vmatpush1.msra.mxu0 0.0
        %1722 = vmatprep.subr.mxu0 0.0
        %1723 = vmatpush1.msra.mxu0 0.0
        %1724 = vmatprep.subr.mxu0 0.0
        %1725 = vmatpush1.msra.mxu0 0.0
        %1726 = vmatprep.subr.mxu0 0.0
        %1727 = vmatpush1.msra.mxu0 0.0
        %1728 = vmatprep.subr.mxu0 0.0
        %1729 = vmatpush1.msra.mxu0 0.0
        %1730 = vmatprep.subr.mxu0 0.0
        %1731 = vmatpush1.msra.mxu0 0.0
        %1732 = vmatprep.subr.mxu0 0.0
        %1733 = vmatpush1.msra.mxu0 0.0
        %1734 = vmatprep.subr.mxu0 0.0
        %1735 = vmatpush1.msra.mxu0 0.0
        %1736 = vmatprep.subr.mxu0 0.0
        %1737 = vmatpush1.msra.mxu0 0.0
        %1738 = vmatprep.subr.mxu0 0.0
        %1739 = vmatpush1.msra.mxu0 0.0
        %1740 = vmatprep.subr.mxu0 0.0
        %1741 = vmatpush1.msra.mxu0 0.0
        %1742 = vmatprep.subr.mxu0 0.0
        %1743 = vmatpush1.msra.mxu0 0.0
        %1744 = vmatprep.subr.mxu0 0.0
        %1745 = vmatpush1.msra.mxu0 0.0
        %1746 = vmatprep.subr.mxu0 0.0
        %1747 = vmatpush1.msra.mxu0 0.0
        %1748 = vmatprep.subr.mxu0 0.0
        %1749 = vmatpush1.msra.mxu0 0.0
        %1750 = vmatprep.subr.mxu0 0.0
        %1751 = vmatpush1.msra.mxu0 0.0
        %1752 = vmatprep.subr.mxu0 0.0
        %1753 = vmatpush1.msra.mxu0 0.0
        %1754 = vmatprep.subr.mxu0 0.0
        %1755 = vmatpush1.msra.mxu0 0.0
        %1756 = vmatprep.subr.mxu0 0.0
        %1757 = vmatpush1.msra.mxu0 0.0
        %1758 = vmatprep.subr.mxu0 0.0
        %1759 = vmatpush1.msra.mxu0 0.0
        %1760 = vmatprep.subr.mxu0 0.0
        %1761 = vmatpush1.msra.mxu0 0.0
        %1762 = vmatprep.mubr.f32.mxu0 0.0
        %1763 = vmatmul.mubr.f32.gmra.mrb[0].mxu0 %v638
        %v1764 = vpop.f32.mrb[0].mxu0
        %v1765 = vadd.f32 %v1696, %v1764
        %v1766 = vpop.f32.mrb[0].mxu0
        %1767 = vdwg.mxu0
        %s1768 = scalar_lea.vmem %s8, 64
        %v1769 = vld [vmem:[%s1768] sm:$0xff]
        %v1770 = vld [vmem:[%s1768 + $0x8] sm:$0xff]
        %v1771 = vld [vmem:[%s1768 + $0x10] sm:$0xff]
        %v1772 = vld [vmem:[%s1768 + $0x18] sm:$0xff]
        %s1773 = scalar_lea.vmem %s9, 2
        %v1774 = vld [vmem:[%s1773] sm:$0x1]
        %v1776 = vlaneseq
        %v1777 = vshrl.u32 %v1776, 7
        %v1778 = vsub.s32 0, %v1777
        %v1779 = vrot.slane %v1774, %v1778
        %1781 = vmatprep.subr.mxu0 0.0
        %1782 = vmatpush1.msra.mxu0 %v1769
        %1783 = vmatprep.subr.mxu0 0.0
        %1784 = vmatpush1.msra.mxu0 %v1770
        %1785 = vmatprep.subr.mxu0 0.0
        %1786 = vmatpush1.msra.mxu0 %v1771
        %1787 = vmatprep.subr.mxu0 0.0
        %1788 = vmatpush1.msra.mxu0 %v1772
        %1789 = vmatprep.subr.mxu0 0.0
        %1790 = vmatpush1.msra.mxu0 0.0
        %1791 = vmatprep.subr.mxu0 0.0
        %1792 = vmatpush1.msra.mxu0 0.0
        %1793 = vmatprep.subr.mxu0 0.0
        %1794 = vmatpush1.msra.mxu0 0.0
        %1795 = vmatprep.subr.mxu0 0.0
        %1796 = vmatpush1.msra.mxu0 0.0
        %1797 = vmatprep.subr.mxu0 0.0
        %1798 = vmatpush1.msra.mxu0 0.0
        %1799 = vmatprep.subr.mxu0 0.0
        %1800 = vmatpush1.msra.mxu0 0.0
        %1801 = vmatprep.subr.mxu0 0.0
        %1802 = vmatpush1.msra.mxu0 0.0
        %1803 = vmatprep.subr.mxu0 0.0
        %1804 = vmatpush1.msra.mxu0 0.0
        %1805 = vmatprep.subr.mxu0 0.0
        %1806 = vmatpush1.msra.mxu0 0.0
        %1807 = vmatprep.subr.mxu0 0.0
        %1808 = vmatpush1.msra.mxu0 0.0
        %1809 = vmatprep.subr.mxu0 0.0
        %1810 = vmatpush1.msra.mxu0 0.0
        %1811 = vmatprep.subr.mxu0 0.0
        %1812 = vmatpush1.msra.mxu0 0.0
        %1813 = vmatprep.subr.mxu0 0.0
        %1814 = vmatpush1.msra.mxu0 0.0
        %1815 = vmatprep.subr.mxu0 0.0
        %1816 = vmatpush1.msra.mxu0 0.0
        %1817 = vmatprep.subr.mxu0 0.0
        %1818 = vmatpush1.msra.mxu0 0.0
        %1819 = vmatprep.subr.mxu0 0.0
        %1820 = vmatpush1.msra.mxu0 0.0
        %1821 = vmatprep.subr.mxu0 0.0
        %1822 = vmatpush1.msra.mxu0 0.0
        %1823 = vmatprep.subr.mxu0 0.0
        %1824 = vmatpush1.msra.mxu0 0.0
        %1825 = vmatprep.subr.mxu0 0.0
        %1826 = vmatpush1.msra.mxu0 0.0
        %1827 = vmatprep.subr.mxu0 0.0
        %1828 = vmatpush1.msra.mxu0 0.0
        %1829 = vmatprep.subr.mxu0 0.0
        %1830 = vmatpush1.msra.mxu0 0.0
        %1831 = vmatprep.subr.mxu0 0.0
        %1832 = vmatpush1.msra.mxu0 0.0
        %1833 = vmatprep.subr.mxu0 0.0
        %1834 = vmatpush1.msra.mxu0 0.0
        %1835 = vmatprep.subr.mxu0 0.0
        %1836 = vmatpush1.msra.mxu0 0.0
        %1837 = vmatprep.subr.mxu0 0.0
        %1838 = vmatpush1.msra.mxu0 0.0
        %1839 = vmatprep.subr.mxu0 0.0
        %1840 = vmatpush1.msra.mxu0 0.0
        %1841 = vmatprep.subr.mxu0 0.0
        %1842 = vmatpush1.msra.mxu0 0.0
        %1843 = vmatprep.subr.mxu0 0.0
        %1844 = vmatpush1.msra.mxu0 0.0
        %1845 = vmatprep.mubr.f32.mxu0 0.0
        %1846 = vmatmul.mubr.f32.gmra.mrb[0].mxu0 %v638
        %v1847 = vpop.f32.mrb[0].mxu0
        %v1848 = vadd.f32 %v1779, %v1847
        %v1849 = vpop.f32.mrb[0].mxu0
        %1850 = vdwg.mxu0
        %v1852 = vsel %vm872, %v1682, 0
        %v1855 = vsel %vm872, %v1765, 0
        %1857 = vmatprep.subr.mxu0 0.0
        %1858 = vmatpush1.xpose.msra.mxu0 %v1855
        %1859 = vmatprep.subr.mxu0 0.0
        %1860 = vmatpush1.xpose.msra.mxu0 0.0
        %1861 = vmatprep.subr.mxu0 0.0
        %1862 = vmatpush1.xpose.msra.mxu0 0.0
        %1863 = vmatprep.subr.mxu0 0.0
        %1864 = vmatpush1.xpose.msra.mxu0 0.0
        %1865 = vmatprep.subr.mxu0 0.0
        %1866 = vmatpush1.xpose.msra.mxu0 0.0
        %1867 = vmatprep.subr.mxu0 0.0
        %1868 = vmatpush1.xpose.msra.mxu0 0.0
        %1869 = vmatprep.subr.mxu0 0.0
        %1870 = vmatpush1.xpose.msra.mxu0 0.0
        %1871 = vmatprep.subr.mxu0 0.0
        %1872 = vmatpush1.xpose.msra.mxu0 0.0
        %1873 = vmatprep.subr.mxu0 0.0
        %1874 = vmatpush1.xpose.msra.mxu0 0.0
        %1875 = vmatprep.subr.mxu0 0.0
        %1876 = vmatpush1.xpose.msra.mxu0 0.0
        %1877 = vmatprep.subr.mxu0 0.0
        %1878 = vmatpush1.xpose.msra.mxu0 0.0
        %1879 = vmatprep.subr.mxu0 0.0
        %1880 = vmatpush1.xpose.msra.mxu0 0.0
        %1881 = vmatprep.subr.mxu0 0.0
        %1882 = vmatpush1.xpose.msra.mxu0 0.0
        %1883 = vmatprep.subr.mxu0 0.0
        %1884 = vmatpush1.xpose.msra.mxu0 0.0
        %1885 = vmatprep.subr.mxu0 0.0
        %1886 = vmatpush1.xpose.msra.mxu0 0.0
        %1887 = vmatprep.subr.mxu0 0.0
        %1888 = vmatpush1.xpose.msra.mxu0 0.0
        %1889 = vmatprep.subr.mxu0 0.0
        %1890 = vmatpush1.xpose.msra.mxu0 0.0
        %1891 = vmatprep.subr.mxu0 0.0
        %1892 = vmatpush1.xpose.msra.mxu0 0.0
        %1893 = vmatprep.subr.mxu0 0.0
        %1894 = vmatpush1.xpose.msra.mxu0 0.0
        %1895 = vmatprep.subr.mxu0 0.0
        %1896 = vmatpush1.xpose.msra.mxu0 0.0
        %1897 = vmatprep.subr.mxu0 0.0
        %1898 = vmatpush1.xpose.msra.mxu0 0.0
        %1899 = vmatprep.subr.mxu0 0.0
        %1900 = vmatpush1.xpose.msra.mxu0 0.0
        %1901 = vmatprep.subr.mxu0 0.0
        %1902 = vmatpush1.xpose.msra.mxu0 0.0
        %1903 = vmatprep.subr.mxu0 0.0
        %1904 = vmatpush1.xpose.msra.mxu0 0.0
        %1905 = vmatprep.subr.mxu0 0.0
        %1906 = vmatpush1.xpose.msra.mxu0 0.0
        %1907 = vmatprep.subr.mxu0 0.0
        %1908 = vmatpush1.xpose.msra.mxu0 0.0
        %1909 = vmatprep.subr.mxu0 0.0
        %1910 = vmatpush1.xpose.msra.mxu0 0.0
        %1911 = vmatprep.subr.mxu0 0.0
        %1912 = vmatpush1.xpose.msra.mxu0 0.0
        %1913 = vmatprep.subr.mxu0 0.0
        %1914 = vmatpush1.xpose.msra.mxu0 0.0
        %1915 = vmatprep.subr.mxu0 0.0
        %1916 = vmatpush1.xpose.msra.mxu0 0.0
        %1917 = vmatprep.subr.mxu0 0.0
        %1918 = vmatpush1.xpose.msra.mxu0 0.0
        %1919 = vmatprep.subr.mxu0 0.0
        %1920 = vmatpush1.xpose.msra.mxu0 0.0
        %1921 = vmatprep.mubr.f32.mxu0 0.0
        %1922 = vmatmul.mubr.f32.gmra.mrb[0].mxu0 %v1852
        %v1923 = vpop.f32.mrb[0].mxu0
        %v1924 = vadd.f32 0.0, %v1923
        %v1925 = vpop.f32.mrb[0].mxu0
        %1926 = vdwg.mxu0
        %v1927 = vmul.f32 %v1924, 0.35355338
        %v1928 = vsel %vm956, %v1927, -1e+09
        %v1929 = vsel %vm872, %v1928, -inf
        %1930 = vmax.xlane.f32.xlu0 %v1929
        %v1931 = vpop.xlane.xlu0 %1930
        %v1932 = vsub.f32 %v1928, %v1931
        %v1933 = vmul.f32 %v1932, 1.442695
        %v1934 = vpow.pop %v1933
        %v1935 = vsel %vm872, %v1934, 0.0
        %1936 = vadd.xlane.f32.xlu0 %v1935
        %v1937 = vpop.xlane.xlu0 %1936
        %v1938 = vrcp.pop %v1937
        %v1939 = vmul.f32 %v1934, %v1938
        %v1941 = vsel %vm872, %v1939, 0
        %1943 = vmatprep.subr.mxu0 0.0
        %1944 = vmatpush1.msra.mxu0 %v1848
        %1945 = vmatprep.subr.mxu0 0.0
        %1946 = vmatpush1.msra.mxu0 0.0
        %1947 = vmatprep.subr.mxu0 0.0
        %1948 = vmatpush1.msra.mxu0 0.0
        %1949 = vmatprep.subr.mxu0 0.0
        %1950 = vmatpush1.msra.mxu0 0.0
        %1951 = vmatprep.subr.mxu0 0.0
        %1952 = vmatpush1.msra.mxu0 0.0
        %1953 = vmatprep.subr.mxu0 0.0
        %1954 = vmatpush1.msra.mxu0 0.0
        %1955 = vmatprep.subr.mxu0 0.0
        %1956 = vmatpush1.msra.mxu0 0.0
        %1957 = vmatprep.subr.mxu0 0.0
        %1958 = vmatpush1.msra.mxu0 0.0
        %1959 = vmatprep.subr.mxu0 0.0
        %1960 = vmatpush1.msra.mxu0 0.0
        %1961 = vmatprep.subr.mxu0 0.0
        %1962 = vmatpush1.msra.mxu0 0.0
        %1963 = vmatprep.subr.mxu0 0.0
        %1964 = vmatpush1.msra.mxu0 0.0
        %1965 = vmatprep.subr.mxu0 0.0
        %1966 = vmatpush1.msra.mxu0 0.0
        %1967 = vmatprep.subr.mxu0 0.0
        %1968 = vmatpush1.msra.mxu0 0.0
        %1969 = vmatprep.subr.mxu0 0.0
        %1970 = vmatpush1.msra.mxu0 0.0
        %1971 = vmatprep.subr.mxu0 0.0
        %1972 = vmatpush1.msra.mxu0 0.0
        %1973 = vmatprep.subr.mxu0 0.0
        %1974 = vmatpush1.msra.mxu0 0.0
        %1975 = vmatprep.subr.mxu0 0.0
        %1976 = vmatpush1.msra.mxu0 0.0
        %1977 = vmatprep.subr.mxu0 0.0
        %1978 = vmatpush1.msra.mxu0 0.0
        %1979 = vmatprep.subr.mxu0 0.0
        %1980 = vmatpush1.msra.mxu0 0.0
        %1981 = vmatprep.subr.mxu0 0.0
        %1982 = vmatpush1.msra.mxu0 0.0
        %1983 = vmatprep.subr.mxu0 0.0
        %1984 = vmatpush1.msra.mxu0 0.0
        %1985 = vmatprep.subr.mxu0 0.0
        %1986 = vmatpush1.msra.mxu0 0.0
        %1987 = vmatprep.subr.mxu0 0.0
        %1988 = vmatpush1.msra.mxu0 0.0
        %1989 = vmatprep.subr.mxu0 0.0
        %1990 = vmatpush1.msra.mxu0 0.0
        %1991 = vmatprep.subr.mxu0 0.0
        %1992 = vmatpush1.msra.mxu0 0.0
        %1993 = vmatprep.subr.mxu0 0.0
        %1994 = vmatpush1.msra.mxu0 0.0
        %1995 = vmatprep.subr.mxu0 0.0
        %1996 = vmatpush1.msra.mxu0 0.0
        %1997 = vmatprep.subr.mxu0 0.0
        %1998 = vmatpush1.msra.mxu0 0.0
        %1999 = vmatprep.subr.mxu0 0.0
        %2000 = vmatpush1.msra.mxu0 0.0
        %2001 = vmatprep.subr.mxu0 0.0
        %2002 = vmatpush1.msra.mxu0 0.0
        %2003 = vmatprep.subr.mxu0 0.0
        %2004 = vmatpush1.msra.mxu0 0.0
        %2005 = vmatprep.subr.mxu0 0.0
        %2006 = vmatpush1.msra.mxu0 0.0
        %2007 = vmatprep.mubr.f32.mxu0 0.0
        %2008 = vmatmul.mubr.f32.gmra.mrb[0].mxu0 %v1941
        %v2009 = vpop.f32.mrb[0].mxu0
        %v2010 = vadd.f32 0.0, %v2009
        %v2011 = vpop.f32.mrb[0].mxu0
        %2012 = vdwg.mxu0
        %s2013 = scalar_lea.vmem %s10, 16
        %v2014 = vld [vmem:[%s2013] sm:$0xff]
        %v2016 = vsel %vm872, %v2010, 0
        %2018 = vmatprep.subr.mxu0 0.0
        %2019 = vmatpush1.msra.mxu0 %v2014
        %2020 = vmatprep.subr.mxu0 0.0
        %2021 = vmatpush1.msra.mxu0 0.0
        %2022 = vmatprep.subr.mxu0 0.0
        %2023 = vmatpush1.msra.mxu0 0.0
        %2024 = vmatprep.subr.mxu0 0.0
        %2025 = vmatpush1.msra.mxu0 0.0
        %2026 = vmatprep.subr.mxu0 0.0
        %2027 = vmatpush1.msra.mxu0 0.0
        %2028 = vmatprep.subr.mxu0 0.0
        %2029 = vmatpush1.msra.mxu0 0.0
        %2030 = vmatprep.subr.mxu0 0.0
        %2031 = vmatpush1.msra.mxu0 0.0
        %2032 = vmatprep.subr.mxu0 0.0
        %2033 = vmatpush1.msra.mxu0 0.0
        %2034 = vmatprep.subr.mxu0 0.0
        %2035 = vmatpush1.msra.mxu0 0.0
        %2036 = vmatprep.subr.mxu0 0.0
        %2037 = vmatpush1.msra.mxu0 0.0
        %2038 = vmatprep.subr.mxu0 0.0
        %2039 = vmatpush1.msra.mxu0 0.0
        %2040 = vmatprep.subr.mxu0 0.0
        %2041 = vmatpush1.msra.mxu0 0.0
        %2042 = vmatprep.subr.mxu0 0.0
        %2043 = vmatpush1.msra.mxu0 0.0
        %2044 = vmatprep.subr.mxu0 0.0
        %2045 = vmatpush1.msra.mxu0 0.0
        %2046 = vmatprep.subr.mxu0 0.0
        %2047 = vmatpush1.msra.mxu0 0.0
        %2048 = vmatprep.subr.mxu0 0.0
        %2049 = vmatpush1.msra.mxu0 0.0
        %2050 = vmatprep.subr.mxu0 0.0
        %2051 = vmatpush1.msra.mxu0 0.0
        %2052 = vmatprep.subr.mxu0 0.0
        %2053 = vmatpush1.msra.mxu0 0.0
        %2054 = vmatprep.subr.mxu0 0.0
        %2055 = vmatpush1.msra.mxu0 0.0
        %2056 = vmatprep.subr.mxu0 0.0
        %2057 = vmatpush1.msra.mxu0 0.0
        %2058 = vmatprep.subr.mxu0 0.0
        %2059 = vmatpush1.msra.mxu0 0.0
        %2060 = vmatprep.subr.mxu0 0.0
        %2061 = vmatpush1.msra.mxu0 0.0
        %2062 = vmatprep.subr.mxu0 0.0
        %2063 = vmatpush1.msra.mxu0 0.0
        %2064 = vmatprep.subr.mxu0 0.0
        %2065 = vmatpush1.msra.mxu0 0.0
        %2066 = vmatprep.subr.mxu0 0.0
        %2067 = vmatpush1.msra.mxu0 0.0
        %2068 = vmatprep.subr.mxu0 0.0
        %2069 = vmatpush1.msra.mxu0 0.0
        %2070 = vmatprep.subr.mxu0 0.0
        %2071 = vmatpush1.msra.mxu0 0.0
        %2072 = vmatprep.subr.mxu0 0.0
        %2073 = vmatpush1.msra.mxu0 0.0
        %2074 = vmatprep.subr.mxu0 0.0
        %2075 = vmatpush1.msra.mxu0 0.0
        %2076 = vmatprep.subr.mxu0 0.0
        %2077 = vmatpush1.msra.mxu0 0.0
        %2078 = vmatprep.subr.mxu0 0.0
        %2079 = vmatpush1.msra.mxu0 0.0
        %2080 = vmatprep.subr.mxu0 0.0
        %2081 = vmatpush1.msra.mxu0 0.0
        %2082 = vmatprep.mubr.f32.mxu0 0.0
        %2083 = vmatmul.mubr.f32.gmra.mrb[0].mxu0 %v2016
        %v2084 = vpop.f32.mrb[0].mxu0
        %v2085 = vadd.f32 0.0, %v2084
        %v2086 = vpop.f32.mrb[0].mxu0
        %2087 = vdwg.mxu0
        %v2088 = vadd.f32 %v1599, %v2085
        %s2089 = scalar_lea.vmem %s4, 96
        %v2090 = vld [vmem:[%s2089] sm:$0xff]
        %v2091 = vld [vmem:[%s2089 + $0x8] sm:$0xff]
        %v2092 = vld [vmem:[%s2089 + $0x10] sm:$0xff]
        %v2093 = vld [vmem:[%s2089 + $0x18] sm:$0xff]
        %s2094 = scalar_lea.vmem %s5, 3
        %v2095 = vld [vmem:[%s2094] sm:$0x1]
        %v2097 = vlaneseq
        %v2098 = vshrl.u32 %v2097, 7
        %v2099 = vsub.s32 0, %v2098
        %v2100 = vrot.slane %v2095, %v2099
        %2102 = vmatprep.subr.mxu0 0.0
        %2103 = vmatpush1.msra.mxu0 %v2090
        %2104 = vmatprep.subr.mxu0 0.0
        %2105 = vmatpush1.msra.mxu0 %v2091
        %2106 = vmatprep.subr.mxu0 0.0
        %2107 = vmatpush1.msra.mxu0 %v2092
        %2108 = vmatprep.subr.mxu0 0.0
        %2109 = vmatpush1.msra.mxu0 %v2093
        %2110 = vmatprep.subr.mxu0 0.0
        %2111 = vmatpush1.msra.mxu0 0.0
        %2112 = vmatprep.subr.mxu0 0.0
        %2113 = vmatpush1.msra.mxu0 0.0
        %2114 = vmatprep.subr.mxu0 0.0
        %2115 = vmatpush1.msra.mxu0 0.0
        %2116 = vmatprep.subr.mxu0 0.0
        %2117 = vmatpush1.msra.mxu0 0.0
        %2118 = vmatprep.subr.mxu0 0.0
        %2119 = vmatpush1.msra.mxu0 0.0
        %2120 = vmatprep.subr.mxu0 0.0
        %2121 = vmatpush1.msra.mxu0 0.0
        %2122 = vmatprep.subr.mxu0 0.0
        %2123 = vmatpush1.msra.mxu0 0.0
        %2124 = vmatprep.subr.mxu0 0.0
        %2125 = vmatpush1.msra.mxu0 0.0
        %2126 = vmatprep.subr.mxu0 0.0
        %2127 = vmatpush1.msra.mxu0 0.0
        %2128 = vmatprep.subr.mxu0 0.0
        %2129 = vmatpush1.msra.mxu0 0.0
        %2130 = vmatprep.subr.mxu0 0.0
        %2131 = vmatpush1.msra.mxu0 0.0
        %2132 = vmatprep.subr.mxu0 0.0
        %2133 = vmatpush1.msra.mxu0 0.0
        %2134 = vmatprep.subr.mxu0 0.0
        %2135 = vmatpush1.msra.mxu0 0.0
        %2136 = vmatprep.subr.mxu0 0.0
        %2137 = vmatpush1.msra.mxu0 0.0
        %2138 = vmatprep.subr.mxu0 0.0
        %2139 = vmatpush1.msra.mxu0 0.0
        %2140 = vmatprep.subr.mxu0 0.0
        %2141 = vmatpush1.msra.mxu0 0.0
        %2142 = vmatprep.subr.mxu0 0.0
        %2143 = vmatpush1.msra.mxu0 0.0
        %2144 = vmatprep.subr.mxu0 0.0
        %2145 = vmatpush1.msra.mxu0 0.0
        %2146 = vmatprep.subr.mxu0 0.0
        %2147 = vmatpush1.msra.mxu0 0.0
        %2148 = vmatprep.subr.mxu0 0.0
        %2149 = vmatpush1.msra.mxu0 0.0
        %2150 = vmatprep.subr.mxu0 0.0
        %2151 = vmatpush1.msra.mxu0 0.0
        %2152 = vmatprep.subr.mxu0 0.0
        %2153 = vmatpush1.msra.mxu0 0.0
        %2154 = vmatprep.subr.mxu0 0.0
        %2155 = vmatpush1.msra.mxu0 0.0
        %2156 = vmatprep.subr.mxu0 0.0
        %2157 = vmatpush1.msra.mxu0 0.0
        %2158 = vmatprep.subr.mxu0 0.0
        %2159 = vmatpush1.msra.mxu0 0.0
        %2160 = vmatprep.subr.mxu0 0.0
        %2161 = vmatpush1.msra.mxu0 0.0
        %2162 = vmatprep.subr.mxu0 0.0
        %2163 = vmatpush1.msra.mxu0 0.0
        %2164 = vmatprep.subr.mxu0 0.0
        %2165 = vmatpush1.msra.mxu0 0.0
        %2166 = vmatprep.mubr.f32.mxu0 0.0
        %2167 = vmatmul.mubr.f32.gmra.mrb[0].mxu0 %v638
        %v2168 = vpop.f32.mrb[0].mxu0
        %v2169 = vadd.f32 %v2100, %v2168
        %v2170 = vpop.f32.mrb[0].mxu0
        %2171 = vdwg.mxu0
        %s2172 = scalar_lea.vmem %s6, 96
        %v2173 = vld [vmem:[%s2172] sm:$0xff]
        %v2174 = vld [vmem:[%s2172 + $0x8] sm:$0xff]
        %v2175 = vld [vmem:[%s2172 + $0x10] sm:$0xff]
        %v2176 = vld [vmem:[%s2172 + $0x18] sm:$0xff]
        %s2177 = scalar_lea.vmem %s7, 3
        %v2178 = vld [vmem:[%s2177] sm:$0x1]
        %v2180 = vlaneseq
        %v2181 = vshrl.u32 %v2180, 7
        %v2182 = vsub.s32 0, %v2181
        %v2183 = vrot.slane %v2178, %v2182
        %2185 = vmatprep.subr.mxu0 0.0
        %2186 = vmatpush1.msra.mxu0 %v2173
        %2187 = vmatprep.subr.mxu0 0.0
        %2188 = vmatpush1.msra.mxu0 %v2174
        %2189 = vmatprep.subr.mxu0 0.0
        %2190 = vmatpush1.msra.mxu0 %v2175
        %2191 = vmatprep.subr.mxu0 0.0
        %2192 = vmatpush1.msra.mxu0 %v2176
        %2193 = vmatprep.subr.mxu0 0.0
        %2194 = vmatpush1.msra.mxu0 0.0
        %2195 = vmatprep.subr.mxu0 0.0
        %2196 = vmatpush1.msra.mxu0 0.0
        %2197 = vmatprep.subr.mxu0 0.0
        %2198 = vmatpush1.msra.mxu0 0.0
        %2199 = vmatprep.subr.mxu0 0.0
        %2200 = vmatpush1.msra.mxu0 0.0
        %2201 = vmatprep.subr.mxu0 0.0
        %2202 = vmatpush1.msra.mxu0 0.0
        %2203 = vmatprep.subr.mxu0 0.0
        %2204 = vmatpush1.msra.mxu0 0.0
        %2205 = vmatprep.subr.mxu0 0.0
        %2206 = vmatpush1.msra.mxu0 0.0
        %2207 = vmatprep.subr.mxu0 0.0
        %2208 = vmatpush1.msra.mxu0 0.0
        %2209 = vmatprep.subr.mxu0 0.0
        %2210 = vmatpush1.msra.mxu0 0.0
        %2211 = vmatprep.subr.mxu0 0.0
        %2212 = vmatpush1.msra.mxu0 0.0
        %2213 = vmatprep.subr.mxu0 0.0
        %2214 = vmatpush1.msra.mxu0 0.0
        %2215 = vmatprep.subr.mxu0 0.0
        %2216 = vmatpush1.msra.mxu0 0.0
        %2217 = vmatprep.subr.mxu0 0.0
        %2218 = vmatpush1.msra.mxu0 0.0
        %2219 = vmatprep.subr.mxu0 0.0
        %2220 = vmatpush1.msra.mxu0 0.0
        %2221 = vmatprep.subr.mxu0 0.0
        %2222 = vmatpush1.msra.mxu0 0.0
        %2223 = vmatprep.subr.mxu0 0.0
        %2224 = vmatpush1.msra.mxu0 0.0
        %2225 = vmatprep.subr.mxu0 0.0
        %2226 = vmatpush1.msra.mxu0 0.0
        %2227 = vmatprep.subr.mxu0 0.0
        %2228 = vmatpush1.msra.mxu0 0.0
        %2229 = vmatprep.subr.mxu0 0.0
        %2230 = vmatpush1.msra.mxu0 0.0
        %2231 = vmatprep.subr.mxu0 0.0
        %2232 = vmatpush1.msra.mxu0 0.0
        %2233 = vmatprep.subr.mxu0 0.0
        %2234 = vmatpush1.msra.mxu0 0.0
        %2235 = vmatprep.subr.mxu0 0.0
        %2236 = vmatpush1.msra.mxu0 0.0
        %2237 = vmatprep.subr.mxu0 0.0
        %2238 = vmatpush1.msra.mxu0 0.0
        %2239 = vmatprep.subr.mxu0 0.0
        %2240 = vmatpush1.msra.mxu0 0.0
        %2241 = vmatprep.subr.mxu0 0.0
        %2242 = vmatpush1.msra.mxu0 0.0
        %2243 = vmatprep.subr.mxu0 0.0
        %2244 = vmatpush1.msra.mxu0 0.0
        %2245 = vmatprep.subr.mxu0 0.0
        %2246 = vmatpush1.msra.mxu0 0.0
        %2247 = vmatprep.subr.mxu0 0.0
        %2248 = vmatpush1.msra.mxu0 0.0
        %2249 = vmatprep.mubr.f32.mxu0 0.0
        %2250 = vmatmul.mubr.f32.gmra.mrb[0].mxu0 %v638
        %v2251 = vpop.f32.mrb[0].mxu0
        %v2252 = vadd.f32 %v2183, %v2251
        %v2253 = vpop.f32.mrb[0].mxu0
        %2254 = vdwg.mxu0
        %s2255 = scalar_lea.vmem %s8, 96
        %v2256 = vld [vmem:[%s2255] sm:$0xff]
        %v2257 = vld [vmem:[%s2255 + $0x8] sm:$0xff]
        %v2258 = vld [vmem:[%s2255 + $0x10] sm:$0xff]
        %v2259 = vld [vmem:[%s2255 + $0x18] sm:$0xff]
        %s2260 = scalar_lea.vmem %s9, 3
        %v2261 = vld [vmem:[%s2260] sm:$0x1]
        %v2263 = vlaneseq
        %v2264 = vshrl.u32 %v2263, 7
        %v2265 = vsub.s32 0, %v2264
        %v2266 = vrot.slane %v2261, %v2265
        %2268 = vmatprep.subr.mxu0 0.0
        %2269 = vmatpush1.msra.mxu0 %v2256
        %2270 = vmatprep.subr.mxu0 0.0
        %2271 = vmatpush1.msra.mxu0 %v2257
        %2272 = vmatprep.subr.mxu0 0.0
        %2273 = vmatpush1.msra.mxu0 %v2258
        %2274 = vmatprep.subr.mxu0 0.0
        %2275 = vmatpush1.msra.mxu0 %v2259
        %2276 = vmatprep.subr.mxu0 0.0
        %2277 = vmatpush1.msra.mxu0 0.0
        %2278 = vmatprep.subr.mxu0 0.0
        %2279 = vmatpush1.msra.mxu0 0.0
        %2280 = vmatprep.subr.mxu0 0.0
        %2281 = vmatpush1.msra.mxu0 0.0
        %2282 = vmatprep.subr.mxu0 0.0
        %2283 = vmatpush1.msra.mxu0 0.0
        %2284 = vmatprep.subr.mxu0 0.0
        %2285 = vmatpush1.msra.mxu0 0.0
        %2286 = vmatprep.subr.mxu0 0.0
        %2287 = vmatpush1.msra.mxu0 0.0
        %2288 = vmatprep.subr.mxu0 0.0
        %2289 = vmatpush1.msra.mxu0 0.0
        %2290 = vmatprep.subr.mxu0 0.0
        %2291 = vmatpush1.msra.mxu0 0.0
        %2292 = vmatprep.subr.mxu0 0.0
        %2293 = vmatpush1.msra.mxu0 0.0
        %2294 = vmatprep.subr.mxu0 0.0
        %2295 = vmatpush1.msra.mxu0 0.0
        %2296 = vmatprep.subr.mxu0 0.0
        %2297 = vmatpush1.msra.mxu0 0.0
        %2298 = vmatprep.subr.mxu0 0.0
        %2299 = vmatpush1.msra.mxu0 0.0
        %2300 = vmatprep.subr.mxu0 0.0
        %2301 = vmatpush1.msra.mxu0 0.0
        %2302 = vmatprep.subr.mxu0 0.0
        %2303 = vmatpush1.msra.mxu0 0.0
        %2304 = vmatprep.subr.mxu0 0.0
        %2305 = vmatpush1.msra.mxu0 0.0
        %2306 = vmatprep.subr.mxu0 0.0
        %2307 = vmatpush1.msra.mxu0 0.0
        %2308 = vmatprep.subr.mxu0 0.0
        %2309 = vmatpush1.msra.mxu0 0.0
        %2310 = vmatprep.subr.mxu0 0.0
        %2311 = vmatpush1.msra.mxu0 0.0
        %2312 = vmatprep.subr.mxu0 0.0
        %2313 = vmatpush1.msra.mxu0 0.0
        %2314 = vmatprep.subr.mxu0 0.0
        %2315 = vmatpush1.msra.mxu0 0.0
        %2316 = vmatprep.subr.mxu0 0.0
        %2317 = vmatpush1.msra.mxu0 0.0
        %2318 = vmatprep.subr.mxu0 0.0
        %2319 = vmatpush1.msra.mxu0 0.0
        %2320 = vmatprep.subr.mxu0 0.0
        %2321 = vmatpush1.msra.mxu0 0.0
        %2322 = vmatprep.subr.mxu0 0.0
        %2323 = vmatpush1.msra.mxu0 0.0
        %2324 = vmatprep.subr.mxu0 0.0
        %2325 = vmatpush1.msra.mxu0 0.0
        %2326 = vmatprep.subr.mxu0 0.0
        %2327 = vmatpush1.msra.mxu0 0.0
        %2328 = vmatprep.subr.mxu0 0.0
        %2329 = vmatpush1.msra.mxu0 0.0
        %2330 = vmatprep.subr.mxu0 0.0
        %2331 = vmatpush1.msra.mxu0 0.0
        %2332 = vmatprep.mubr.f32.mxu0 0.0
        %2333 = vmatmul.mubr.f32.gmra.mrb[0].mxu0 %v638
        %v2334 = vpop.f32.mrb[0].mxu0
        %v2335 = vadd.f32 %v2266, %v2334
        %v2336 = vpop.f32.mrb[0].mxu0
        %2337 = vdwg.mxu0
        %v2339 = vsel %vm872, %v2169, 0
        %v2342 = vsel %vm872, %v2252, 0
        %2344 = vmatprep.subr.mxu0 0.0
        %2345 = vmatpush1.xpose.msra.mxu0 %v2342
        %2346 = vmatprep.subr.mxu0 0.0
        %2347 = vmatpush1.xpose.msra.mxu0 0.0
        %2348 = vmatprep.subr.mxu0 0.0
        %2349 = vmatpush1.xpose.msra.mxu0 0.0
        %2350 = vmatprep.subr.mxu0 0.0
        %2351 = vmatpush1.xpose.msra.mxu0 0.0
        %2352 = vmatprep.subr.mxu0 0.0
        %2353 = vmatpush1.xpose.msra.mxu0 0.0
        %2354 = vmatprep.subr.mxu0 0.0
        %2355 = vmatpush1.xpose.msra.mxu0 0.0
        %2356 = vmatprep.subr.mxu0 0.0
        %2357 = vmatpush1.xpose.msra.mxu0 0.0
        %2358 = vmatprep.subr.mxu0 0.0
        %2359 = vmatpush1.xpose.msra.mxu0 0.0
        %2360 = vmatprep.subr.mxu0 0.0
        %2361 = vmatpush1.xpose.msra.mxu0 0.0
        %2362 = vmatprep.subr.mxu0 0.0
        %2363 = vmatpush1.xpose.msra.mxu0 0.0
        %2364 = vmatprep.subr.mxu0 0.0
        %2365 = vmatpush1.xpose.msra.mxu0 0.0
        %2366 = vmatprep.subr.mxu0 0.0
        %2367 = vmatpush1.xpose.msra.mxu0 0.0
        %2368 = vmatprep.subr.mxu0 0.0
        %2369 = vmatpush1.xpose.msra.mxu0 0.0
        %2370 = vmatprep.subr.mxu0 0.0
        %2371 = vmatpush1.xpose.msra.mxu0 0.0
        %2372 = vmatprep.subr.mxu0 0.0
        %2373 = vmatpush1.xpose.msra.mxu0 0.0
        %2374 = vmatprep.subr.mxu0 0.0
        %2375 = vmatpush1.xpose.msra.mxu0 0.0
        %2376 = vmatprep.subr.mxu0 0.0
        %2377 = vmatpush1.xpose.msra.mxu0 0.0
        %2378 = vmatprep.subr.mxu0 0.0
        %2379 = vmatpush1.xpose.msra.mxu0 0.0
        %2380 = vmatprep.subr.mxu0 0.0
        %2381 = vmatpush1.xpose.msra.mxu0 0.0
        %2382 = vmatprep.subr.mxu0 0.0
        %2383 = vmatpush1.xpose.msra.mxu0 0.0
        %2384 = vmatprep.subr.mxu0 0.0
        %2385 = vmatpush1.xpose.msra.mxu0 0.0
        %2386 = vmatprep.subr.mxu0 0.0
        %2387 = vmatpush1.xpose.msra.mxu0 0.0
        %2388 = vmatprep.subr.mxu0 0.0
        %2389 = vmatpush1.xpose.msra.mxu0 0.0
        %2390 = vmatprep.subr.mxu0 0.0
        %2391 = vmatpush1.xpose.msra.mxu0 0.0
        %2392 = vmatprep.subr.mxu0 0.0
        %2393 = vmatpush1.xpose.msra.mxu0 0.0
        %2394 = vmatprep.subr.mxu0 0.0
        %2395 = vmatpush1.xpose.msra.mxu0 0.0
        %2396 = vmatprep.subr.mxu0 0.0
        %2397 = vmatpush1.xpose.msra.mxu0 0.0
        %2398 = vmatprep.subr.mxu0 0.0
        %2399 = vmatpush1.xpose.msra.mxu0 0.0
        %2400 = vmatprep.subr.mxu0 0.0
        %2401 = vmatpush1.xpose.msra.mxu0 0.0
        %2402 = vmatprep.subr.mxu0 0.0
        %2403 = vmatpush1.xpose.msra.mxu0 0.0
        %2404 = vmatprep.subr.mxu0 0.0
        %2405 = vmatpush1.xpose.msra.mxu0 0.0
        %2406 = vmatprep.subr.mxu0 0.0
        %2407 = vmatpush1.xpose.msra.mxu0 0.0
        %2408 = vmatprep.mubr.f32.mxu0 0.0
        %2409 = vmatmul.mubr.f32.gmra.mrb[0].mxu0 %v2339
        %v2410 = vpop.f32.mrb[0].mxu0
        %v2411 = vadd.f32 0.0, %v2410
        %v2412 = vpop.f32.mrb[0].mxu0
        %2413 = vdwg.mxu0
        %v2414 = vmul.f32 %v2411, 0.35355338
        %v2415 = vsel %vm956, %v2414, -1e+09
        %v2416 = vsel %vm872, %v2415, -inf
        %2417 = vmax.xlane.f32.xlu0 %v2416
        %v2418 = vpop.xlane.xlu0 %2417
        %v2419 = vsub.f32 %v2415, %v2418
        %v2420 = vmul.f32 %v2419, 1.442695
        %v2421 = vpow.pop %v2420
        %v2422 = vsel %vm872, %v2421, 0.0
        %2423 = vadd.xlane.f32.xlu0 %v2422
        %v2424 = vpop.xlane.xlu0 %2423
        %v2425 = vrcp.pop %v2424
        %v2426 = vmul.f32 %v2421, %v2425
        %v2428 = vsel %vm872, %v2426, 0
        %2430 = vmatprep.subr.mxu0 0.0
        %2431 = vmatpush1.msra.mxu0 %v2335
        %2432 = vmatprep.subr.mxu0 0.0
        %2433 = vmatpush1.msra.mxu0 0.0
        %2434 = vmatprep.subr.mxu0 0.0
        %2435 = vmatpush1.msra.mxu0 0.0
        %2436 = vmatprep.subr.mxu0 0.0
        %2437 = vmatpush1.msra.mxu0 0.0
        %2438 = vmatprep.subr.mxu0 0.0
        %2439 = vmatpush1.msra.mxu0 0.0
        %2440 = vmatprep.subr.mxu0 0.0
        %2441 = vmatpush1.msra.mxu0 0.0
        %2442 = vmatprep.subr.mxu0 0.0
        %2443 = vmatpush1.msra.mxu0 0.0
        %2444 = vmatprep.subr.mxu0 0.0
        %2445 = vmatpush1.msra.mxu0 0.0
        %2446 = vmatprep.subr.mxu0 0.0
        %2447 = vmatpush1.msra.mxu0 0.0
        %2448 = vmatprep.subr.mxu0 0.0
        %2449 = vmatpush1.msra.mxu0 0.0
        %2450 = vmatprep.subr.mxu0 0.0
        %2451 = vmatpush1.msra.mxu0 0.0
        %2452 = vmatprep.subr.mxu0 0.0
        %2453 = vmatpush1.msra.mxu0 0.0
        %2454 = vmatprep.subr.mxu0 0.0
        %2455 = vmatpush1.msra.mxu0 0.0
        %2456 = vmatprep.subr.mxu0 0.0
        %2457 = vmatpush1.msra.mxu0 0.0
        %2458 = vmatprep.subr.mxu0 0.0
        %2459 = vmatpush1.msra.mxu0 0.0
        %2460 = vmatprep.subr.mxu0 0.0
        %2461 = vmatpush1.msra.mxu0 0.0
        %2462 = vmatprep.subr.mxu0 0.0
        %2463 = vmatpush1.msra.mxu0 0.0
        %2464 = vmatprep.subr.mxu0 0.0
        %2465 = vmatpush1.msra.mxu0 0.0
        %2466 = vmatprep.subr.mxu0 0.0
        %2467 = vmatpush1.msra.mxu0 0.0
        %2468 = vmatprep.subr.mxu0 0.0
        %2469 = vmatpush1.msra.mxu0 0.0
        %2470 = vmatprep.subr.mxu0 0.0
        %2471 = vmatpush1.msra.mxu0 0.0
        %2472 = vmatprep.subr.mxu0 0.0
        %2473 = vmatpush1.msra.mxu0 0.0
        %2474 = vmatprep.subr.mxu0 0.0
        %2475 = vmatpush1.msra.mxu0 0.0
        %2476 = vmatprep.subr.mxu0 0.0
        %2477 = vmatpush1.msra.mxu0 0.0
        %2478 = vmatprep.subr.mxu0 0.0
        %2479 = vmatpush1.msra.mxu0 0.0
        %2480 = vmatprep.subr.mxu0 0.0
        %2481 = vmatpush1.msra.mxu0 0.0
        %2482 = vmatprep.subr.mxu0 0.0
        %2483 = vmatpush1.msra.mxu0 0.0
        %2484 = vmatprep.subr.mxu0 0.0
        %2485 = vmatpush1.msra.mxu0 0.0
        %2486 = vmatprep.subr.mxu0 0.0
        %2487 = vmatpush1.msra.mxu0 0.0
        %2488 = vmatprep.subr.mxu0 0.0
        %2489 = vmatpush1.msra.mxu0 0.0
        %2490 = vmatprep.subr.mxu0 0.0
        %2491 = vmatpush1.msra.mxu0 0.0
        %2492 = vmatprep.subr.mxu0 0.0
        %2493 = vmatpush1.msra.mxu0 0.0
        %2494 = vmatprep.mubr.f32.mxu0 0.0
        %2495 = vmatmul.mubr.f32.gmra.mrb[0].mxu0 %v2428
        %v2496 = vpop.f32.mrb[0].mxu0
        %v2497 = vadd.f32 0.0, %v2496
        %v2498 = vpop.f32.mrb[0].mxu0
        %2499 = vdwg.mxu0
        %s2500 = scalar_lea.vmem %s10, 24
        %v2501 = vld [vmem:[%s2500] sm:$0xff]
        %v2503 = vsel %vm872, %v2497, 0
        %2505 = vmatprep.subr.mxu0 0.0
        %2506 = vmatpush1.msra.mxu0 %v2501
        %2507 = vmatprep.subr.mxu0 0.0
        %2508 = vmatpush1.msra.mxu0 0.0
        %2509 = vmatprep.subr.mxu0 0.0
        %2510 = vmatpush1.msra.mxu0 0.0
        %2511 = vmatprep.subr.mxu0 0.0
        %2512 = vmatpush1.msra.mxu0 0.0
        %2513 = vmatprep.subr.mxu0 0.0
        %2514 = vmatpush1.msra.mxu0 0.0
        %2515 = vmatprep.subr.mxu0 0.0
        %2516 = vmatpush1.msra.mxu0 0.0
        %2517 = vmatprep.subr.mxu0 0.0
        %2518 = vmatpush1.msra.mxu0 0.0
        %2519 = vmatprep.subr.mxu0 0.0
        %2520 = vmatpush1.msra.mxu0 0.0
        %2521 = vmatprep.subr.mxu0 0.0
        %2522 = vmatpush1.msra.mxu0 0.0
        %2523 = vmatprep.subr.mxu0 0.0
        %2524 = vmatpush1.msra.mxu0 0.0
        %2525 = vmatprep.subr.mxu0 0.0
        %2526 = vmatpush1.msra.mxu0 0.0
        %2527 = vmatprep.subr.mxu0 0.0
        %2528 = vmatpush1.msra.mxu0 0.0
        %2529 = vmatprep.subr.mxu0 0.0
        %2530 = vmatpush1.msra.mxu0 0.0
        %2531 = vmatprep.subr.mxu0 0.0
        %2532 = vmatpush1.msra.mxu0 0.0
        %2533 = vmatprep.subr.mxu0 0.0
        %2534 = vmatpush1.msra.mxu0 0.0
        %2535 = vmatprep.subr.mxu0 0.0
        %2536 = vmatpush1.msra.mxu0 0.0
        %2537 = vmatprep.subr.mxu0 0.0
        %2538 = vmatpush1.msra.mxu0 0.0
        %2539 = vmatprep.subr.mxu0 0.0
        %2540 = vmatpush1.msra.mxu0 0.0
        %2541 = vmatprep.subr.mxu0 0.0
        %2542 = vmatpush1.msra.mxu0 0.0
        %2543 = vmatprep.subr.mxu0 0.0
        %2544 = vmatpush1.msra.mxu0 0.0
        %2545 = vmatprep.subr.mxu0 0.0
        %2546 = vmatpush1.msra.mxu0 0.0
        %2547 = vmatprep.subr.mxu0 0.0
        %2548 = vmatpush1.msra.mxu0 0.0
        %2549 = vmatprep.subr.mxu0 0.0
        %2550 = vmatpush1.msra.mxu0 0.0
        %2551 = vmatprep.subr.mxu0 0.0
        %2552 = vmatpush1.msra.mxu0 0.0
        %2553 = vmatprep.subr.mxu0 0.0
        %2554 = vmatpush1.msra.mxu0 0.0
        %2555 = vmatprep.subr.mxu0 0.0
        %2556 = vmatpush1.msra.mxu0 0.0
        %2557 = vmatprep.subr.mxu0 0.0
        %2558 = vmatpush1.msra.mxu0 0.0
        %2559 = vmatprep.subr.mxu0 0.0
        %2560 = vmatpush1.msra.mxu0 0.0
        %2561 = vmatprep.subr.mxu0 0.0
        %2562 = vmatpush1.msra.mxu0 0.0
        %2563 = vmatprep.subr.mxu0 0.0
        %2564 = vmatpush1.msra.mxu0 0.0
        %2565 = vmatprep.subr.mxu0 0.0
        %2566 = vmatpush1.msra.mxu0 0.0
        %2567 = vmatprep.subr.mxu0 0.0
        %2568 = vmatpush1.msra.mxu0 0.0
        %2569 = vmatprep.mubr.f32.mxu0 0.0
        %2570 = vmatmul.mubr.f32.gmra.mrb[0].mxu0 %v2503
        %v2571 = vpop.f32.mrb[0].mxu0
        %v2572 = vadd.f32 0.0, %v2571
        %v2573 = vpop.f32.mrb[0].mxu0
        %2574 = vdwg.mxu0
        %v2575 = vadd.f32 %v2088, %v2572
        %v2576 = vld [vmem:[%s11] sm:$0x1]
        %v2578 = vlaneseq
        %v2579 = vshrl.u32 %v2578, 7
        %v2580 = vsub.s32 0, %v2579
        %v2581 = vrot.slane %v2576, %v2580
        %v2583 = vadd.f32 %v2575, %v2581
        %v2584 = vadd.f32 %v585, %v2583
        %v2585 = vld [vmem:[%s12] sm:$0x1]
        %v2586 = vld [vmem:[%s13] sm:$0x1]
        %v2587 = vsel %vm589, %v2584, 0.0
        %2588 = vadd.xlane.f32.xlu0 %v2587
        %v2589 = vpop.xlane.xlu0 %2588
        %v2590 = vmul.f32 %v2589, %v593
        %v2591 = vsub.f32 %v2584, %v2590
        %v2592 = vmul.f32 %v2591, %v2591
        %v2593 = vsel %vm589, %v2592, 0.0
        %2594 = vadd.xlane.f32.xlu0 %v2593
        %v2595 = vpop.xlane.xlu0 %2594
        %v2596 = vmul.f32 %v2595, %v600
        %v2597 = vrsqrt.pop %v2596
        %v2598 = vmul.f32 %v2596, %v2597
        %vm2599 = vcmp.eq.f32.partialorder %v2596, inf
        %v2600 = vsel %vm2599, %v2596, %v2598
        %vm2601 = vcmp.eq.f32.partialorder %v2596, 0.0
        %v2602 = vand.u32 %v2596, 2147483648
        %v2603 = vsel %vm2601, %v2602, %v2600
        %v2605 = vlaneseq
        %v2606 = vshrl.u32 %v2605, 7
        %v2607 = vsub.s32 0, %v2606
        %v2608 = vrot.slane %v2585, %v2607
        %v2610 = vmul.f32 %v2608, %v2591
        %v2611 = vadd.f32 %v2603, 1e-06
        %v2612 = vrcp.pop %v2611
        %v2613 = vmul.f32 %v2610, %v2612
        %v2615 = vlaneseq
        %v2616 = vshrl.u32 %v2615, 7
        %v2617 = vsub.s32 0, %v2616
        %v2618 = vrot.slane %v2586, %v2617
        %v2620 = vadd.f32 %v2613, %v2618
        %v2621 = vld [vmem:[%s14] sm:$0xff]
        %v2622 = vld [vmem:[%s14 + $0x8] sm:$0xff]
        %v2623 = vld [vmem:[%s14 + $0x10] sm:$0xff]
        %v2624 = vld [vmem:[%s14 + $0x18] sm:$0xff]
        %v2625 = vld [vmem:[%s15] sm:$0x1]
        %v2627 = vlaneseq
        %v2628 = vshrl.u32 %v2627, 7
        %v2629 = vsub.s32 0, %v2628
        %v2630 = vrot.slane %v2625, %v2629
        %v2633 = vsel %vm589, %v2620, 0
        %2635 = vmatprep.subr.mxu0 0.0
        %2636 = vmatpush1.msra.mxu0 %v2621
        %2637 = vmatprep.subr.mxu0 0.0
        %2638 = vmatpush1.msra.mxu0 %v2622
        %2639 = vmatprep.subr.mxu0 0.0
        %2640 = vmatpush1.msra.mxu0 %v2623
        %2641 = vmatprep.subr.mxu0 0.0
        %2642 = vmatpush1.msra.mxu0 %v2624
        %2643 = vmatprep.subr.mxu0 0.0
        %2644 = vmatpush1.msra.mxu0 0.0
        %2645 = vmatprep.subr.mxu0 0.0
        %2646 = vmatpush1.msra.mxu0 0.0
        %2647 = vmatprep.subr.mxu0 0.0
        %2648 = vmatpush1.msra.mxu0 0.0
        %2649 = vmatprep.subr.mxu0 0.0
        %2650 = vmatpush1.msra.mxu0 0.0
        %2651 = vmatprep.subr.mxu0 0.0
        %2652 = vmatpush1.msra.mxu0 0.0
        %2653 = vmatprep.subr.mxu0 0.0
        %2654 = vmatpush1.msra.mxu0 0.0
        %2655 = vmatprep.subr.mxu0 0.0
        %2656 = vmatpush1.msra.mxu0 0.0
        %2657 = vmatprep.subr.mxu0 0.0
        %2658 = vmatpush1.msra.mxu0 0.0
        %2659 = vmatprep.subr.mxu0 0.0
        %2660 = vmatpush1.msra.mxu0 0.0
        %2661 = vmatprep.subr.mxu0 0.0
        %2662 = vmatpush1.msra.mxu0 0.0
        %2663 = vmatprep.subr.mxu0 0.0
        %2664 = vmatpush1.msra.mxu0 0.0
        %2665 = vmatprep.subr.mxu0 0.0
        %2666 = vmatpush1.msra.mxu0 0.0
        %2667 = vmatprep.subr.mxu0 0.0
        %2668 = vmatpush1.msra.mxu0 0.0
        %2669 = vmatprep.subr.mxu0 0.0
        %2670 = vmatpush1.msra.mxu0 0.0
        %2671 = vmatprep.subr.mxu0 0.0
        %2672 = vmatpush1.msra.mxu0 0.0
        %2673 = vmatprep.subr.mxu0 0.0
        %2674 = vmatpush1.msra.mxu0 0.0
        %2675 = vmatprep.subr.mxu0 0.0
        %2676 = vmatpush1.msra.mxu0 0.0
        %2677 = vmatprep.subr.mxu0 0.0
        %2678 = vmatpush1.msra.mxu0 0.0
        %2679 = vmatprep.subr.mxu0 0.0
        %2680 = vmatpush1.msra.mxu0 0.0
        %2681 = vmatprep.subr.mxu0 0.0
        %2682 = vmatpush1.msra.mxu0 0.0
        %2683 = vmatprep.subr.mxu0 0.0
        %2684 = vmatpush1.msra.mxu0 0.0
        %2685 = vmatprep.subr.mxu0 0.0
        %2686 = vmatpush1.msra.mxu0 0.0
        %2687 = vmatprep.subr.mxu0 0.0
        %2688 = vmatpush1.msra.mxu0 0.0
        %2689 = vmatprep.subr.mxu0 0.0
        %2690 = vmatpush1.msra.mxu0 0.0
        %2691 = vmatprep.subr.mxu0 0.0
        %2692 = vmatpush1.msra.mxu0 0.0
        %2693 = vmatprep.subr.mxu0 0.0
        %2694 = vmatpush1.msra.mxu0 0.0
        %2695 = vmatprep.subr.mxu0 0.0
        %2696 = vmatpush1.msra.mxu0 0.0
        %2697 = vmatprep.subr.mxu0 0.0
        %2698 = vmatpush1.msra.mxu0 0.0
        %2699 = vmatprep.mubr.f32.mxu0 0.0
        %2700 = vmatmul.mubr.f32.gmra.mrb[0].mxu0 %v2633
        %v2701 = vpop.f32.mrb[0].mxu0
        %v2702 = vadd.f32 %v2630, %v2701
        %v2703 = vpop.f32.mrb[0].mxu0
        %2704 = vdwg.mxu0
        %v2705 = vmax.f32 %v2702, 0.0
        %v2706 = vld [vmem:[%s16] sm:$0xff]
        %v2707 = vld [vmem:[%s16 + $0x8] sm:$0xff]
        %v2708 = vld [vmem:[%s16 + $0x10] sm:$0xff]
        %v2709 = vld [vmem:[%s16 + $0x18] sm:$0xff]
        %v2710 = vld [vmem:[%s16 + $0x20] sm:$0xff]
        %v2711 = vld [vmem:[%s16 + $0x28] sm:$0xff]
        %v2712 = vld [vmem:[%s16 + $0x30] sm:$0xff]
        %v2713 = vld [vmem:[%s16 + $0x38] sm:$0xff]
        %v2714 = vld [vmem:[%s17] sm:$0x1]
        %v2716 = vlaneseq
        %v2717 = vshrl.u32 %v2716, 7
        %v2718 = vsub.s32 0, %v2717
        %v2719 = vrot.slane %v2714, %v2718
        %vm2721 = vcmask 523264
        %v2723 = vsel %vm2721, %v2705, 0
        %2725 = vmatprep.subr.mxu0 0.0
        %2726 = vmatpush1.msra.mxu0 %v2706
        %2727 = vmatprep.subr.mxu0 0.0
        %2728 = vmatpush1.msra.mxu0 %v2707
        %2729 = vmatprep.subr.mxu0 0.0
        %2730 = vmatpush1.msra.mxu0 %v2708
        %2731 = vmatprep.subr.mxu0 0.0
        %2732 = vmatpush1.msra.mxu0 %v2709
        %2733 = vmatprep.subr.mxu0 0.0
        %2734 = vmatpush1.msra.mxu0 %v2710
        %2735 = vmatprep.subr.mxu0 0.0
        %2736 = vmatpush1.msra.mxu0 %v2711
        %2737 = vmatprep.subr.mxu0 0.0
        %2738 = vmatpush1.msra.mxu0 %v2712
        %2739 = vmatprep.subr.mxu0 0.0
        %2740 = vmatpush1.msra.mxu0 %v2713
        %2741 = vmatprep.subr.mxu0 0.0
        %2742 = vmatpush1.msra.mxu0 0.0
        %2743 = vmatprep.subr.mxu0 0.0
        %2744 = vmatpush1.msra.mxu0 0.0
        %2745 = vmatprep.subr.mxu0 0.0
        %2746 = vmatpush1.msra.mxu0 0.0
        %2747 = vmatprep.subr.mxu0 0.0
        %2748 = vmatpush1.msra.mxu0 0.0
        %2749 = vmatprep.subr.mxu0 0.0
        %2750 = vmatpush1.msra.mxu0 0.0
        %2751 = vmatprep.subr.mxu0 0.0
        %2752 = vmatpush1.msra.mxu0 0.0
        %2753 = vmatprep.subr.mxu0 0.0
        %2754 = vmatpush1.msra.mxu0 0.0
        %2755 = vmatprep.subr.mxu0 0.0
        %2756 = vmatpush1.msra.mxu0 0.0
        %2757 = vmatprep.subr.mxu0 0.0
        %2758 = vmatpush1.msra.mxu0 0.0
        %2759 = vmatprep.subr.mxu0 0.0
        %2760 = vmatpush1.msra.mxu0 0.0
        %2761 = vmatprep.subr.mxu0 0.0
        %2762 = vmatpush1.msra.mxu0 0.0
        %2763 = vmatprep.subr.mxu0 0.0
        %2764 = vmatpush1.msra.mxu0 0.0
        %2765 = vmatprep.subr.mxu0 0.0
        %2766 = vmatpush1.msra.mxu0 0.0
        %2767 = vmatprep.subr.mxu0 0.0
        %2768 = vmatpush1.msra.mxu0 0.0
        %2769 = vmatprep.subr.mxu0 0.0
        %2770 = vmatpush1.msra.mxu0 0.0
        %2771 = vmatprep.subr.mxu0 0.0
        %2772 = vmatpush1.msra.mxu0 0.0
        %2773 = vmatprep.subr.mxu0 0.0
        %2774 = vmatpush1.msra.mxu0 0.0
        %2775 = vmatprep.subr.mxu0 0.0
        %2776 = vmatpush1.msra.mxu0 0.0
        %2777 = vmatprep.subr.mxu0 0.0
        %2778 = vmatpush1.msra.mxu0 0.0
        %2779 = vmatprep.subr.mxu0 0.0
        %2780 = vmatpush1.msra.mxu0 0.0
        %2781 = vmatprep.subr.mxu0 0.0
        %2782 = vmatpush1.msra.mxu0 0.0
        %2783 = vmatprep.subr.mxu0 0.0
        %2784 = vmatpush1.msra.mxu0 0.0
        %2785 = vmatprep.subr.mxu0 0.0
        %2786 = vmatpush1.msra.mxu0 0.0
        %2787 = vmatprep.subr.mxu0 0.0
        %2788 = vmatpush1.msra.mxu0 0.0
        %2789 = vmatprep.mubr.f32.mxu0 0.0
        %2790 = vmatmul.mubr.f32.gmra.mrb[0].mxu0 %v2723
        %v2791 = vpop.f32.mrb[0].mxu0
        %v2792 = vadd.f32 %v2719, %v2791
        %v2793 = vpop.f32.mrb[0].mxu0
        %2794 = vdwg.mxu0
        %v2795 = vadd.f32 %v2584, %v2792
        %2796 = vst.msk [vmem:[%s577] sm:$0xff] %vm589, %v2795
        %s2797 = sand.u32 %s428, 1
        %s2798 = scalar_lea.sflag [#allocation3], %s2797
        %s2799 = sand.u32 %s428, 1
        %s2800 = smul.addr %s2799, 8
        %s2801 = scalar_lea.vmem [#allocation2], %s2800
        // Predicated region
        $region93: #{tpu_custom_call.1} parent=91 // pred_check
          %p2802 = pneg %p438
        $region94: #{tpu_custom_call.1} parent=91 // pred_check_branch
          %2804 = sbr.rel (%p2802) target = $region96
        $region95: #{tpu_custom_call.1} parent=91 // pred_region
          %s2806 = ssub.s32 128, 128
          %2807 = vsyncadd %s2798, %s2806
          %s2808 = smul.addr %s32, 128
          %s2809 = scalar_lea.hbm %s18, %s2808
          %s2811 = sshll.u32 %s2801, 4
          %s2812 = int_to_ptr.vmem [resolvable:$true] %s2811
          %2814 = dma.vmem_to_hbm [thread:$0]  %s2812, 128, %s2809, %s2798
        $region96: #{tpu_custom_call.1} parent=91 // pred_fallthru
          _
      $region92: #{tpu_custom_call.1} parent=5 // pred_fallthru
        _
      %p2815 = scmp.le.s32.totalorder 2, %s27
      // Predicated region
      $region97: #{tpu_custom_call.1} parent=5 // pred_check
        %p2816 = pneg %p2815
      $region98: #{tpu_custom_call.1} parent=5 // pred_check_branch
        %2818 = sbr.rel (%p2816) target = $region100
      $region99: #{tpu_custom_call.1} parent=5 // pred_region
        %s2819 = ssub.s32 %s27, 2
        // Predicated region
        $region101: #{tpu_custom_call.1} parent=99 // pred_check
          %p2820 = pneg %p444
        $region102: #{tpu_custom_call.1} parent=99 // pred_check_branch
          %2822 = sbr.rel (%p2820) target = $region104
        $region103: #{tpu_custom_call.1} parent=99 // pred_region
          %s2823 = sand.u32 %s429, 1
          %s2824 = scalar_lea.sflag [#allocation3], %s2823
          %s2825 = sand.u32 %s429, 1
          %s2826 = smul.addr %s2825, 8
          %s2827 = scalar_lea.vmem [#allocation2], %s2826
          %2828 = dma.done %s2824, 128
        $region104: #{tpu_custom_call.1} parent=99 // pred_fallthru
          _
      $region100: #{tpu_custom_call.1} parent=5 // pred_fallthru
        _
    $region6: #{tpu_custom_call.1} parent=1 // loop_footer
      %s31 = sadd.s32 1, %s27
    $region7: #{tpu_custom_call.1} parent=1 // loop_footer_branch
      %26 = sbr.rel target = $region3
    $region8: #{tpu_custom_call.1} parent=1 // loop_exit
      _
    %2829 = vsyncpa [#allocation3], 1
    %s2830 = scalar_lea.sflag [#allocation3], 1
    %2831 = vsyncpa %s2830, 1

</llo_original>
